<compile_context>
chip_gen: v7x
topology: tpu7x:2x2x1
jax: 0.10.0
libtpu: 0.0.40
codegen_flags: <defaults>
</compile_context>

<pallas_src>
import functools
import math

import jax
import jax.numpy as jnp
from jax.experimental import pallas as pl
from jax.experimental.pallas import tpu as pltpu


def _cross_attn_kernel(
    x1_ref, x2_ref,              # (1, TQ, D), (1, Lk, D)
    wq_ref, bq_ref,              # (H, D, hd), (H, 1, hd)   (1/sqrt(hd) folded in)
    wk_ref, bk_ref,              # (H, D, hd), (H, 1, hd)
    wv_ref, bv_ref,              # (H, D, hd), (H, 1, hd)
    wo_ref, bo_ref,              # (H, hd, D), (1, D)
    g1_ref, be1_ref,             # (1, D), (1, D)   norm1
    w1_ref, b1_ref,              # (D, F), (1, F)   linear1 (pre-transposed)
    w2_ref, b2_ref,              # (F, D), (1, D)   linear2 (pre-transposed)
    g2_ref, be2_ref,             # (1, D), (1, D)   norm2
    y_ref,                       # (1, TQ, D)
    k_scr, v_scr,                # (H, Lk, hd) f32 scratch (K/V cache across q tiles)
    *, nhead: int, eps: float,
):
    f32 = jnp.float32
    x1 = x1_ref[0]               # (TQ, D)

    # K/V depend only on x2 (and the batch index), not the query tile:
    # compute once per batch element and keep resident in scratch VMEM.
    @pl.when(pl.program_id(1) == 0)
    def _():
        x2 = x2_ref[0]           # (Lk, D)
        for h in range(nhead):
            k_scr[h] = jnp.dot(x2, wk_ref[h], preferred_element_type=f32) + bk_ref[h]
            v_scr[h] = jnp.dot(x2, wv_ref[h], preferred_element_type=f32) + bv_ref[h]

    # --- multi-head cross attention -------------------------------------
    # Head-major weight slabs (leading-axis indexing of a VMEM ref is free)
    # -> no lane-dim slicing, no concatenate.  The per-head result is folded
    # through its slice of the output projection and summed in f32.
    attn = None
    for h in range(nhead):
        qh = jnp.dot(x1, wq_ref[h], preferred_element_type=f32) + bq_ref[h]  # (TQ, hd)
        kh = k_scr[h]                                                         # (Lk, hd)
        vh = v_scr[h]                                                         # (Lk, hd)

        # scores = qh @ kh^T  (contraction on last dims, no explicit .T)
        s = jax.lax.dot_general(qh, kh, (((1,), (1,)), ((), ())),
                                preferred_element_type=f32)                   # (TQ, Lk)
        s = s - jnp.max(s, axis=-1, keepdims=True)
        p = jnp.exp(s)
        p = p * pl.reciprocal(jnp.sum(p, axis=-1, keepdims=True), approx=True)

        oh = jnp.dot(p, vh, preferred_element_type=f32)                       # (TQ, hd)
        contrib = jnp.dot(oh, wo_ref[h], preferred_element_type=f32)          # (TQ, D)
        attn = contrib if attn is None else attn + contrib

    attn = attn + bo_ref[...]

    # --- residual + LayerNorm 1 (f32) ------------------------------------
    t = x1 + attn
    mu = jnp.mean(t, axis=-1, keepdims=True)
    var = jnp.mean((t - mu) ** 2, axis=-1, keepdims=True)
    t = (t - mu) * jax.lax.rsqrt(var + eps)
    t = t * g1_ref[...] + be1_ref[...]

    # --- feed-forward: ReLU(t W1 + b1) W2 + b2 (weights pre-transposed) ---
    h1 = jnp.dot(t, w1_ref[...], preferred_element_type=f32) + b1_ref[...]
    h1 = jnp.maximum(h1, 0.0)
    z = jnp.dot(h1, w2_ref[...], preferred_element_type=f32) + b2_ref[...]

    # --- residual + LayerNorm 2 (f32) ------------------------------------
    u = t + z
    mu = jnp.mean(u, axis=-1, keepdims=True)
    var = jnp.mean((u - mu) ** 2, axis=-1, keepdims=True)
    y = (u - mu) * jax.lax.rsqrt(var + eps)
    y = y * g2_ref[...] + be2_ref[...]

    y_ref[0] = y.astype(y_ref.dtype)


def _pick_q_tile(L: int) -> int:
    """Largest query row-tile that divides L (keeps VMEM bounded for long L)."""
    if L <= 512:
        return L
    for t in (512, 256, 128, 64, 32, 16, 8):
        if L % t == 0:
            return t
    return L


def cross_attention_layer(x1, x2, params, *, nhead: int, eps: float = 1e-5):
    """x1: (B, Lq, D) queries; x2: (B, Lk, D) keys/values. Returns (B, Lq, D).

    `params` follows PyTorch layouts (in_proj_weight (3D,D), linear.weight
    (out,in), ...); all re-layout (transpose, head split, scale folding) is
    done once host-side so the kernel never transposes or lane-slices.
    """
    B, Lq, D = x1.shape
    _, Lk, _ = x2.shape
    assert D % nhead == 0, "d_input must be divisible by nhead"
    hd = D // nhead
    scale = 1.0 / math.sqrt(hd)

    w_in, b_in = params["w_in"], params["b_in"]
    wq, wk, wv = w_in[:D], w_in[D:2 * D], w_in[2 * D:]
    bq, bk, bv = b_in[0, :D], b_in[0, D:2 * D], b_in[0, 2 * D:]

    def head_major(w):  # (D_out=D, D_in=D) -> (H, D_in, hd)
        return jnp.transpose(w.reshape(nhead, hd, D), (0, 2, 1))

    wq3 = head_major(wq * scale)               # scale folded into Q weights
    wk3 = head_major(wk)
    wv3 = head_major(wv)
    bq3 = (bq * scale).reshape(nhead, 1, hd)
    bk3 = bk.reshape(nhead, 1, hd)
    bv3 = bv.reshape(nhead, 1, hd)
    wo3 = jnp.transpose(params["w_out"]).reshape(nhead, hd, D)   # (H, hd, D)

    w1t = jnp.transpose(params["w1"])          # (D, F)
    w2t = jnp.transpose(params["w2"])          # (F, D)

    TQ = _pick_q_tile(Lq)
    nq = Lq // TQ

    kernel = functools.partial(_cross_attn_kernel, nhead=nhead, eps=eps)

    # Weights / biases: whole array resident in VMEM, single-buffered
    # (not pipelined / double-buffered across the grid).
    resident = pl.BlockSpec(memory_space=pltpu.MemorySpace.VMEM)

    in_specs = [
        pl.BlockSpec((1, TQ, D), lambda b, q: (b, q, 0)),   # x1 (row-tiled)
        pl.BlockSpec((1, Lk, D), lambda b, q: (b, 0, 0)),   # x2 (resident over q)
    ] + [resident] * 16

    out_specs = pl.BlockSpec((1, TQ, D), lambda b, q: (b, q, 0))

    scratch_shapes = [
        pltpu.VMEM((nhead, Lk, hd), jnp.float32),   # K cache (per batch element)
        pltpu.VMEM((nhead, Lk, hd), jnp.float32),   # V cache (per batch element)
    ]

    return pl.pallas_call(
        kernel,
        out_shape=jax.ShapeDtypeStruct((B, Lq, D), x1.dtype),
        grid=(B, nq),
        in_specs=in_specs,
        out_specs=out_specs,
        scratch_shapes=scratch_shapes,
        compiler_params=pltpu.CompilerParams(
            # q axis carries the K/V scratch cache -> "arbitrary"; batch axis
            # stays "parallel" for megacore.
            dimension_semantics=("parallel", "arbitrary"),
            vmem_limit_bytes=64 * 1024 * 1024,
        ),
    )(
        x1, x2,
        wq3, bq3, wk3, bk3, wv3, bv3,
        wo3, params["b_out"],
        params["g1"], params["be1"],
        w1t, params["b1"],
        w2t, params["b2"],
        params["g2"], params["be2"],
    )


def _reference(x1, x2, p, nhead, eps=1e-5):
    """Pure-JAX reference mirroring PyTorch semantics (eval mode)."""
    B, Lq, D = x1.shape
    hd = D // nhead
    wq, wk, wv = p["w_in"][:D], p["w_in"][D:2 * D], p["w_in"][2 * D:]
    bq, bk, bv = p["b_in"][0, :D], p["b_in"][0, D:2 * D], p["b_in"][0, 2 * D:]
    q = x1 @ wq.T + bq
    k = x2 @ wk.T + bk
    v = x2 @ wv.T + bv
    q = q.reshape(B, -1, nhead, hd).transpose(0, 2, 1, 3)
    k = k.reshape(B, -1, nhead, hd).transpose(0, 2, 1, 3)
    v = v.reshape(B, -1, nhead, hd).transpose(0, 2, 1, 3)
    s = jnp.einsum("bhqd,bhkd->bhqk", q, k) / math.sqrt(hd)
    pattn = jax.nn.softmax(s, axis=-1)
    o = jnp.einsum("bhqk,bhkd->bhqd", pattn, v).transpose(0, 2, 1, 3).reshape(B, Lq, D)
    attn = o @ p["w_out"].T + p["b_out"][0]

    def ln(x, g, b):
        mu = x.mean(-1, keepdims=True)
        var = ((x - mu) ** 2).mean(-1, keepdims=True)
        return (x - mu) * jax.lax.rsqrt(var + eps) * g[0] + b[0]

    t = ln(x1 + attn, p["g1"], p["be1"])
    z = jnp.maximum(t @ p["w1"].T + p["b1"][0], 0.0) @ p["w2"].T + p["b2"][0]
    return ln(t + z, p["g2"], p["be2"])


if __name__ == "__main__":
    # small config: d_input=32, nhead=4, dim_feedforward=64, seq=8, batch=2
    B, Lq, Lk, D, NHEAD, FF = 2, 8, 8, 32, 4, 64

    key = jax.random.PRNGKey(0)
    keys = jax.random.split(key, 12)

    def init(k, shape, scale=0.1):
        return (scale * jax.random.normal(k, shape)).astype(jnp.float32)

    params = {
        "w_in":  init(keys[0], (3 * D, D)),
        "b_in":  init(keys[1], (1, 3 * D)),
        "w_out": init(keys[2], (D, D)),
        "b_out": init(keys[3], (1, D)),
        "g1":    jnp.ones((1, D), jnp.float32),
        "be1":   jnp.zeros((1, D), jnp.float32),
        "w1":    init(keys[4], (FF, D)),
        "b1":    init(keys[5], (1, FF)),
        "w2":    init(keys[6], (D, FF)),
        "b2":    init(keys[7], (1, D)),
        "g2":    jnp.ones((1, D), jnp.float32),
        "be2":   jnp.zeros((1, D), jnp.float32),
    }

    x1 = jax.random.normal(keys[8], (B, Lq, D), jnp.float32)
    x2 = jax.random.normal(keys[9], (B, Lk, D), jnp.float32)

    y = cross_attention_layer(x1, x2, params, nhead=NHEAD, eps=1e-5)
    y = jax.block_until_ready(y)

    y_ref = _reference(x1, x2, params, NHEAD)
    # slightly looser tolerance: softmax denominator uses EUP approx reciprocal
    assert jnp.allclose(y, y_ref, atol=2e-3, rtol=2e-3), "mismatch vs reference"

    print("KERNEL_OK")
</pallas_src>

<mosaic_0001>
module attributes {stable_mosaic.version = 11 : i64} {
  func.func @_cross_attn_kernel(%arg0: i32, %arg1: i32, %arg2: memref<1x8x32xf32, #tpu.memory_space<vmem>>, %arg3: memref<1x8x32xf32, #tpu.memory_space<vmem>>, %arg4: memref<4x32x8xf32, #tpu.memory_space<vmem>>, %arg5: memref<4x1x8xf32, #tpu.memory_space<vmem>>, %arg6: memref<4x32x8xf32, #tpu.memory_space<vmem>>, %arg7: memref<4x1x8xf32, #tpu.memory_space<vmem>>, %arg8: memref<4x32x8xf32, #tpu.memory_space<vmem>>, %arg9: memref<4x1x8xf32, #tpu.memory_space<vmem>>, %arg10: memref<4x8x32xf32, #tpu.memory_space<vmem>>, %arg11: memref<1x32xf32, #tpu.memory_space<vmem>>, %arg12: memref<1x32xf32, #tpu.memory_space<vmem>>, %arg13: memref<1x32xf32, #tpu.memory_space<vmem>>, %arg14: memref<32x64xf32, #tpu.memory_space<vmem>>, %arg15: memref<1x64xf32, #tpu.memory_space<vmem>>, %arg16: memref<64x32xf32, #tpu.memory_space<vmem>>, %arg17: memref<1x32xf32, #tpu.memory_space<vmem>>, %arg18: memref<1x32xf32, #tpu.memory_space<vmem>>, %arg19: memref<1x32xf32, #tpu.memory_space<vmem>>, %arg20: memref<1x8x32xf32, #tpu.memory_space<vmem>>, %arg21: memref<4x8x8xf32, #tpu.memory_space<vmem>>, %arg22: memref<4x8x8xf32, #tpu.memory_space<vmem>>) attributes {dimension_semantics = [#tpu.dimension_semantics<parallel>, #tpu.dimension_semantics<arbitrary>], iteration_bounds = array<i64: 2, 1>, scalar_prefetch = 0 : i64, scratch_operands = 2 : i64, tpu.core_type = #tpu.core_type<tc>, window_params = [{transform_indices = @transform_0, window_bounds = array<i64: 1, 8, 32>}, {transform_indices = @transform_1, window_bounds = array<i64: 1, 8, 32>}, {pipeline_mode = #tpu.pipeline_mode<synchronous>, transform_indices = @transform_2, window_bounds = array<i64: 4, 32, 8>}, {pipeline_mode = #tpu.pipeline_mode<synchronous>, transform_indices = @transform_3, window_bounds = array<i64: 4, 1, 8>}, {pipeline_mode = #tpu.pipeline_mode<synchronous>, transform_indices = @transform_4, window_bounds = array<i64: 4, 32, 8>}, {pipeline_mode = #tpu.pipeline_mode<synchronous>, transform_indices = @transform_5, window_bounds = array<i64: 4, 1, 8>}, {pipeline_mode = #tpu.pipeline_mode<synchronous>, transform_indices = @transform_6, window_bounds = array<i64: 4, 32, 8>}, {pipeline_mode = #tpu.pipeline_mode<synchronous>, transform_indices = @transform_7, window_bounds = array<i64: 4, 1, 8>}, {pipeline_mode = #tpu.pipeline_mode<synchronous>, transform_indices = @transform_8, window_bounds = array<i64: 4, 8, 32>}, {pipeline_mode = #tpu.pipeline_mode<synchronous>, transform_indices = @transform_9, window_bounds = array<i64: 1, 32>}, {pipeline_mode = #tpu.pipeline_mode<synchronous>, transform_indices = @transform_10, window_bounds = array<i64: 1, 32>}, {pipeline_mode = #tpu.pipeline_mode<synchronous>, transform_indices = @transform_11, window_bounds = array<i64: 1, 32>}, {pipeline_mode = #tpu.pipeline_mode<synchronous>, transform_indices = @transform_12, window_bounds = array<i64: 32, 64>}, {pipeline_mode = #tpu.pipeline_mode<synchronous>, transform_indices = @transform_13, window_bounds = array<i64: 1, 64>}, {pipeline_mode = #tpu.pipeline_mode<synchronous>, transform_indices = @transform_14, window_bounds = array<i64: 64, 32>}, {pipeline_mode = #tpu.pipeline_mode<synchronous>, transform_indices = @transform_15, window_bounds = array<i64: 1, 32>}, {pipeline_mode = #tpu.pipeline_mode<synchronous>, transform_indices = @transform_16, window_bounds = array<i64: 1, 32>}, {pipeline_mode = #tpu.pipeline_mode<synchronous>, transform_indices = @transform_17, window_bounds = array<i64: 1, 32>}, {transform_indices = @transform_18, window_bounds = array<i64: 1, 8, 32>}]} {
    %c0 = arith.constant 0 : index
    %c0_0 = arith.constant 0 : index
    %c0_1 = arith.constant 0 : index
    %0 = vector.load %arg2[%c0, %c0_0, %c0_1] : memref<1x8x32xf32, #tpu.memory_space<vmem>>, vector<1x8x32xf32>
    %1 = vector.shape_cast %0 : vector<1x8x32xf32> to vector<8x32xf32>
    %c0_i32 = arith.constant 0 : i32
    %2 = arith.cmpi eq, %arg1, %c0_i32 : i32
    %3 = arith.extui %2 : i1 to i32
    %c0_i32_2 = arith.constant 0 : i32
    %4 = arith.cmpi ne, %3, %c0_i32_2 : i32
    scf.if %4 {
      %c0_117 = arith.constant 0 : index
      %c0_118 = arith.constant 0 : index
      %c0_119 = arith.constant 0 : index
      %180 = vector.load %arg3[%c0_117, %c0_118, %c0_119] : memref<1x8x32xf32, #tpu.memory_space<vmem>>, vector<1x8x32xf32>
      %181 = vector.shape_cast %180 : vector<1x8x32xf32> to vector<8x32xf32>
      %c0_120 = arith.constant 0 : index
      %c0_121 = arith.constant 0 : index
      %c0_122 = arith.constant 0 : index
      %182 = vector.load %arg6[%c0_120, %c0_121, %c0_122] : memref<4x32x8xf32, #tpu.memory_space<vmem>>, vector<1x32x8xf32>
      %183 = vector.shape_cast %182 : vector<1x32x8xf32> to vector<32x8xf32>
      %cst_123 = arith.constant dense<0.000000e+00> : vector<8x8xf32>
      %184 = tpu.matmul %181, %183, %cst_123 {dimension_numbers = #tpu.dot_dimension_numbers<[1], [0], [0], [1], [0, 0, 1, 1], [], []>} : vector<8x32xf32>, vector<32x8xf32>, vector<8x8xf32> -> vector<8x8xf32>
      %c0_124 = arith.constant 0 : index
      %c0_125 = arith.constant 0 : index
      %c0_126 = arith.constant 0 : index
      %185 = vector.load %arg7[%c0_124, %c0_125, %c0_126] : memref<4x1x8xf32, #tpu.memory_space<vmem>>, vector<1x1x8xf32>
      %186 = vector.shape_cast %185 : vector<1x1x8xf32> to vector<1x8xf32>
      %187 = vector.broadcast %186 : vector<1x8xf32> to vector<8x8xf32>
      %188 = arith.addf %184, %187 : vector<8x8xf32>
      %c0_127 = arith.constant 0 : index
      %c0_128 = arith.constant 0 : index
      %c0_129 = arith.constant 0 : index
      %189 = vector.load %arg21[%c0_127, %c0_128, %c0_129] : memref<4x8x8xf32, #tpu.memory_space<vmem>>, vector<1x8x8xf32>
      %190 = vector.shape_cast %189 : vector<1x8x8xf32> to vector<8x8xf32>
      %191 = vector.shape_cast %188 : vector<8x8xf32> to vector<1x8x8xf32>
      tpu.vector_store %arg21[%c0_127, %c0_128, %c0_129], %191 {strides = array<i32>} : memref<4x8x8xf32, #tpu.memory_space<vmem>>, vector<1x8x8xf32>,
      %c0_130 = arith.constant 0 : index
      %c0_131 = arith.constant 0 : index
      %c0_132 = arith.constant 0 : index
      %192 = vector.load %arg8[%c0_130, %c0_131, %c0_132] : memref<4x32x8xf32, #tpu.memory_space<vmem>>, vector<1x32x8xf32>
      %193 = vector.shape_cast %192 : vector<1x32x8xf32> to vector<32x8xf32>
      %cst_133 = arith.constant dense<0.000000e+00> : vector<8x8xf32>
      %194 = tpu.matmul %181, %193, %cst_133 {dimension_numbers = #tpu.dot_dimension_numbers<[1], [0], [0], [1], [0, 0, 1, 1], [], []>} : vector<8x32xf32>, vector<32x8xf32>, vector<8x8xf32> -> vector<8x8xf32>
      %c0_134 = arith.constant 0 : index
      %c0_135 = arith.constant 0 : index
      %c0_136 = arith.constant 0 : index
      %195 = vector.load %arg9[%c0_134, %c0_135, %c0_136] : memref<4x1x8xf32, #tpu.memory_space<vmem>>, vector<1x1x8xf32>
      %196 = vector.shape_cast %195 : vector<1x1x8xf32> to vector<1x8xf32>
      %197 = vector.broadcast %196 : vector<1x8xf32> to vector<8x8xf32>
      %198 = arith.addf %194, %197 : vector<8x8xf32>
      %c0_137 = arith.constant 0 : index
      %c0_138 = arith.constant 0 : index
      %c0_139 = arith.constant 0 : index
      %199 = vector.load %arg22[%c0_137, %c0_138, %c0_139] : memref<4x8x8xf32, #tpu.memory_space<vmem>>, vector<1x8x8xf32>
      %200 = vector.shape_cast %199 : vector<1x8x8xf32> to vector<8x8xf32>
      %201 = vector.shape_cast %198 : vector<8x8xf32> to vector<1x8x8xf32>
      tpu.vector_store %arg22[%c0_137, %c0_138, %c0_139], %201 {strides = array<i32>} : memref<4x8x8xf32, #tpu.memory_space<vmem>>, vector<1x8x8xf32>,
      %c1_140 = arith.constant 1 : index
      %c0_141 = arith.constant 0 : index
      %c0_142 = arith.constant 0 : index
      %202 = vector.load %arg6[%c1_140, %c0_141, %c0_142] : memref<4x32x8xf32, #tpu.memory_space<vmem>>, vector<1x32x8xf32>
      %203 = vector.shape_cast %202 : vector<1x32x8xf32> to vector<32x8xf32>
      %cst_143 = arith.constant dense<0.000000e+00> : vector<8x8xf32>
      %204 = tpu.matmul %181, %203, %cst_143 {dimension_numbers = #tpu.dot_dimension_numbers<[1], [0], [0], [1], [0, 0, 1, 1], [], []>} : vector<8x32xf32>, vector<32x8xf32>, vector<8x8xf32> -> vector<8x8xf32>
      %c1_144 = arith.constant 1 : index
      %c0_145 = arith.constant 0 : index
      %c0_146 = arith.constant 0 : index
      %205 = vector.load %arg7[%c1_144, %c0_145, %c0_146] : memref<4x1x8xf32, #tpu.memory_space<vmem>>, vector<1x1x8xf32>
      %206 = vector.shape_cast %205 : vector<1x1x8xf32> to vector<1x8xf32>
      %207 = vector.broadcast %206 : vector<1x8xf32> to vector<8x8xf32>
      %208 = arith.addf %204, %207 : vector<8x8xf32>
      %c1_147 = arith.constant 1 : index
      %c0_148 = arith.constant 0 : index
      %c0_149 = arith.constant 0 : index
      %209 = vector.load %arg21[%c1_147, %c0_148, %c0_149] : memref<4x8x8xf32, #tpu.memory_space<vmem>>, vector<1x8x8xf32>
      %210 = vector.shape_cast %209 : vector<1x8x8xf32> to vector<8x8xf32>
      %211 = vector.shape_cast %208 : vector<8x8xf32> to vector<1x8x8xf32>
      tpu.vector_store %arg21[%c1_147, %c0_148, %c0_149], %211 {strides = array<i32>} : memref<4x8x8xf32, #tpu.memory_space<vmem>>, vector<1x8x8xf32>,
      %c1_150 = arith.constant 1 : index
      %c0_151 = arith.constant 0 : index
      %c0_152 = arith.constant 0 : index
      %212 = vector.load %arg8[%c1_150, %c0_151, %c0_152] : memref<4x32x8xf32, #tpu.memory_space<vmem>>, vector<1x32x8xf32>
      %213 = vector.shape_cast %212 : vector<1x32x8xf32> to vector<32x8xf32>
      %cst_153 = arith.constant dense<0.000000e+00> : vector<8x8xf32>
      %214 = tpu.matmul %181, %213, %cst_153 {dimension_numbers = #tpu.dot_dimension_numbers<[1], [0], [0], [1], [0, 0, 1, 1], [], []>} : vector<8x32xf32>, vector<32x8xf32>, vector<8x8xf32> -> vector<8x8xf32>
      %c1_154 = arith.constant 1 : index
      %c0_155 = arith.constant 0 : index
      %c0_156 = arith.constant 0 : index
      %215 = vector.load %arg9[%c1_154, %c0_155, %c0_156] : memref<4x1x8xf32, #tpu.memory_space<vmem>>, vector<1x1x8xf32>
      %216 = vector.shape_cast %215 : vector<1x1x8xf32> to vector<1x8xf32>
      %217 = vector.broadcast %216 : vector<1x8xf32> to vector<8x8xf32>
      %218 = arith.addf %214, %217 : vector<8x8xf32>
      %c1_157 = arith.constant 1 : index
      %c0_158 = arith.constant 0 : index
      %c0_159 = arith.constant 0 : index
      %219 = vector.load %arg22[%c1_157, %c0_158, %c0_159] : memref<4x8x8xf32, #tpu.memory_space<vmem>>, vector<1x8x8xf32>
      %220 = vector.shape_cast %219 : vector<1x8x8xf32> to vector<8x8xf32>
      %221 = vector.shape_cast %218 : vector<8x8xf32> to vector<1x8x8xf32>
      tpu.vector_store %arg22[%c1_157, %c0_158, %c0_159], %221 {strides = array<i32>} : memref<4x8x8xf32, #tpu.memory_space<vmem>>, vector<1x8x8xf32>,
      %c2_160 = arith.constant 2 : index
      %c0_161 = arith.constant 0 : index
      %c0_162 = arith.constant 0 : index
      %222 = vector.load %arg6[%c2_160, %c0_161, %c0_162] : memref<4x32x8xf32, #tpu.memory_space<vmem>>, vector<1x32x8xf32>
      %223 = vector.shape_cast %222 : vector<1x32x8xf32> to vector<32x8xf32>
      %cst_163 = arith.constant dense<0.000000e+00> : vector<8x8xf32>
      %224 = tpu.matmul %181, %223, %cst_163 {dimension_numbers = #tpu.dot_dimension_numbers<[1], [0], [0], [1], [0, 0, 1, 1], [], []>} : vector<8x32xf32>, vector<32x8xf32>, vector<8x8xf32> -> vector<8x8xf32>
      %c2_164 = arith.constant 2 : index
      %c0_165 = arith.constant 0 : index
      %c0_166 = arith.constant 0 : index
      %225 = vector.load %arg7[%c2_164, %c0_165, %c0_166] : memref<4x1x8xf32, #tpu.memory_space<vmem>>, vector<1x1x8xf32>
      %226 = vector.shape_cast %225 : vector<1x1x8xf32> to vector<1x8xf32>
      %227 = vector.broadcast %226 : vector<1x8xf32> to vector<8x8xf32>
      %228 = arith.addf %224, %227 : vector<8x8xf32>
      %c2_167 = arith.constant 2 : index
      %c0_168 = arith.constant 0 : index
      %c0_169 = arith.constant 0 : index
      %229 = vector.load %arg21[%c2_167, %c0_168, %c0_169] : memref<4x8x8xf32, #tpu.memory_space<vmem>>, vector<1x8x8xf32>
      %230 = vector.shape_cast %229 : vector<1x8x8xf32> to vector<8x8xf32>
      %231 = vector.shape_cast %228 : vector<8x8xf32> to vector<1x8x8xf32>
      tpu.vector_store %arg21[%c2_167, %c0_168, %c0_169], %231 {strides = array<i32>} : memref<4x8x8xf32, #tpu.memory_space<vmem>>, vector<1x8x8xf32>,
      %c2_170 = arith.constant 2 : index
      %c0_171 = arith.constant 0 : index
      %c0_172 = arith.constant 0 : index
      %232 = vector.load %arg8[%c2_170, %c0_171, %c0_172] : memref<4x32x8xf32, #tpu.memory_space<vmem>>, vector<1x32x8xf32>
      %233 = vector.shape_cast %232 : vector<1x32x8xf32> to vector<32x8xf32>
      %cst_173 = arith.constant dense<0.000000e+00> : vector<8x8xf32>
      %234 = tpu.matmul %181, %233, %cst_173 {dimension_numbers = #tpu.dot_dimension_numbers<[1], [0], [0], [1], [0, 0, 1, 1], [], []>} : vector<8x32xf32>, vector<32x8xf32>, vector<8x8xf32> -> vector<8x8xf32>
      %c2_174 = arith.constant 2 : index
      %c0_175 = arith.constant 0 : index
      %c0_176 = arith.constant 0 : index
      %235 = vector.load %arg9[%c2_174, %c0_175, %c0_176] : memref<4x1x8xf32, #tpu.memory_space<vmem>>, vector<1x1x8xf32>
      %236 = vector.shape_cast %235 : vector<1x1x8xf32> to vector<1x8xf32>
      %237 = vector.broadcast %236 : vector<1x8xf32> to vector<8x8xf32>
      %238 = arith.addf %234, %237 : vector<8x8xf32>
      %c2_177 = arith.constant 2 : index
      %c0_178 = arith.constant 0 : index
      %c0_179 = arith.constant 0 : index
      %239 = vector.load %arg22[%c2_177, %c0_178, %c0_179] : memref<4x8x8xf32, #tpu.memory_space<vmem>>, vector<1x8x8xf32>
      %240 = vector.shape_cast %239 : vector<1x8x8xf32> to vector<8x8xf32>
      %241 = vector.shape_cast %238 : vector<8x8xf32> to vector<1x8x8xf32>
      tpu.vector_store %arg22[%c2_177, %c0_178, %c0_179], %241 {strides = array<i32>} : memref<4x8x8xf32, #tpu.memory_space<vmem>>, vector<1x8x8xf32>,
      %c3_180 = arith.constant 3 : index
      %c0_181 = arith.constant 0 : index
      %c0_182 = arith.constant 0 : index
      %242 = vector.load %arg6[%c3_180, %c0_181, %c0_182] : memref<4x32x8xf32, #tpu.memory_space<vmem>>, vector<1x32x8xf32>
      %243 = vector.shape_cast %242 : vector<1x32x8xf32> to vector<32x8xf32>
      %cst_183 = arith.constant dense<0.000000e+00> : vector<8x8xf32>
      %244 = tpu.matmul %181, %243, %cst_183 {dimension_numbers = #tpu.dot_dimension_numbers<[1], [0], [0], [1], [0, 0, 1, 1], [], []>} : vector<8x32xf32>, vector<32x8xf32>, vector<8x8xf32> -> vector<8x8xf32>
      %c3_184 = arith.constant 3 : index
      %c0_185 = arith.constant 0 : index
      %c0_186 = arith.constant 0 : index
      %245 = vector.load %arg7[%c3_184, %c0_185, %c0_186] : memref<4x1x8xf32, #tpu.memory_space<vmem>>, vector<1x1x8xf32>
      %246 = vector.shape_cast %245 : vector<1x1x8xf32> to vector<1x8xf32>
      %247 = vector.broadcast %246 : vector<1x8xf32> to vector<8x8xf32>
      %248 = arith.addf %244, %247 : vector<8x8xf32>
      %c3_187 = arith.constant 3 : index
      %c0_188 = arith.constant 0 : index
      %c0_189 = arith.constant 0 : index
      %249 = vector.load %arg21[%c3_187, %c0_188, %c0_189] : memref<4x8x8xf32, #tpu.memory_space<vmem>>, vector<1x8x8xf32>
      %250 = vector.shape_cast %249 : vector<1x8x8xf32> to vector<8x8xf32>
      %251 = vector.shape_cast %248 : vector<8x8xf32> to vector<1x8x8xf32>
      tpu.vector_store %arg21[%c3_187, %c0_188, %c0_189], %251 {strides = array<i32>} : memref<4x8x8xf32, #tpu.memory_space<vmem>>, vector<1x8x8xf32>,
      %c3_190 = arith.constant 3 : index
      %c0_191 = arith.constant 0 : index
      %c0_192 = arith.constant 0 : index
      %252 = vector.load %arg8[%c3_190, %c0_191, %c0_192] : memref<4x32x8xf32, #tpu.memory_space<vmem>>, vector<1x32x8xf32>
      %253 = vector.shape_cast %252 : vector<1x32x8xf32> to vector<32x8xf32>
      %cst_193 = arith.constant dense<0.000000e+00> : vector<8x8xf32>
      %254 = tpu.matmul %181, %253, %cst_193 {dimension_numbers = #tpu.dot_dimension_numbers<[1], [0], [0], [1], [0, 0, 1, 1], [], []>} : vector<8x32xf32>, vector<32x8xf32>, vector<8x8xf32> -> vector<8x8xf32>
      %c3_194 = arith.constant 3 : index
      %c0_195 = arith.constant 0 : index
      %c0_196 = arith.constant 0 : index
      %255 = vector.load %arg9[%c3_194, %c0_195, %c0_196] : memref<4x1x8xf32, #tpu.memory_space<vmem>>, vector<1x1x8xf32>
      %256 = vector.shape_cast %255 : vector<1x1x8xf32> to vector<1x8xf32>
      %257 = vector.broadcast %256 : vector<1x8xf32> to vector<8x8xf32>
      %258 = arith.addf %254, %257 : vector<8x8xf32>
      %c3_197 = arith.constant 3 : index
      %c0_198 = arith.constant 0 : index
      %c0_199 = arith.constant 0 : index
      %259 = vector.load %arg22[%c3_197, %c0_198, %c0_199] : memref<4x8x8xf32, #tpu.memory_space<vmem>>, vector<1x8x8xf32>
      %260 = vector.shape_cast %259 : vector<1x8x8xf32> to vector<8x8xf32>
      %261 = vector.shape_cast %258 : vector<8x8xf32> to vector<1x8x8xf32>
      tpu.vector_store %arg22[%c3_197, %c0_198, %c0_199], %261 {strides = array<i32>} : memref<4x8x8xf32, #tpu.memory_space<vmem>>, vector<1x8x8xf32>,
    } else {
    }
    %c0_3 = arith.constant 0 : index
    %c0_4 = arith.constant 0 : index
    %c0_5 = arith.constant 0 : index
    %5 = vector.load %arg4[%c0_3, %c0_4, %c0_5] : memref<4x32x8xf32, #tpu.memory_space<vmem>>, vector<1x32x8xf32>
    %6 = vector.shape_cast %5 : vector<1x32x8xf32> to vector<32x8xf32>
    %cst = arith.constant dense<0.000000e+00> : vector<8x8xf32>
    %7 = tpu.matmul %1, %6, %cst {dimension_numbers = #tpu.dot_dimension_numbers<[1], [0], [0], [1], [0, 0, 1, 1], [], []>} : vector<8x32xf32>, vector<32x8xf32>, vector<8x8xf32> -> vector<8x8xf32>
    %c0_6 = arith.constant 0 : index
    %c0_7 = arith.constant 0 : index
    %c0_8 = arith.constant 0 : index
    %8 = vector.load %arg5[%c0_6, %c0_7, %c0_8] : memref<4x1x8xf32, #tpu.memory_space<vmem>>, vector<1x1x8xf32>
    %9 = vector.shape_cast %8 : vector<1x1x8xf32> to vector<1x8xf32>
    %10 = vector.broadcast %9 : vector<1x8xf32> to vector<8x8xf32>
    %11 = arith.addf %7, %10 : vector<8x8xf32>
    %c0_9 = arith.constant 0 : index
    %c0_10 = arith.constant 0 : index
    %c0_11 = arith.constant 0 : index
    %12 = vector.load %arg21[%c0_9, %c0_10, %c0_11] : memref<4x8x8xf32, #tpu.memory_space<vmem>>, vector<1x8x8xf32>
    %13 = vector.shape_cast %12 : vector<1x8x8xf32> to vector<8x8xf32>
    %c0_12 = arith.constant 0 : index
    %c0_13 = arith.constant 0 : index
    %c0_14 = arith.constant 0 : index
    %14 = vector.load %arg22[%c0_12, %c0_13, %c0_14] : memref<4x8x8xf32, #tpu.memory_space<vmem>>, vector<1x8x8xf32>
    %15 = vector.shape_cast %14 : vector<1x8x8xf32> to vector<8x8xf32>
    %cst_15 = arith.constant dense<0.000000e+00> : vector<8x8xf32>
    %16 = tpu.matmul %11, %13, %cst_15 {dimension_numbers = #tpu.dot_dimension_numbers<[1], [1], [0], [0], [0, 0, 1, 0], [], []>} : vector<8x8xf32>, vector<8x8xf32>, vector<8x8xf32> -> vector<8x8xf32>
    %cst_16 = arith.constant dense<0xFF800000> : vector<8xf32>
    %17 = vector.multi_reduction <maximumf>, %16, %cst_16 [1] : vector<8x8xf32> to vector<8xf32>
    %18 = vector.shape_cast %17 : vector<8xf32> to vector<8x1xf32>
    %19 = vector.broadcast %18 : vector<8x1xf32> to vector<8x8xf32>
    %20 = arith.subf %16, %19 : vector<8x8xf32>
    %21 = math.exp %20 : vector<8x8xf32>
    %cst_17 = arith.constant dense<0.000000e+00> : vector<8xf32>
    %22 = vector.multi_reduction <add>, %21, %cst_17 [1] : vector<8x8xf32> to vector<8xf32>
    %23 = vector.shape_cast %22 : vector<8xf32> to vector<8x1xf32>
    %24 = tpu.reciprocal %23 {approx = true} : vector<8x1xf32> -> vector<8x1xf32>
    %25 = vector.broadcast %24 : vector<8x1xf32> to vector<8x8xf32>
    %26 = arith.mulf %21, %25 : vector<8x8xf32>
    %cst_18 = arith.constant dense<0.000000e+00> : vector<8x8xf32>
    %27 = tpu.matmul %26, %15, %cst_18 {dimension_numbers = #tpu.dot_dimension_numbers<[1], [0], [0], [1], [0, 0, 1, 1], [], []>} : vector<8x8xf32>, vector<8x8xf32>, vector<8x8xf32> -> vector<8x8xf32>
    %c0_19 = arith.constant 0 : index
    %c0_20 = arith.constant 0 : index
    %c0_21 = arith.constant 0 : index
    %28 = vector.load %arg10[%c0_19, %c0_20, %c0_21] : memref<4x8x32xf32, #tpu.memory_space<vmem>>, vector<1x8x32xf32>
    %29 = vector.shape_cast %28 : vector<1x8x32xf32> to vector<8x32xf32>
    %cst_22 = arith.constant dense<0.000000e+00> : vector<8x32xf32>
    %30 = tpu.matmul %27, %29, %cst_22 {dimension_numbers = #tpu.dot_dimension_numbers<[1], [0], [0], [1], [0, 0, 1, 1], [], []>} : vector<8x8xf32>, vector<8x32xf32>, vector<8x32xf32> -> vector<8x32xf32>
    %c1 = arith.constant 1 : index
    %c0_23 = arith.constant 0 : index
    %c0_24 = arith.constant 0 : index
    %31 = vector.load %arg4[%c1, %c0_23, %c0_24] : memref<4x32x8xf32, #tpu.memory_space<vmem>>, vector<1x32x8xf32>
    %32 = vector.shape_cast %31 : vector<1x32x8xf32> to vector<32x8xf32>
    %cst_25 = arith.constant dense<0.000000e+00> : vector<8x8xf32>
    %33 = tpu.matmul %1, %32, %cst_25 {dimension_numbers = #tpu.dot_dimension_numbers<[1], [0], [0], [1], [0, 0, 1, 1], [], []>} : vector<8x32xf32>, vector<32x8xf32>, vector<8x8xf32> -> vector<8x8xf32>
    %c1_26 = arith.constant 1 : index
    %c0_27 = arith.constant 0 : index
    %c0_28 = arith.constant 0 : index
    %34 = vector.load %arg5[%c1_26, %c0_27, %c0_28] : memref<4x1x8xf32, #tpu.memory_space<vmem>>, vector<1x1x8xf32>
    %35 = vector.shape_cast %34 : vector<1x1x8xf32> to vector<1x8xf32>
    %36 = vector.broadcast %35 : vector<1x8xf32> to vector<8x8xf32>
    %37 = arith.addf %33, %36 : vector<8x8xf32>
    %c1_29 = arith.constant 1 : index
    %c0_30 = arith.constant 0 : index
    %c0_31 = arith.constant 0 : index
    %38 = vector.load %arg21[%c1_29, %c0_30, %c0_31] : memref<4x8x8xf32, #tpu.memory_space<vmem>>, vector<1x8x8xf32>
    %39 = vector.shape_cast %38 : vector<1x8x8xf32> to vector<8x8xf32>
    %c1_32 = arith.constant 1 : index
    %c0_33 = arith.constant 0 : index
    %c0_34 = arith.constant 0 : index
    %40 = vector.load %arg22[%c1_32, %c0_33, %c0_34] : memref<4x8x8xf32, #tpu.memory_space<vmem>>, vector<1x8x8xf32>
    %41 = vector.shape_cast %40 : vector<1x8x8xf32> to vector<8x8xf32>
    %cst_35 = arith.constant dense<0.000000e+00> : vector<8x8xf32>
    %42 = tpu.matmul %37, %39, %cst_35 {dimension_numbers = #tpu.dot_dimension_numbers<[1], [1], [0], [0], [0, 0, 1, 0], [], []>} : vector<8x8xf32>, vector<8x8xf32>, vector<8x8xf32> -> vector<8x8xf32>
    %cst_36 = arith.constant dense<0xFF800000> : vector<8xf32>
    %43 = vector.multi_reduction <maximumf>, %42, %cst_36 [1] : vector<8x8xf32> to vector<8xf32>
    %44 = vector.shape_cast %43 : vector<8xf32> to vector<8x1xf32>
    %45 = vector.broadcast %44 : vector<8x1xf32> to vector<8x8xf32>
    %46 = arith.subf %42, %45 : vector<8x8xf32>
    %47 = math.exp %46 : vector<8x8xf32>
    %cst_37 = arith.constant dense<0.000000e+00> : vector<8xf32>
    %48 = vector.multi_reduction <add>, %47, %cst_37 [1] : vector<8x8xf32> to vector<8xf32>
    %49 = vector.shape_cast %48 : vector<8xf32> to vector<8x1xf32>
    %50 = tpu.reciprocal %49 {approx = true} : vector<8x1xf32> -> vector<8x1xf32>
    %51 = vector.broadcast %50 : vector<8x1xf32> to vector<8x8xf32>
    %52 = arith.mulf %47, %51 : vector<8x8xf32>
    %cst_38 = arith.constant dense<0.000000e+00> : vector<8x8xf32>
    %53 = tpu.matmul %52, %41, %cst_38 {dimension_numbers = #tpu.dot_dimension_numbers<[1], [0], [0], [1], [0, 0, 1, 1], [], []>} : vector<8x8xf32>, vector<8x8xf32>, vector<8x8xf32> -> vector<8x8xf32>
    %c1_39 = arith.constant 1 : index
    %c0_40 = arith.constant 0 : index
    %c0_41 = arith.constant 0 : index
    %54 = vector.load %arg10[%c1_39, %c0_40, %c0_41] : memref<4x8x32xf32, #tpu.memory_space<vmem>>, vector<1x8x32xf32>
    %55 = vector.shape_cast %54 : vector<1x8x32xf32> to vector<8x32xf32>
    %cst_42 = arith.constant dense<0.000000e+00> : vector<8x32xf32>
    %56 = tpu.matmul %53, %55, %cst_42 {dimension_numbers = #tpu.dot_dimension_numbers<[1], [0], [0], [1], [0, 0, 1, 1], [], []>} : vector<8x8xf32>, vector<8x32xf32>, vector<8x32xf32> -> vector<8x32xf32>
    %57 = arith.addf %30, %56 : vector<8x32xf32>
    %c2 = arith.constant 2 : index
    %c0_43 = arith.constant 0 : index
    %c0_44 = arith.constant 0 : index
    %58 = vector.load %arg4[%c2, %c0_43, %c0_44] : memref<4x32x8xf32, #tpu.memory_space<vmem>>, vector<1x32x8xf32>
    %59 = vector.shape_cast %58 : vector<1x32x8xf32> to vector<32x8xf32>
    %cst_45 = arith.constant dense<0.000000e+00> : vector<8x8xf32>
    %60 = tpu.matmul %1, %59, %cst_45 {dimension_numbers = #tpu.dot_dimension_numbers<[1], [0], [0], [1], [0, 0, 1, 1], [], []>} : vector<8x32xf32>, vector<32x8xf32>, vector<8x8xf32> -> vector<8x8xf32>
    %c2_46 = arith.constant 2 : index
    %c0_47 = arith.constant 0 : index
    %c0_48 = arith.constant 0 : index
    %61 = vector.load %arg5[%c2_46, %c0_47, %c0_48] : memref<4x1x8xf32, #tpu.memory_space<vmem>>, vector<1x1x8xf32>
    %62 = vector.shape_cast %61 : vector<1x1x8xf32> to vector<1x8xf32>
    %63 = vector.broadcast %62 : vector<1x8xf32> to vector<8x8xf32>
    %64 = arith.addf %60, %63 : vector<8x8xf32>
    %c2_49 = arith.constant 2 : index
    %c0_50 = arith.constant 0 : index
    %c0_51 = arith.constant 0 : index
    %65 = vector.load %arg21[%c2_49, %c0_50, %c0_51] : memref<4x8x8xf32, #tpu.memory_space<vmem>>, vector<1x8x8xf32>
    %66 = vector.shape_cast %65 : vector<1x8x8xf32> to vector<8x8xf32>
    %c2_52 = arith.constant 2 : index
    %c0_53 = arith.constant 0 : index
    %c0_54 = arith.constant 0 : index
    %67 = vector.load %arg22[%c2_52, %c0_53, %c0_54] : memref<4x8x8xf32, #tpu.memory_space<vmem>>, vector<1x8x8xf32>
    %68 = vector.shape_cast %67 : vector<1x8x8xf32> to vector<8x8xf32>
    %cst_55 = arith.constant dense<0.000000e+00> : vector<8x8xf32>
    %69 = tpu.matmul %64, %66, %cst_55 {dimension_numbers = #tpu.dot_dimension_numbers<[1], [1], [0], [0], [0, 0, 1, 0], [], []>} : vector<8x8xf32>, vector<8x8xf32>, vector<8x8xf32> -> vector<8x8xf32>
    %cst_56 = arith.constant dense<0xFF800000> : vector<8xf32>
    %70 = vector.multi_reduction <maximumf>, %69, %cst_56 [1] : vector<8x8xf32> to vector<8xf32>
    %71 = vector.shape_cast %70 : vector<8xf32> to vector<8x1xf32>
    %72 = vector.broadcast %71 : vector<8x1xf32> to vector<8x8xf32>
    %73 = arith.subf %69, %72 : vector<8x8xf32>
    %74 = math.exp %73 : vector<8x8xf32>
    %cst_57 = arith.constant dense<0.000000e+00> : vector<8xf32>
    %75 = vector.multi_reduction <add>, %74, %cst_57 [1] : vector<8x8xf32> to vector<8xf32>
    %76 = vector.shape_cast %75 : vector<8xf32> to vector<8x1xf32>
    %77 = tpu.reciprocal %76 {approx = true} : vector<8x1xf32> -> vector<8x1xf32>
    %78 = vector.broadcast %77 : vector<8x1xf32> to vector<8x8xf32>
    %79 = arith.mulf %74, %78 : vector<8x8xf32>
    %cst_58 = arith.constant dense<0.000000e+00> : vector<8x8xf32>
    %80 = tpu.matmul %79, %68, %cst_58 {dimension_numbers = #tpu.dot_dimension_numbers<[1], [0], [0], [1], [0, 0, 1, 1], [], []>} : vector<8x8xf32>, vector<8x8xf32>, vector<8x8xf32> -> vector<8x8xf32>
    %c2_59 = arith.constant 2 : index
    %c0_60 = arith.constant 0 : index
    %c0_61 = arith.constant 0 : index
    %81 = vector.load %arg10[%c2_59, %c0_60, %c0_61] : memref<4x8x32xf32, #tpu.memory_space<vmem>>, vector<1x8x32xf32>
    %82 = vector.shape_cast %81 : vector<1x8x32xf32> to vector<8x32xf32>
    %cst_62 = arith.constant dense<0.000000e+00> : vector<8x32xf32>
    %83 = tpu.matmul %80, %82, %cst_62 {dimension_numbers = #tpu.dot_dimension_numbers<[1], [0], [0], [1], [0, 0, 1, 1], [], []>} : vector<8x8xf32>, vector<8x32xf32>, vector<8x32xf32> -> vector<8x32xf32>
    %84 = arith.addf %57, %83 : vector<8x32xf32>
    %c3 = arith.constant 3 : index
    %c0_63 = arith.constant 0 : index
    %c0_64 = arith.constant 0 : index
    %85 = vector.load %arg4[%c3, %c0_63, %c0_64] : memref<4x32x8xf32, #tpu.memory_space<vmem>>, vector<1x32x8xf32>
    %86 = vector.shape_cast %85 : vector<1x32x8xf32> to vector<32x8xf32>
    %cst_65 = arith.constant dense<0.000000e+00> : vector<8x8xf32>
    %87 = tpu.matmul %1, %86, %cst_65 {dimension_numbers = #tpu.dot_dimension_numbers<[1], [0], [0], [1], [0, 0, 1, 1], [], []>} : vector<8x32xf32>, vector<32x8xf32>, vector<8x8xf32> -> vector<8x8xf32>
    %c3_66 = arith.constant 3 : index
    %c0_67 = arith.constant 0 : index
    %c0_68 = arith.constant 0 : index
    %88 = vector.load %arg5[%c3_66, %c0_67, %c0_68] : memref<4x1x8xf32, #tpu.memory_space<vmem>>, vector<1x1x8xf32>
    %89 = vector.shape_cast %88 : vector<1x1x8xf32> to vector<1x8xf32>
    %90 = vector.broadcast %89 : vector<1x8xf32> to vector<8x8xf32>
    %91 = arith.addf %87, %90 : vector<8x8xf32>
    %c3_69 = arith.constant 3 : index
    %c0_70 = arith.constant 0 : index
    %c0_71 = arith.constant 0 : index
    %92 = vector.load %arg21[%c3_69, %c0_70, %c0_71] : memref<4x8x8xf32, #tpu.memory_space<vmem>>, vector<1x8x8xf32>
    %93 = vector.shape_cast %92 : vector<1x8x8xf32> to vector<8x8xf32>
    %c3_72 = arith.constant 3 : index
    %c0_73 = arith.constant 0 : index
    %c0_74 = arith.constant 0 : index
    %94 = vector.load %arg22[%c3_72, %c0_73, %c0_74] : memref<4x8x8xf32, #tpu.memory_space<vmem>>, vector<1x8x8xf32>
    %95 = vector.shape_cast %94 : vector<1x8x8xf32> to vector<8x8xf32>
    %cst_75 = arith.constant dense<0.000000e+00> : vector<8x8xf32>
    %96 = tpu.matmul %91, %93, %cst_75 {dimension_numbers = #tpu.dot_dimension_numbers<[1], [1], [0], [0], [0, 0, 1, 0], [], []>} : vector<8x8xf32>, vector<8x8xf32>, vector<8x8xf32> -> vector<8x8xf32>
    %cst_76 = arith.constant dense<0xFF800000> : vector<8xf32>
    %97 = vector.multi_reduction <maximumf>, %96, %cst_76 [1] : vector<8x8xf32> to vector<8xf32>
    %98 = vector.shape_cast %97 : vector<8xf32> to vector<8x1xf32>
    %99 = vector.broadcast %98 : vector<8x1xf32> to vector<8x8xf32>
    %100 = arith.subf %96, %99 : vector<8x8xf32>
    %101 = math.exp %100 : vector<8x8xf32>
    %cst_77 = arith.constant dense<0.000000e+00> : vector<8xf32>
    %102 = vector.multi_reduction <add>, %101, %cst_77 [1] : vector<8x8xf32> to vector<8xf32>
    %103 = vector.shape_cast %102 : vector<8xf32> to vector<8x1xf32>
    %104 = tpu.reciprocal %103 {approx = true} : vector<8x1xf32> -> vector<8x1xf32>
    %105 = vector.broadcast %104 : vector<8x1xf32> to vector<8x8xf32>
    %106 = arith.mulf %101, %105 : vector<8x8xf32>
    %cst_78 = arith.constant dense<0.000000e+00> : vector<8x8xf32>
    %107 = tpu.matmul %106, %95, %cst_78 {dimension_numbers = #tpu.dot_dimension_numbers<[1], [0], [0], [1], [0, 0, 1, 1], [], []>} : vector<8x8xf32>, vector<8x8xf32>, vector<8x8xf32> -> vector<8x8xf32>
    %c3_79 = arith.constant 3 : index
    %c0_80 = arith.constant 0 : index
    %c0_81 = arith.constant 0 : index
    %108 = vector.load %arg10[%c3_79, %c0_80, %c0_81] : memref<4x8x32xf32, #tpu.memory_space<vmem>>, vector<1x8x32xf32>
    %109 = vector.shape_cast %108 : vector<1x8x32xf32> to vector<8x32xf32>
    %cst_82 = arith.constant dense<0.000000e+00> : vector<8x32xf32>
    %110 = tpu.matmul %107, %109, %cst_82 {dimension_numbers = #tpu.dot_dimension_numbers<[1], [0], [0], [1], [0, 0, 1, 1], [], []>} : vector<8x8xf32>, vector<8x32xf32>, vector<8x32xf32> -> vector<8x32xf32>
    %111 = arith.addf %84, %110 : vector<8x32xf32>
    %c0_83 = arith.constant 0 : index
    %c0_84 = arith.constant 0 : index
    %112 = vector.load %arg11[%c0_83, %c0_84] : memref<1x32xf32, #tpu.memory_space<vmem>>, vector<1x32xf32>
    %113 = vector.broadcast %112 : vector<1x32xf32> to vector<8x32xf32>
    %114 = arith.addf %111, %113 : vector<8x32xf32>
    %115 = arith.addf %1, %114 : vector<8x32xf32>
    %cst_85 = arith.constant dense<0.000000e+00> : vector<8xf32>
    %116 = vector.multi_reduction <add>, %115, %cst_85 [1] : vector<8x32xf32> to vector<8xf32>
    %117 = vector.shape_cast %116 : vector<8xf32> to vector<8x1xf32>
    %cst_86 = arith.constant 3.200000e+01 : f32
    %118 = vector.broadcast %cst_86 : f32 to vector<8x1xf32>
    %119 = arith.divf %117, %118 : vector<8x1xf32>
    %120 = vector.broadcast %119 : vector<8x1xf32> to vector<8x32xf32>
    %121 = arith.subf %115, %120 : vector<8x32xf32>
    %122 = arith.mulf %121, %121 : vector<8x32xf32>
    %cst_87 = arith.constant dense<0.000000e+00> : vector<8xf32>
    %123 = vector.multi_reduction <add>, %122, %cst_87 [1] : vector<8x32xf32> to vector<8xf32>
    %124 = vector.shape_cast %123 : vector<8xf32> to vector<8x1xf32>
    %cst_88 = arith.constant 3.200000e+01 : f32
    %125 = vector.broadcast %cst_88 : f32 to vector<8x1xf32>
    %126 = arith.divf %124, %125 : vector<8x1xf32>
    %127 = vector.broadcast %119 : vector<8x1xf32> to vector<8x32xf32>
    %128 = arith.subf %115, %127 : vector<8x32xf32>
    %cst_89 = arith.constant 9.99999974E-6 : f32
    %129 = vector.broadcast %cst_89 : f32 to vector<8x1xf32>
    %130 = arith.addf %126, %129 : vector<8x1xf32>
    %131 = math.rsqrt %130 : vector<8x1xf32>
    %132 = vector.broadcast %131 : vector<8x1xf32> to vector<8x32xf32>
    %133 = arith.mulf %128, %132 : vector<8x32xf32>
    %c0_90 = arith.constant 0 : index
    %c0_91 = arith.constant 0 : index
    %134 = vector.load %arg12[%c0_90, %c0_91] : memref<1x32xf32, #tpu.memory_space<vmem>>, vector<1x32xf32>
    %135 = vector.broadcast %134 : vector<1x32xf32> to vector<8x32xf32>
    %136 = arith.mulf %133, %135 : vector<8x32xf32>
    %c0_92 = arith.constant 0 : index
    %c0_93 = arith.constant 0 : index
    %137 = vector.load %arg13[%c0_92, %c0_93] : memref<1x32xf32, #tpu.memory_space<vmem>>, vector<1x32xf32>
    %138 = vector.broadcast %137 : vector<1x32xf32> to vector<8x32xf32>
    %139 = arith.addf %136, %138 : vector<8x32xf32>
    %c0_94 = arith.constant 0 : index
    %c0_95 = arith.constant 0 : index
    %140 = vector.load %arg14[%c0_94, %c0_95] : memref<32x64xf32, #tpu.memory_space<vmem>>, vector<32x64xf32>
    %cst_96 = arith.constant dense<0.000000e+00> : vector<8x64xf32>
    %141 = tpu.matmul %139, %140, %cst_96 {dimension_numbers = #tpu.dot_dimension_numbers<[1], [0], [0], [1], [0, 0, 1, 1], [], []>} : vector<8x32xf32>, vector<32x64xf32>, vector<8x64xf32> -> vector<8x64xf32>
    %c0_97 = arith.constant 0 : index
    %c0_98 = arith.constant 0 : index
    %142 = vector.load %arg15[%c0_97, %c0_98] : memref<1x64xf32, #tpu.memory_space<vmem>>, vector<1x64xf32>
    %143 = vector.broadcast %142 : vector<1x64xf32> to vector<8x64xf32>
    %144 = arith.addf %141, %143 : vector<8x64xf32>
    %cst_99 = arith.constant 0.000000e+00 : f32
    %145 = vector.broadcast %cst_99 : f32 to vector<8x64xf32>
    %146 = arith.maximumf %144, %145 : vector<8x64xf32>
    %c0_100 = arith.constant 0 : index
    %c0_101 = arith.constant 0 : index
    %147 = vector.load %arg16[%c0_100, %c0_101] : memref<64x32xf32, #tpu.memory_space<vmem>>, vector<64x32xf32>
    %cst_102 = arith.constant dense<0.000000e+00> : vector<8x32xf32>
    %148 = tpu.matmul %146, %147, %cst_102 {dimension_numbers = #tpu.dot_dimension_numbers<[1], [0], [0], [1], [0, 0, 1, 1], [], []>} : vector<8x64xf32>, vector<64x32xf32>, vector<8x32xf32> -> vector<8x32xf32>
    %c0_103 = arith.constant 0 : index
    %c0_104 = arith.constant 0 : index
    %149 = vector.load %arg17[%c0_103, %c0_104] : memref<1x32xf32, #tpu.memory_space<vmem>>, vector<1x32xf32>
    %150 = vector.broadcast %149 : vector<1x32xf32> to vector<8x32xf32>
    %151 = arith.addf %148, %150 : vector<8x32xf32>
    %152 = arith.addf %139, %151 : vector<8x32xf32>
    %cst_105 = arith.constant dense<0.000000e+00> : vector<8xf32>
    %153 = vector.multi_reduction <add>, %152, %cst_105 [1] : vector<8x32xf32> to vector<8xf32>
    %154 = vector.shape_cast %153 : vector<8xf32> to vector<8x1xf32>
    %cst_106 = arith.constant 3.200000e+01 : f32
    %155 = vector.broadcast %cst_106 : f32 to vector<8x1xf32>
    %156 = arith.divf %154, %155 : vector<8x1xf32>
    %157 = vector.broadcast %156 : vector<8x1xf32> to vector<8x32xf32>
    %158 = arith.subf %152, %157 : vector<8x32xf32>
    %159 = arith.mulf %158, %158 : vector<8x32xf32>
    %cst_107 = arith.constant dense<0.000000e+00> : vector<8xf32>
    %160 = vector.multi_reduction <add>, %159, %cst_107 [1] : vector<8x32xf32> to vector<8xf32>
    %161 = vector.shape_cast %160 : vector<8xf32> to vector<8x1xf32>
    %cst_108 = arith.constant 3.200000e+01 : f32
    %162 = vector.broadcast %cst_108 : f32 to vector<8x1xf32>
    %163 = arith.divf %161, %162 : vector<8x1xf32>
    %164 = vector.broadcast %156 : vector<8x1xf32> to vector<8x32xf32>
    %165 = arith.subf %152, %164 : vector<8x32xf32>
    %cst_109 = arith.constant 9.99999974E-6 : f32
    %166 = vector.broadcast %cst_109 : f32 to vector<8x1xf32>
    %167 = arith.addf %163, %166 : vector<8x1xf32>
    %168 = math.rsqrt %167 : vector<8x1xf32>
    %169 = vector.broadcast %168 : vector<8x1xf32> to vector<8x32xf32>
    %170 = arith.mulf %165, %169 : vector<8x32xf32>
    %c0_110 = arith.constant 0 : index
    %c0_111 = arith.constant 0 : index
    %171 = vector.load %arg18[%c0_110, %c0_111] : memref<1x32xf32, #tpu.memory_space<vmem>>, vector<1x32xf32>
    %172 = vector.broadcast %171 : vector<1x32xf32> to vector<8x32xf32>
    %173 = arith.mulf %170, %172 : vector<8x32xf32>
    %c0_112 = arith.constant 0 : index
    %c0_113 = arith.constant 0 : index
    %174 = vector.load %arg19[%c0_112, %c0_113] : memref<1x32xf32, #tpu.memory_space<vmem>>, vector<1x32xf32>
    %175 = vector.broadcast %174 : vector<1x32xf32> to vector<8x32xf32>
    %176 = arith.addf %173, %175 : vector<8x32xf32>
    %c0_114 = arith.constant 0 : index
    %c0_115 = arith.constant 0 : index
    %c0_116 = arith.constant 0 : index
    %177 = vector.load %arg20[%c0_114, %c0_115, %c0_116] : memref<1x8x32xf32, #tpu.memory_space<vmem>>, vector<1x8x32xf32>
    %178 = vector.shape_cast %177 : vector<1x8x32xf32> to vector<8x32xf32>
    %179 = vector.shape_cast %176 : vector<8x32xf32> to vector<1x8x32xf32>
    tpu.vector_store %arg20[%c0_114, %c0_115, %c0_116], %179 {strides = array<i32>} : memref<1x8x32xf32, #tpu.memory_space<vmem>>, vector<1x8x32xf32>,
    return
  }
  func.func @transform_0(%arg0: i32, %arg1: i32) -> (i32, i32, i32) {
    %c0_i32 = arith.constant 0 : i32
    %c0_i32_0 = arith.constant 0 : i32
    return %arg0, %arg1, %c0_i32 : i32, i32, i32
  }
  func.func @transform_1(%arg0: i32, %arg1: i32) -> (i32, i32, i32) {
    %c0_i32 = arith.constant 0 : i32
    %c0_i32_0 = arith.constant 0 : i32
    %c0_i32_1 = arith.constant 0 : i32
    return %arg0, %c0_i32, %c0_i32_0 : i32, i32, i32
  }
  func.func @transform_2(%arg0: i32, %arg1: i32) -> (i32, i32, i32) {
    %c0_i32 = arith.constant 0 : i32
    %c0_i32_0 = arith.constant 0 : i32
    %c0_i32_1 = arith.constant 0 : i32
    %c0_i32_2 = arith.constant 0 : i32
    return %c0_i32, %c0_i32_0, %c0_i32_1 : i32, i32, i32
  }
  func.func @transform_3(%arg0: i32, %arg1: i32) -> (i32, i32, i32) {
    %c0_i32 = arith.constant 0 : i32
    %c0_i32_0 = arith.constant 0 : i32
    %c0_i32_1 = arith.constant 0 : i32
    %c0_i32_2 = arith.constant 0 : i32
    return %c0_i32, %c0_i32_0, %c0_i32_1 : i32, i32, i32
  }
  func.func @transform_4(%arg0: i32, %arg1: i32) -> (i32, i32, i32) {
    %c0_i32 = arith.constant 0 : i32
    %c0_i32_0 = arith.constant 0 : i32
    %c0_i32_1 = arith.constant 0 : i32
    %c0_i32_2 = arith.constant 0 : i32
    return %c0_i32, %c0_i32_0, %c0_i32_1 : i32, i32, i32
  }
  func.func @transform_5(%arg0: i32, %arg1: i32) -> (i32, i32, i32) {
    %c0_i32 = arith.constant 0 : i32
    %c0_i32_0 = arith.constant 0 : i32
    %c0_i32_1 = arith.constant 0 : i32
    %c0_i32_2 = arith.constant 0 : i32
    return %c0_i32, %c0_i32_0, %c0_i32_1 : i32, i32, i32
  }
  func.func @transform_6(%arg0: i32, %arg1: i32) -> (i32, i32, i32) {
    %c0_i32 = arith.constant 0 : i32
    %c0_i32_0 = arith.constant 0 : i32
    %c0_i32_1 = arith.constant 0 : i32
    %c0_i32_2 = arith.constant 0 : i32
    return %c0_i32, %c0_i32_0, %c0_i32_1 : i32, i32, i32
  }
  func.func @transform_7(%arg0: i32, %arg1: i32) -> (i32, i32, i32) {
    %c0_i32 = arith.constant 0 : i32
    %c0_i32_0 = arith.constant 0 : i32
    %c0_i32_1 = arith.constant 0 : i32
    %c0_i32_2 = arith.constant 0 : i32
    return %c0_i32, %c0_i32_0, %c0_i32_1 : i32, i32, i32
  }
  func.func @transform_8(%arg0: i32, %arg1: i32) -> (i32, i32, i32) {
    %c0_i32 = arith.constant 0 : i32
    %c0_i32_0 = arith.constant 0 : i32
    %c0_i32_1 = arith.constant 0 : i32
    %c0_i32_2 = arith.constant 0 : i32
    return %c0_i32, %c0_i32_0, %c0_i32_1 : i32, i32, i32
  }
  func.func @transform_9(%arg0: i32, %arg1: i32) -> (i32, i32) {
    %c0_i32 = arith.constant 0 : i32
    %c0_i32_0 = arith.constant 0 : i32
    %c0_i32_1 = arith.constant 0 : i32
    return %c0_i32, %c0_i32_0 : i32, i32
  }
  func.func @transform_10(%arg0: i32, %arg1: i32) -> (i32, i32) {
    %c0_i32 = arith.constant 0 : i32
    %c0_i32_0 = arith.constant 0 : i32
    %c0_i32_1 = arith.constant 0 : i32
    return %c0_i32, %c0_i32_0 : i32, i32
  }
  func.func @transform_11(%arg0: i32, %arg1: i32) -> (i32, i32) {
    %c0_i32 = arith.constant 0 : i32
    %c0_i32_0 = arith.constant 0 : i32
    %c0_i32_1 = arith.constant 0 : i32
    return %c0_i32, %c0_i32_0 : i32, i32
  }
  func.func @transform_12(%arg0: i32, %arg1: i32) -> (i32, i32) {
    %c0_i32 = arith.constant 0 : i32
    %c0_i32_0 = arith.constant 0 : i32
    %c0_i32_1 = arith.constant 0 : i32
    return %c0_i32, %c0_i32_0 : i32, i32
  }
  func.func @transform_13(%arg0: i32, %arg1: i32) -> (i32, i32) {
    %c0_i32 = arith.constant 0 : i32
    %c0_i32_0 = arith.constant 0 : i32
    %c0_i32_1 = arith.constant 0 : i32
    return %c0_i32, %c0_i32_0 : i32, i32
  }
  func.func @transform_14(%arg0: i32, %arg1: i32) -> (i32, i32) {
    %c0_i32 = arith.constant 0 : i32
    %c0_i32_0 = arith.constant 0 : i32
    %c0_i32_1 = arith.constant 0 : i32
    return %c0_i32, %c0_i32_0 : i32, i32
  }
  func.func @transform_15(%arg0: i32, %arg1: i32) -> (i32, i32) {
    %c0_i32 = arith.constant 0 : i32
    %c0_i32_0 = arith.constant 0 : i32
    %c0_i32_1 = arith.constant 0 : i32
    return %c0_i32, %c0_i32_0 : i32, i32
  }
  func.func @transform_16(%arg0: i32, %arg1: i32) -> (i32, i32) {
    %c0_i32 = arith.constant 0 : i32
    %c0_i32_0 = arith.constant 0 : i32
    %c0_i32_1 = arith.constant 0 : i32
    return %c0_i32, %c0_i32_0 : i32, i32
  }
  func.func @transform_17(%arg0: i32, %arg1: i32) -> (i32, i32) {
    %c0_i32 = arith.constant 0 : i32
    %c0_i32_0 = arith.constant 0 : i32
    %c0_i32_1 = arith.constant 0 : i32
    return %c0_i32, %c0_i32_0 : i32, i32
  }
  func.func @transform_18(%arg0: i32, %arg1: i32) -> (i32, i32, i32) {
    %c0_i32 = arith.constant 0 : i32
    %c0_i32_0 = arith.constant 0 : i32
    return %arg0, %arg1, %c0_i32 : i32, i32, i32
  }
}

</mosaic_0001>

<llo_original>
// kernel: tpu_custom_call.1
$region0: #{tpu_custom_call.1}
  #allocation0 [shape = 'u32[]', space=smem, size = 0x4, offset = 0x4, fixed_abs, tag = 'smem constant byte address 0x4 - core index']
  #allocation1 [shape = 'u32[144,128]{1,0:T(1,128)}', space=vmem, size = 0x12000, scoped, tag = 'internal scratch']
  #allocation2 [shape = 'f32[4,8,8]{2,1,0:T(8,128)}', space=vmem, size = 0x4000, scoped, tag = 'scratch operand']
  #allocation3 [shape = 'f32[4,8,8]{2,1,0:T(8,128)}', space=vmem, size = 0x4000, scoped, tag = 'scratch operand']
  %s0 = inlined_call_operand.hbm [shape: f32[2,8,32], index: 0, kind: input, shape index: {}]
  %s1 = inlined_call_operand.hbm [shape: f32[2,8,32], index: 1, kind: input, shape index: {}]
  %s2 = inlined_call_operand.hbm [shape: f32[4,32,8], index: 2, kind: input, shape index: {}]
  %s3 = inlined_call_operand.hbm [shape: f32[4,1,8], index: 3, kind: input, shape index: {}]
  %s4 = inlined_call_operand.hbm [shape: f32[4,32,8], index: 4, kind: input, shape index: {}]
  %s5 = inlined_call_operand.hbm [shape: f32[4,1,8], index: 5, kind: input, shape index: {}]
  %s6 = inlined_call_operand.hbm [shape: f32[4,32,8], index: 6, kind: input, shape index: {}]
  %s7 = inlined_call_operand.hbm [shape: f32[4,1,8], index: 7, kind: input, shape index: {}]
  %s8 = inlined_call_operand.hbm [shape: f32[4,8,32], index: 8, kind: input, shape index: {}]
  %s9 = inlined_call_operand.hbm [shape: f32[1,32], index: 9, kind: input, shape index: {}]
  %s10 = inlined_call_operand.hbm [shape: f32[1,32], index: 10, kind: input, shape index: {}]
  %s11 = inlined_call_operand.hbm [shape: f32[1,32], index: 11, kind: input, shape index: {}]
  %s12 = inlined_call_operand.hbm [shape: f32[32,64], index: 12, kind: input, shape index: {}]
  %s13 = inlined_call_operand.hbm [shape: f32[1,64], index: 13, kind: input, shape index: {}]
  %s14 = inlined_call_operand.hbm [shape: f32[64,32], index: 14, kind: input, shape index: {}]
  %s15 = inlined_call_operand.hbm [shape: f32[1,32], index: 15, kind: input, shape index: {}]
  %s16 = inlined_call_operand.hbm [shape: f32[1,32], index: 16, kind: input, shape index: {}]
  %s17 = inlined_call_operand.hbm [shape: f32[1,32], index: 17, kind: input, shape index: {}]
  %s18 = inlined_call_operand.hbm [shape: f32[2,8,32], index: 18, kind: output, shape index: {}]
  %s19 = sld [smem:[#allocation0]]
  $region181: #{tpu_custom_call.1} parent=0
    _
  %s21 = ssub.s32 1, %s19
  %s22 = scalar_select 0, %s21, %s19
  $region1: #{tpu_custom_call.1} parent=0
    #allocation4 [shape = 'u8[8192]{0}', space=vmem, size = 0x2000, scoped, tag = 'input window, operand 0']
    #allocation5 [shape = 's32[2]{0}', space=sflag, size = 0x8, scoped, tag = 'scoped memory for tpu_custom_call.1']
    #allocation6 [shape = 's32[2]{0}', space=sflag, size = 0x8, scoped, tag = 'scoped memory for tpu_custom_call.1']
    #allocation7 [shape = 'u8[8192]{0}', space=vmem, size = 0x2000, scoped, tag = 'input window, operand 1']
    #allocation8 [shape = 's32[2]{0}', space=sflag, size = 0x8, scoped, tag = 'scoped memory for tpu_custom_call.1']
    #allocation9 [shape = 'u8[65536]{0}', space=vmem, size = 0x10000, scoped, tag = 'input window, operand 2, single buffered']
    #allocation10 [shape = 'u8[2048]{0}', space=vmem, size = 0x800, scoped, tag = 'input window, operand 3, single buffered']
    #allocation11 [shape = 's32[1]{0}', space=sflag, size = 0x4, scoped, tag = 'scoped memory for tpu_custom_call.1']
    #allocation12 [shape = 'u8[65536]{0}', space=vmem, size = 0x10000, scoped, tag = 'input window, operand 4, single buffered']
    #allocation13 [shape = 'u8[2048]{0}', space=vmem, size = 0x800, scoped, tag = 'input window, operand 5, single buffered']
    #allocation14 [shape = 's32[1]{0}', space=sflag, size = 0x4, scoped, tag = 'scoped memory for tpu_custom_call.1']
    #allocation15 [shape = 'u8[65536]{0}', space=vmem, size = 0x10000, scoped, tag = 'input window, operand 6, single buffered']
    #allocation16 [shape = 'u8[2048]{0}', space=vmem, size = 0x800, scoped, tag = 'input window, operand 7, single buffered']
    #allocation17 [shape = 's32[1]{0}', space=sflag, size = 0x4, scoped, tag = 'scoped memory for tpu_custom_call.1']
    #allocation18 [shape = 'u8[16384]{0}', space=vmem, size = 0x4000, scoped, tag = 'input window, operand 8, single buffered']
    #allocation19 [shape = 'u8[512]{0}', space=vmem, size = 0x400, scoped, tag = 'input window, operand 9, single buffered']
    #allocation20 [shape = 's32[1]{0}', space=sflag, size = 0x4, scoped, tag = 'scoped memory for tpu_custom_call.1']
    #allocation21 [shape = 'u8[512]{0}', space=vmem, size = 0x400, scoped, tag = 'input window, operand 10, single buffered']
    #allocation22 [shape = 'u8[512]{0}', space=vmem, size = 0x400, scoped, tag = 'input window, operand 11, single buffered']
    #allocation23 [shape = 's32[1]{0}', space=sflag, size = 0x4, scoped, tag = 'scoped memory for tpu_custom_call.1']
    #allocation24 [shape = 'u8[16384]{0}', space=vmem, size = 0x4000, scoped, tag = 'input window, operand 12, single buffered']
    #allocation25 [shape = 'u8[512]{0}', space=vmem, size = 0x400, scoped, tag = 'input window, operand 13, single buffered']
    #allocation26 [shape = 's32[1]{0}', space=sflag, size = 0x4, scoped, tag = 'scoped memory for tpu_custom_call.1']
    #allocation27 [shape = 'u8[32768]{0}', space=vmem, size = 0x8000, scoped, tag = 'input window, operand 14, single buffered']
    #allocation28 [shape = 'u8[512]{0}', space=vmem, size = 0x400, scoped, tag = 'input window, operand 15, single buffered']
    #allocation29 [shape = 's32[1]{0}', space=sflag, size = 0x4, scoped, tag = 'scoped memory for tpu_custom_call.1']
    #allocation30 [shape = 'u8[512]{0}', space=vmem, size = 0x400, scoped, tag = 'input window, operand 16, single buffered']
    #allocation31 [shape = 'u8[512]{0}', space=vmem, size = 0x400, scoped, tag = 'input window, operand 17, single buffered']
    #allocation32 [shape = 's32[1]{0}', space=sflag, size = 0x4, scoped, tag = 'scoped memory for tpu_custom_call.1']
    #allocation33 [shape = 'u8[8192]{0}', space=vmem, size = 0x2000, scoped, tag = 'output window, operand 0']
    %23 = vsyncpa [#allocation5], 0
    %s24 = scalar_lea.sflag [#allocation5], 1
    %25 = vsyncpa %s24, 0
    %26 = vsyncpa [#allocation8], 0
    %s27 = scalar_lea.sflag [#allocation8], 1
    %28 = vsyncpa %s27, 0
    %29 = vsyncpa [#allocation11], 0
    %30 = vsyncpa [#allocation14], 0
    %31 = vsyncpa [#allocation17], 0
    %32 = vsyncpa [#allocation20], 0
    %33 = vsyncpa [#allocation23], 0
    %34 = vsyncpa [#allocation26], 0
    %35 = vsyncpa [#allocation29], 0
    %36 = vsyncpa [#allocation32], 0
    %37 = vsyncpa [#allocation6], 0
    %s38 = scalar_lea.sflag [#allocation6], 1
    %39 = vsyncpa %s38, 0
    loop: start=0, step=1, limit=4
    $region2: #{tpu_custom_call.1} parent=1 // loop_pre_header
      _
    $region3: #{tpu_custom_call.1} parent=1 // loop_header
      %s41 = sphi 0, %s45
      %p42 = scmp.ge.s32.totalorder %s41, 4
      %s48 = sphi 0, %s60
      %s49 = sphi 0, %s56
      %s50 = sphi 0, %s48
      %s51 = sphi 0, %s49
      %s52 = sphi 0, %s50
      %s53 = sphi 0, %s51
      %s65 = sphi 0, %s67
      %s68 = sphi 0, %s65
      %s69 = sphi 0, %s68
      %s85 = sphi 0, %s69
      %s91 = sphi 0, %s93
      %s94 = sphi 0, %s91
      %s95 = sphi 0, %s94
      %s111 = sphi 0, %s95
      %s115 = sphi 0, %s115
      %s117 = sphi 0, %s115
      %s118 = sphi 0, %s117
      %s132 = sphi 0, %s118
      %s136 = sphi 0, %s136
      %s138 = sphi 0, %s136
      %s139 = sphi 0, %s138
      %s153 = sphi 0, %s139
      %s157 = sphi 0, %s157
      %s159 = sphi 0, %s157
      %s160 = sphi 0, %s159
      %s174 = sphi 0, %s160
      %s178 = sphi 0, %s178
      %s180 = sphi 0, %s178
      %s181 = sphi 0, %s180
      %s195 = sphi 0, %s181
      %s199 = sphi 0, %s199
      %s201 = sphi 0, %s199
      %s202 = sphi 0, %s201
      %s216 = sphi 0, %s202
      %s220 = sphi 0, %s220
      %s222 = sphi 0, %s220
      %s223 = sphi 0, %s222
      %s237 = sphi 0, %s223
      %s241 = sphi 0, %s241
      %s243 = sphi 0, %s241
      %s244 = sphi 0, %s243
      %s258 = sphi 0, %s244
      %s262 = sphi 0, %s262
      %s264 = sphi 0, %s262
      %s265 = sphi 0, %s264
      %s279 = sphi 0, %s265
      %s283 = sphi 0, %s283
      %s285 = sphi 0, %s283
      %s286 = sphi 0, %s285
      %s300 = sphi 0, %s286
      %s304 = sphi 0, %s304
      %s306 = sphi 0, %s304
      %s307 = sphi 0, %s306
      %s321 = sphi 0, %s307
      %s325 = sphi 0, %s325
      %s327 = sphi 0, %s325
      %s328 = sphi 0, %s327
      %s342 = sphi 0, %s328
      %s346 = sphi 0, %s346
      %s348 = sphi 0, %s346
      %s349 = sphi 0, %s348
      %s363 = sphi 0, %s349
      %s367 = sphi 0, %s367
      %s369 = sphi 0, %s367
      %s370 = sphi 0, %s369
      %s384 = sphi 0, %s370
      %s388 = sphi 0, %s388
      %s390 = sphi 0, %s388
      %s391 = sphi 0, %s390
      %s405 = sphi 0, %s391
      %s409 = sphi 0, %s409
      %s411 = sphi 0, %s409
      %s412 = sphi 0, %s411
      %s426 = sphi 0, %s412
      %s430 = sphi 0, %s430
      %s432 = sphi 0, %s430
      %s433 = sphi 0, %s432
      %s447 = sphi 0, %s433
      %s455 = sphi 0, %s457
      %s458 = sphi 0, %s455
      %s459 = sphi 0, %s458
      %s475 = sphi 0, %s459
    $region4: #{tpu_custom_call.1} parent=1 // loop_header_branch
      %44 = sbr.rel (%p42) target = $region8
    $region5: #{tpu_custom_call.1} parent=1 // loop_body
      %s46 = ssub.s32 %s41, 1
      %s47 = ssub.s32 %s41, 2
      %s54 = sadd.s32 1, %s49
      %p55 = scmp.ge.s32.totalorder %s54, 1
      %s56 = scalar_select %p55, 0, %s54
      %s57 = sadd.s32 1, %s48
      %s58 = scalar_select %p55, %s57, %s48
      %p59 = scmp.ge.s32.totalorder %s58, 2
      %s60 = scalar_select %p59, 0, %s58
      %s61 = ssub.s32 %s48, %s60
      %s62 = ssub.s32 %s49, %s56
      %s63 = sor.u32 %s61, %s62
      %p64 = scmp.eq.s32.totalorder %s63, 0
      %s66 = sadd.s32 %s65, 1
      %s67 = scalar_select %p64, %s65, %s66
      %p70 = pneg %p64
      %p71 = scmp.eq.s32.totalorder %s41, 1
      %p72 = por %p70, %p71
      %p73 = scmp.ne.s32.totalorder %s65, %s68
      %p74 = scmp.eq.s32.totalorder %s41, 0
      %p75 = por %p73, %p74
      %p76 = scmp.ne.s32.totalorder %s65, %s68
      %p77 = scmp.eq.s32.totalorder %s46, 1
      %p78 = por %p76, %p77
      %p79 = scmp.ne.s32.totalorder %s68, %s69
      %p80 = scmp.eq.s32.totalorder %s46, 0
      %p81 = por %p79, %p80
      %p82 = scmp.ne.s32.totalorder %s68, %s69
      %p83 = scmp.eq.s32.totalorder %s47, 1
      %p84 = por %p82, %p83
      %p86 = scmp.ne.s32.totalorder %s69, %s85
      %p87 = scmp.eq.s32.totalorder %s47, 0
      %p88 = por %p86, %p87
      %s89 = ssub.s32 %s48, %s60
      %p90 = scmp.eq.s32.totalorder %s89, 0
      %s92 = sadd.s32 %s91, 1
      %s93 = scalar_select %p90, %s91, %s92
      %p96 = pneg %p90
      %p97 = scmp.eq.s32.totalorder %s41, 1
      %p98 = por %p96, %p97
      %p99 = scmp.ne.s32.totalorder %s91, %s94
      %p100 = scmp.eq.s32.totalorder %s41, 0
      %p101 = por %p99, %p100
      %p102 = scmp.ne.s32.totalorder %s91, %s94
      %p103 = scmp.eq.s32.totalorder %s46, 1
      %p104 = por %p102, %p103
      %p105 = scmp.ne.s32.totalorder %s94, %s95
      %p106 = scmp.eq.s32.totalorder %s46, 0
      %p107 = por %p105, %p106
      %p108 = scmp.ne.s32.totalorder %s94, %s95
      %p109 = scmp.eq.s32.totalorder %s47, 1
      %p110 = por %p108, %p109
      %p112 = scmp.ne.s32.totalorder %s95, %s111
      %p113 = scmp.eq.s32.totalorder %s47, 0
      %p114 = por %p112, %p113
      %s116 = sadd.s32 %s115, 1
      %p119 = scmp.eq.s32.totalorder %s41, 1
      %p120 = scmp.ne.s32.totalorder %s115, %s117
      %p121 = scmp.eq.s32.totalorder %s41, 0
      %p122 = por %p120, %p121
      %p123 = scmp.ne.s32.totalorder %s115, %s117
      %p124 = scmp.eq.s32.totalorder %s46, 1
      %p125 = por %p123, %p124
      %p126 = scmp.ne.s32.totalorder %s117, %s118
      %p127 = scmp.eq.s32.totalorder %s46, 0
      %p128 = por %p126, %p127
      %p129 = scmp.ne.s32.totalorder %s117, %s118
      %p130 = scmp.eq.s32.totalorder %s47, 1
      %p131 = por %p129, %p130
      %p133 = scmp.ne.s32.totalorder %s118, %s132
      %p134 = scmp.eq.s32.totalorder %s47, 0
      %p135 = por %p133, %p134
      %s137 = sadd.s32 %s136, 1
      %p140 = scmp.eq.s32.totalorder %s41, 1
      %p141 = scmp.ne.s32.totalorder %s136, %s138
      %p142 = scmp.eq.s32.totalorder %s41, 0
      %p143 = por %p141, %p142
      %p144 = scmp.ne.s32.totalorder %s136, %s138
      %p145 = scmp.eq.s32.totalorder %s46, 1
      %p146 = por %p144, %p145
      %p147 = scmp.ne.s32.totalorder %s138, %s139
      %p148 = scmp.eq.s32.totalorder %s46, 0
      %p149 = por %p147, %p148
      %p150 = scmp.ne.s32.totalorder %s138, %s139
      %p151 = scmp.eq.s32.totalorder %s47, 1
      %p152 = por %p150, %p151
      %p154 = scmp.ne.s32.totalorder %s139, %s153
      %p155 = scmp.eq.s32.totalorder %s47, 0
      %p156 = por %p154, %p155
      %s158 = sadd.s32 %s157, 1
      %p161 = scmp.eq.s32.totalorder %s41, 1
      %p162 = scmp.ne.s32.totalorder %s157, %s159
      %p163 = scmp.eq.s32.totalorder %s41, 0
      %p164 = por %p162, %p163
      %p165 = scmp.ne.s32.totalorder %s157, %s159
      %p166 = scmp.eq.s32.totalorder %s46, 1
      %p167 = por %p165, %p166
      %p168 = scmp.ne.s32.totalorder %s159, %s160
      %p169 = scmp.eq.s32.totalorder %s46, 0
      %p170 = por %p168, %p169
      %p171 = scmp.ne.s32.totalorder %s159, %s160
      %p172 = scmp.eq.s32.totalorder %s47, 1
      %p173 = por %p171, %p172
      %p175 = scmp.ne.s32.totalorder %s160, %s174
      %p176 = scmp.eq.s32.totalorder %s47, 0
      %p177 = por %p175, %p176
      %s179 = sadd.s32 %s178, 1
      %p182 = scmp.eq.s32.totalorder %s41, 1
      %p183 = scmp.ne.s32.totalorder %s178, %s180
      %p184 = scmp.eq.s32.totalorder %s41, 0
      %p185 = por %p183, %p184
      %p186 = scmp.ne.s32.totalorder %s178, %s180
      %p187 = scmp.eq.s32.totalorder %s46, 1
      %p188 = por %p186, %p187
      %p189 = scmp.ne.s32.totalorder %s180, %s181
      %p190 = scmp.eq.s32.totalorder %s46, 0
      %p191 = por %p189, %p190
      %p192 = scmp.ne.s32.totalorder %s180, %s181
      %p193 = scmp.eq.s32.totalorder %s47, 1
      %p194 = por %p192, %p193
      %p196 = scmp.ne.s32.totalorder %s181, %s195
      %p197 = scmp.eq.s32.totalorder %s47, 0
      %p198 = por %p196, %p197
      %s200 = sadd.s32 %s199, 1
      %p203 = scmp.eq.s32.totalorder %s41, 1
      %p204 = scmp.ne.s32.totalorder %s199, %s201
      %p205 = scmp.eq.s32.totalorder %s41, 0
      %p206 = por %p204, %p205
      %p207 = scmp.ne.s32.totalorder %s199, %s201
      %p208 = scmp.eq.s32.totalorder %s46, 1
      %p209 = por %p207, %p208
      %p210 = scmp.ne.s32.totalorder %s201, %s202
      %p211 = scmp.eq.s32.totalorder %s46, 0
      %p212 = por %p210, %p211
      %p213 = scmp.ne.s32.totalorder %s201, %s202
      %p214 = scmp.eq.s32.totalorder %s47, 1
      %p215 = por %p213, %p214
      %p217 = scmp.ne.s32.totalorder %s202, %s216
      %p218 = scmp.eq.s32.totalorder %s47, 0
      %p219 = por %p217, %p218
      %s221 = sadd.s32 %s220, 1
      %p224 = scmp.eq.s32.totalorder %s41, 1
      %p225 = scmp.ne.s32.totalorder %s220, %s222
      %p226 = scmp.eq.s32.totalorder %s41, 0
      %p227 = por %p225, %p226
      %p228 = scmp.ne.s32.totalorder %s220, %s222
      %p229 = scmp.eq.s32.totalorder %s46, 1
      %p230 = por %p228, %p229
      %p231 = scmp.ne.s32.totalorder %s222, %s223
      %p232 = scmp.eq.s32.totalorder %s46, 0
      %p233 = por %p231, %p232
      %p234 = scmp.ne.s32.totalorder %s222, %s223
      %p235 = scmp.eq.s32.totalorder %s47, 1
      %p236 = por %p234, %p235
      %p238 = scmp.ne.s32.totalorder %s223, %s237
      %p239 = scmp.eq.s32.totalorder %s47, 0
      %p240 = por %p238, %p239
      %s242 = sadd.s32 %s241, 1
      %p245 = scmp.eq.s32.totalorder %s41, 1
      %p246 = scmp.ne.s32.totalorder %s241, %s243
      %p247 = scmp.eq.s32.totalorder %s41, 0
      %p248 = por %p246, %p247
      %p249 = scmp.ne.s32.totalorder %s241, %s243
      %p250 = scmp.eq.s32.totalorder %s46, 1
      %p251 = por %p249, %p250
      %p252 = scmp.ne.s32.totalorder %s243, %s244
      %p253 = scmp.eq.s32.totalorder %s46, 0
      %p254 = por %p252, %p253
      %p255 = scmp.ne.s32.totalorder %s243, %s244
      %p256 = scmp.eq.s32.totalorder %s47, 1
      %p257 = por %p255, %p256
      %p259 = scmp.ne.s32.totalorder %s244, %s258
      %p260 = scmp.eq.s32.totalorder %s47, 0
      %p261 = por %p259, %p260
      %s263 = sadd.s32 %s262, 1
      %p266 = scmp.eq.s32.totalorder %s41, 1
      %p267 = scmp.ne.s32.totalorder %s262, %s264
      %p268 = scmp.eq.s32.totalorder %s41, 0
      %p269 = por %p267, %p268
      %p270 = scmp.ne.s32.totalorder %s262, %s264
      %p271 = scmp.eq.s32.totalorder %s46, 1
      %p272 = por %p270, %p271
      %p273 = scmp.ne.s32.totalorder %s264, %s265
      %p274 = scmp.eq.s32.totalorder %s46, 0
      %p275 = por %p273, %p274
      %p276 = scmp.ne.s32.totalorder %s264, %s265
      %p277 = scmp.eq.s32.totalorder %s47, 1
      %p278 = por %p276, %p277
      %p280 = scmp.ne.s32.totalorder %s265, %s279
      %p281 = scmp.eq.s32.totalorder %s47, 0
      %p282 = por %p280, %p281
      %s284 = sadd.s32 %s283, 1
      %p287 = scmp.eq.s32.totalorder %s41, 1
      %p288 = scmp.ne.s32.totalorder %s283, %s285
      %p289 = scmp.eq.s32.totalorder %s41, 0
      %p290 = por %p288, %p289
      %p291 = scmp.ne.s32.totalorder %s283, %s285
      %p292 = scmp.eq.s32.totalorder %s46, 1
      %p293 = por %p291, %p292
      %p294 = scmp.ne.s32.totalorder %s285, %s286
      %p295 = scmp.eq.s32.totalorder %s46, 0
      %p296 = por %p294, %p295
      %p297 = scmp.ne.s32.totalorder %s285, %s286
      %p298 = scmp.eq.s32.totalorder %s47, 1
      %p299 = por %p297, %p298
      %p301 = scmp.ne.s32.totalorder %s286, %s300
      %p302 = scmp.eq.s32.totalorder %s47, 0
      %p303 = por %p301, %p302
      %s305 = sadd.s32 %s304, 1
      %p308 = scmp.eq.s32.totalorder %s41, 1
      %p309 = scmp.ne.s32.totalorder %s304, %s306
      %p310 = scmp.eq.s32.totalorder %s41, 0
      %p311 = por %p309, %p310
      %p312 = scmp.ne.s32.totalorder %s304, %s306
      %p313 = scmp.eq.s32.totalorder %s46, 1
      %p314 = por %p312, %p313
      %p315 = scmp.ne.s32.totalorder %s306, %s307
      %p316 = scmp.eq.s32.totalorder %s46, 0
      %p317 = por %p315, %p316
      %p318 = scmp.ne.s32.totalorder %s306, %s307
      %p319 = scmp.eq.s32.totalorder %s47, 1
      %p320 = por %p318, %p319
      %p322 = scmp.ne.s32.totalorder %s307, %s321
      %p323 = scmp.eq.s32.totalorder %s47, 0
      %p324 = por %p322, %p323
      %s326 = sadd.s32 %s325, 1
      %p329 = scmp.eq.s32.totalorder %s41, 1
      %p330 = scmp.ne.s32.totalorder %s325, %s327
      %p331 = scmp.eq.s32.totalorder %s41, 0
      %p332 = por %p330, %p331
      %p333 = scmp.ne.s32.totalorder %s325, %s327
      %p334 = scmp.eq.s32.totalorder %s46, 1
      %p335 = por %p333, %p334
      %p336 = scmp.ne.s32.totalorder %s327, %s328
      %p337 = scmp.eq.s32.totalorder %s46, 0
      %p338 = por %p336, %p337
      %p339 = scmp.ne.s32.totalorder %s327, %s328
      %p340 = scmp.eq.s32.totalorder %s47, 1
      %p341 = por %p339, %p340
      %p343 = scmp.ne.s32.totalorder %s328, %s342
      %p344 = scmp.eq.s32.totalorder %s47, 0
      %p345 = por %p343, %p344
      %s347 = sadd.s32 %s346, 1
      %p350 = scmp.eq.s32.totalorder %s41, 1
      %p351 = scmp.ne.s32.totalorder %s346, %s348
      %p352 = scmp.eq.s32.totalorder %s41, 0
      %p353 = por %p351, %p352
      %p354 = scmp.ne.s32.totalorder %s346, %s348
      %p355 = scmp.eq.s32.totalorder %s46, 1
      %p356 = por %p354, %p355
      %p357 = scmp.ne.s32.totalorder %s348, %s349
      %p358 = scmp.eq.s32.totalorder %s46, 0
      %p359 = por %p357, %p358
      %p360 = scmp.ne.s32.totalorder %s348, %s349
      %p361 = scmp.eq.s32.totalorder %s47, 1
      %p362 = por %p360, %p361
      %p364 = scmp.ne.s32.totalorder %s349, %s363
      %p365 = scmp.eq.s32.totalorder %s47, 0
      %p366 = por %p364, %p365
      %s368 = sadd.s32 %s367, 1
      %p371 = scmp.eq.s32.totalorder %s41, 1
      %p372 = scmp.ne.s32.totalorder %s367, %s369
      %p373 = scmp.eq.s32.totalorder %s41, 0
      %p374 = por %p372, %p373
      %p375 = scmp.ne.s32.totalorder %s367, %s369
      %p376 = scmp.eq.s32.totalorder %s46, 1
      %p377 = por %p375, %p376
      %p378 = scmp.ne.s32.totalorder %s369, %s370
      %p379 = scmp.eq.s32.totalorder %s46, 0
      %p380 = por %p378, %p379
      %p381 = scmp.ne.s32.totalorder %s369, %s370
      %p382 = scmp.eq.s32.totalorder %s47, 1
      %p383 = por %p381, %p382
      %p385 = scmp.ne.s32.totalorder %s370, %s384
      %p386 = scmp.eq.s32.totalorder %s47, 0
      %p387 = por %p385, %p386
      %s389 = sadd.s32 %s388, 1
      %p392 = scmp.eq.s32.totalorder %s41, 1
      %p393 = scmp.ne.s32.totalorder %s388, %s390
      %p394 = scmp.eq.s32.totalorder %s41, 0
      %p395 = por %p393, %p394
      %p396 = scmp.ne.s32.totalorder %s388, %s390
      %p397 = scmp.eq.s32.totalorder %s46, 1
      %p398 = por %p396, %p397
      %p399 = scmp.ne.s32.totalorder %s390, %s391
      %p400 = scmp.eq.s32.totalorder %s46, 0
      %p401 = por %p399, %p400
      %p402 = scmp.ne.s32.totalorder %s390, %s391
      %p403 = scmp.eq.s32.totalorder %s47, 1
      %p404 = por %p402, %p403
      %p406 = scmp.ne.s32.totalorder %s391, %s405
      %p407 = scmp.eq.s32.totalorder %s47, 0
      %p408 = por %p406, %p407
      %s410 = sadd.s32 %s409, 1
      %p413 = scmp.eq.s32.totalorder %s41, 1
      %p414 = scmp.ne.s32.totalorder %s409, %s411
      %p415 = scmp.eq.s32.totalorder %s41, 0
      %p416 = por %p414, %p415
      %p417 = scmp.ne.s32.totalorder %s409, %s411
      %p418 = scmp.eq.s32.totalorder %s46, 1
      %p419 = por %p417, %p418
      %p420 = scmp.ne.s32.totalorder %s411, %s412
      %p421 = scmp.eq.s32.totalorder %s46, 0
      %p422 = por %p420, %p421
      %p423 = scmp.ne.s32.totalorder %s411, %s412
      %p424 = scmp.eq.s32.totalorder %s47, 1
      %p425 = por %p423, %p424
      %p427 = scmp.ne.s32.totalorder %s412, %s426
      %p428 = scmp.eq.s32.totalorder %s47, 0
      %p429 = por %p427, %p428
      %s431 = sadd.s32 %s430, 1
      %p434 = scmp.eq.s32.totalorder %s41, 1
      %p435 = scmp.ne.s32.totalorder %s430, %s432
      %p436 = scmp.eq.s32.totalorder %s41, 0
      %p437 = por %p435, %p436
      %p438 = scmp.ne.s32.totalorder %s430, %s432
      %p439 = scmp.eq.s32.totalorder %s46, 1
      %p440 = por %p438, %p439
      %p441 = scmp.ne.s32.totalorder %s432, %s433
      %p442 = scmp.eq.s32.totalorder %s46, 0
      %p443 = por %p441, %p442
      %p444 = scmp.ne.s32.totalorder %s432, %s433
      %p445 = scmp.eq.s32.totalorder %s47, 1
      %p446 = por %p444, %p445
      %p448 = scmp.ne.s32.totalorder %s433, %s447
      %p449 = scmp.eq.s32.totalorder %s47, 0
      %p450 = por %p448, %p449
      %s451 = ssub.s32 %s48, %s60
      %s452 = ssub.s32 %s49, %s56
      %s453 = sor.u32 %s451, %s452
      %p454 = scmp.eq.s32.totalorder %s453, 0
      %s456 = sadd.s32 %s455, 1
      %s457 = scalar_select %p454, %s455, %s456
      %p460 = pneg %p454
      %p461 = scmp.eq.s32.totalorder %s41, 1
      %p462 = por %p460, %p461
      %p463 = scmp.ne.s32.totalorder %s455, %s458
      %p464 = scmp.eq.s32.totalorder %s41, 0
      %p465 = por %p463, %p464
      %p466 = scmp.ne.s32.totalorder %s455, %s458
      %p467 = scmp.eq.s32.totalorder %s46, 1
      %p468 = por %p466, %p467
      %p469 = scmp.ne.s32.totalorder %s458, %s459
      %p470 = scmp.eq.s32.totalorder %s46, 0
      %p471 = por %p469, %p470
      %p472 = scmp.ne.s32.totalorder %s458, %s459
      %p473 = scmp.eq.s32.totalorder %s47, 1
      %p474 = por %p472, %p473
      %p476 = scmp.ne.s32.totalorder %s459, %s475
      %p477 = scmp.eq.s32.totalorder %s47, 0
      %p478 = por %p476, %p477
      %p479 = scmp.le.s32.totalorder 1, %s41
      %p480 = scmp.lt.s32.totalorder %s41, 3
      %p481 = pnand %p479, %p480
      %p482 = pneg %p481
      // Predicated region
      $region9: #{tpu_custom_call.1} parent=5 // pred_check
        _
      $region10: #{tpu_custom_call.1} parent=5 // pred_check_branch
        %484 = sbr.rel (%p481) target = $region12
      $region11: #{tpu_custom_call.1} parent=5 // pred_region
        %s485 = ssub.s32 %s41, 1
        // Predicated region
        $region13: #{tpu_custom_call.1} parent=11 // pred_check
          %p486 = pneg %p128
        $region14: #{tpu_custom_call.1} parent=11 // pred_check_branch
          %488 = sbr.rel (%p486) target = $region16
        $region15: #{tpu_custom_call.1} parent=11 // pred_region
          %s490 = ssub.s32 2048, 2048
          %491 = vsyncadd [#allocation8], %s490
          %s492 = sshll.u32 [#allocation9], 4
          %s493 = int_to_ptr.vmem [resolvable:$true] %s492
          %498 = dma.hbm_to_vmem [thread:$0]  %s2, 2048, %s493, [#allocation8], 128, 128, 8
        $region16: #{tpu_custom_call.1} parent=11 // pred_fallthru
          _
        // Predicated region
        $region17: #{tpu_custom_call.1} parent=11 // pred_check
          %p499 = pneg %p149
        $region18: #{tpu_custom_call.1} parent=11 // pred_check_branch
          %501 = sbr.rel (%p499) target = $region20
        $region19: #{tpu_custom_call.1} parent=11 // pred_region
          %s503 = ssub.s32 64, 64
          %504 = vsyncadd [#allocation11], %s503
          %s505 = sshll.u32 [#allocation10], 4
          %s506 = int_to_ptr.vmem [resolvable:$true] %s505
          %511 = dma.hbm_to_vmem [thread:$0]  %s3, 64, %s506, [#allocation11], 16, 16, 1
        $region20: #{tpu_custom_call.1} parent=11 // pred_fallthru
          _
        // Predicated region
        $region21: #{tpu_custom_call.1} parent=11 // pred_check
          %p512 = pneg %p170
        $region22: #{tpu_custom_call.1} parent=11 // pred_check_branch
          %514 = sbr.rel (%p512) target = $region24
        $region23: #{tpu_custom_call.1} parent=11 // pred_region
          %s516 = ssub.s32 2048, 2048
          %517 = vsyncadd [#allocation11], %s516
          %s518 = sshll.u32 [#allocation12], 4
          %s519 = int_to_ptr.vmem [resolvable:$true] %s518
          %524 = dma.hbm_to_vmem [thread:$0]  %s4, 2048, %s519, [#allocation11], 128, 128, 8
        $region24: #{tpu_custom_call.1} parent=11 // pred_fallthru
          _
        // Predicated region
        $region25: #{tpu_custom_call.1} parent=11 // pred_check
          %p525 = pneg %p191
        $region26: #{tpu_custom_call.1} parent=11 // pred_check_branch
          %527 = sbr.rel (%p525) target = $region28
        $region27: #{tpu_custom_call.1} parent=11 // pred_region
          %s529 = ssub.s32 64, 64
          %530 = vsyncadd [#allocation14], %s529
          %s531 = sshll.u32 [#allocation13], 4
          %s532 = int_to_ptr.vmem [resolvable:$true] %s531
          %537 = dma.hbm_to_vmem [thread:$0]  %s5, 64, %s532, [#allocation14], 16, 16, 1
        $region28: #{tpu_custom_call.1} parent=11 // pred_fallthru
          _
        // Predicated region
        $region29: #{tpu_custom_call.1} parent=11 // pred_check
          %p538 = pneg %p212
        $region30: #{tpu_custom_call.1} parent=11 // pred_check_branch
          %540 = sbr.rel (%p538) target = $region32
        $region31: #{tpu_custom_call.1} parent=11 // pred_region
          %s542 = ssub.s32 2048, 2048
          %543 = vsyncadd [#allocation14], %s542
          %s544 = sshll.u32 [#allocation15], 4
          %s545 = int_to_ptr.vmem [resolvable:$true] %s544
          %550 = dma.hbm_to_vmem [thread:$0]  %s6, 2048, %s545, [#allocation14], 128, 128, 8
        $region32: #{tpu_custom_call.1} parent=11 // pred_fallthru
          _
        // Predicated region
        $region33: #{tpu_custom_call.1} parent=11 // pred_check
          %p551 = pneg %p233
        $region34: #{tpu_custom_call.1} parent=11 // pred_check_branch
          %553 = sbr.rel (%p551) target = $region36
        $region35: #{tpu_custom_call.1} parent=11 // pred_region
          %s555 = ssub.s32 64, 64
          %556 = vsyncadd [#allocation17], %s555
          %s557 = sshll.u32 [#allocation16], 4
          %s558 = int_to_ptr.vmem [resolvable:$true] %s557
          %563 = dma.hbm_to_vmem [thread:$0]  %s7, 64, %s558, [#allocation17], 16, 16, 1
        $region36: #{tpu_custom_call.1} parent=11 // pred_fallthru
          _
        // Predicated region
        $region37: #{tpu_custom_call.1} parent=11 // pred_check
          %p564 = pneg %p254
        $region38: #{tpu_custom_call.1} parent=11 // pred_check_branch
          %566 = sbr.rel (%p564) target = $region40
        $region39: #{tpu_custom_call.1} parent=11 // pred_region
          %s568 = ssub.s32 512, 512
          %569 = vsyncadd [#allocation17], %s568
          %s570 = sshll.u32 [#allocation18], 4
          %s571 = int_to_ptr.vmem [resolvable:$true] %s570
          %576 = dma.hbm_to_vmem [thread:$0]  %s8, 512, %s571, [#allocation17], 128, 128, 8
        $region40: #{tpu_custom_call.1} parent=11 // pred_fallthru
          _
        // Predicated region
        $region41: #{tpu_custom_call.1} parent=11 // pred_check
          %p577 = pneg %p275
        $region42: #{tpu_custom_call.1} parent=11 // pred_check_branch
          %579 = sbr.rel (%p577) target = $region44
        $region43: #{tpu_custom_call.1} parent=11 // pred_region
          %s581 = ssub.s32 16, 16
          %582 = vsyncadd [#allocation20], %s581
          %s584 = sshll.u32 [#allocation19], 4
          %s585 = int_to_ptr.vmem [resolvable:$true] %s584
          %587 = dma.hbm_to_vmem [thread:$0]  %s9, 16, %s585, [#allocation20]
        $region44: #{tpu_custom_call.1} parent=11 // pred_fallthru
          _
        // Predicated region
        $region45: #{tpu_custom_call.1} parent=11 // pred_check
          %p588 = pneg %p296
        $region46: #{tpu_custom_call.1} parent=11 // pred_check_branch
          %590 = sbr.rel (%p588) target = $region48
        $region47: #{tpu_custom_call.1} parent=11 // pred_region
          %s592 = ssub.s32 16, 16
          %593 = vsyncadd [#allocation20], %s592
          %s595 = sshll.u32 [#allocation21], 4
          %s596 = int_to_ptr.vmem [resolvable:$true] %s595
          %598 = dma.hbm_to_vmem [thread:$0]  %s10, 16, %s596, [#allocation20]
        $region48: #{tpu_custom_call.1} parent=11 // pred_fallthru
          _
        // Predicated region
        $region49: #{tpu_custom_call.1} parent=11 // pred_check
          %p599 = pneg %p317
        $region50: #{tpu_custom_call.1} parent=11 // pred_check_branch
          %601 = sbr.rel (%p599) target = $region52
        $region51: #{tpu_custom_call.1} parent=11 // pred_region
          %s603 = ssub.s32 16, 16
          %604 = vsyncadd [#allocation23], %s603
          %s606 = sshll.u32 [#allocation22], 4
          %s607 = int_to_ptr.vmem [resolvable:$true] %s606
          %609 = dma.hbm_to_vmem [thread:$0]  %s11, 16, %s607, [#allocation23]
        $region52: #{tpu_custom_call.1} parent=11 // pred_fallthru
          _
        // Predicated region
        $region53: #{tpu_custom_call.1} parent=11 // pred_check
          %p610 = pneg %p338
        $region54: #{tpu_custom_call.1} parent=11 // pred_check_branch
          %612 = sbr.rel (%p610) target = $region56
        $region55: #{tpu_custom_call.1} parent=11 // pred_region
          %s614 = ssub.s32 512, 512
          %615 = vsyncadd [#allocation23], %s614
          %s616 = sshll.u32 [#allocation24], 4
          %s617 = int_to_ptr.vmem [resolvable:$true] %s616
          %622 = dma.hbm_to_vmem [thread:$0]  %s12, 512, %s617, [#allocation23], 128, 128, 8
        $region56: #{tpu_custom_call.1} parent=11 // pred_fallthru
          _
        // Predicated region
        $region57: #{tpu_custom_call.1} parent=11 // pred_check
          %p623 = pneg %p359
        $region58: #{tpu_custom_call.1} parent=11 // pred_check_branch
          %625 = sbr.rel (%p623) target = $region60
        $region59: #{tpu_custom_call.1} parent=11 // pred_region
          %s627 = ssub.s32 16, 16
          %628 = vsyncadd [#allocation26], %s627
          %s630 = sshll.u32 [#allocation25], 4
          %s631 = int_to_ptr.vmem [resolvable:$true] %s630
          %633 = dma.hbm_to_vmem [thread:$0]  %s13, 16, %s631, [#allocation26]
        $region60: #{tpu_custom_call.1} parent=11 // pred_fallthru
          _
        // Predicated region
        $region61: #{tpu_custom_call.1} parent=11 // pred_check
          %p634 = pneg %p380
        $region62: #{tpu_custom_call.1} parent=11 // pred_check_branch
          %636 = sbr.rel (%p634) target = $region64
        $region63: #{tpu_custom_call.1} parent=11 // pred_region
          %s638 = ssub.s32 1024, 1024
          %639 = vsyncadd [#allocation26], %s638
          %s640 = sshll.u32 [#allocation27], 4
          %s641 = int_to_ptr.vmem [resolvable:$true] %s640
          %646 = dma.hbm_to_vmem [thread:$0]  %s14, 1024, %s641, [#allocation26], 128, 128, 8
        $region64: #{tpu_custom_call.1} parent=11 // pred_fallthru
          _
        // Predicated region
        $region65: #{tpu_custom_call.1} parent=11 // pred_check
          %p647 = pneg %p401
        $region66: #{tpu_custom_call.1} parent=11 // pred_check_branch
          %649 = sbr.rel (%p647) target = $region68
        $region67: #{tpu_custom_call.1} parent=11 // pred_region
          %s651 = ssub.s32 16, 16
          %652 = vsyncadd [#allocation29], %s651
          %s654 = sshll.u32 [#allocation28], 4
          %s655 = int_to_ptr.vmem [resolvable:$true] %s654
          %657 = dma.hbm_to_vmem [thread:$0]  %s15, 16, %s655, [#allocation29]
        $region68: #{tpu_custom_call.1} parent=11 // pred_fallthru
          _
        // Predicated region
        $region69: #{tpu_custom_call.1} parent=11 // pred_check
          %p658 = pneg %p422
        $region70: #{tpu_custom_call.1} parent=11 // pred_check_branch
          %660 = sbr.rel (%p658) target = $region72
        $region71: #{tpu_custom_call.1} parent=11 // pred_region
          %s662 = ssub.s32 16, 16
          %663 = vsyncadd [#allocation29], %s662
          %s665 = sshll.u32 [#allocation30], 4
          %s666 = int_to_ptr.vmem [resolvable:$true] %s665
          %668 = dma.hbm_to_vmem [thread:$0]  %s16, 16, %s666, [#allocation29]
        $region72: #{tpu_custom_call.1} parent=11 // pred_fallthru
          _
        // Predicated region
        $region73: #{tpu_custom_call.1} parent=11 // pred_check
          %p669 = pneg %p443
        $region74: #{tpu_custom_call.1} parent=11 // pred_check_branch
          %671 = sbr.rel (%p669) target = $region76
        $region75: #{tpu_custom_call.1} parent=11 // pred_region
          %s673 = ssub.s32 16, 16
          %674 = vsyncadd [#allocation32], %s673
          %s676 = sshll.u32 [#allocation31], 4
          %s677 = int_to_ptr.vmem [resolvable:$true] %s676
          %679 = dma.hbm_to_vmem [thread:$0]  %s17, 16, %s677, [#allocation32]
        $region76: #{tpu_custom_call.1} parent=11 // pred_fallthru
          _
      $region12: #{tpu_custom_call.1} parent=5 // pred_fallthru
        _
      %p680 = scmp.lt.s32.totalorder %s41, 2
      // Predicated region
      $region77: #{tpu_custom_call.1} parent=5 // pred_check
        %p681 = pneg %p680
      $region78: #{tpu_custom_call.1} parent=5 // pred_check_branch
        %683 = sbr.rel (%p681) target = $region80
      $region79: #{tpu_custom_call.1} parent=5 // pred_region
        // Predicated region
        $region81: #{tpu_custom_call.1} parent=79 // pred_check
          %p684 = pneg %p75
        $region82: #{tpu_custom_call.1} parent=79 // pred_check_branch
          %686 = sbr.rel (%p684) target = $region84
        $region83: #{tpu_custom_call.1} parent=79 // pred_region
          %s687 = sand.u32 %s65, 1
          %s688 = scalar_lea.sflag [#allocation5], %s687
          %s689 = sand.u32 %s65, 1
          %s690 = smul.addr %s689, 8
          %s691 = scalar_lea.vmem [#allocation4], %s690
          %s693 = ssub.s32 128, 128
          %694 = vsyncadd %s688, %s693
          %s695 = sadd.s32 %s49, %s48
          %s696 = smul.addr %s695, 128
          %s697 = scalar_lea.hbm %s0, %s696
          %s699 = sshll.u32 %s691, 4
          %s700 = int_to_ptr.vmem [resolvable:$true] %s699
          %702 = dma.hbm_to_vmem [thread:$0]  %s697, 128, %s700, %s688
        $region84: #{tpu_custom_call.1} parent=79 // pred_fallthru
          _
        // Predicated region
        $region85: #{tpu_custom_call.1} parent=79 // pred_check
          %p703 = pneg %p101
        $region86: #{tpu_custom_call.1} parent=79 // pred_check_branch
          %705 = sbr.rel (%p703) target = $region88
        $region87: #{tpu_custom_call.1} parent=79 // pred_region
          %s706 = sand.u32 %s41, 1
          %s707 = scalar_lea.sflag [#allocation8], %s706
          %s708 = sand.u32 %s91, 1
          %s709 = smul.addr %s708, 8
          %s710 = scalar_lea.vmem [#allocation7], %s709
          %s712 = ssub.s32 128, 128
          %713 = vsyncadd %s707, %s712
          %s714 = smul.addr %s48, 128
          %s715 = scalar_lea.hbm %s1, %s714
          %s717 = sshll.u32 %s710, 4
          %s718 = int_to_ptr.vmem [resolvable:$true] %s717
          %720 = dma.hbm_to_vmem [thread:$0]  %s715, 128, %s718, %s707
        $region88: #{tpu_custom_call.1} parent=79 // pred_fallthru
          _
      $region80: #{tpu_custom_call.1} parent=5 // pred_fallthru
        _
      %p721 = scmp.le.s32.totalorder 1, %s41
      %p722 = scmp.lt.s32.totalorder %s41, 3
      %p723 = pnand %p721, %p722
      %p724 = pneg %p723
      // Predicated region
      $region89: #{tpu_custom_call.1} parent=5 // pred_check
        _
      $region90: #{tpu_custom_call.1} parent=5 // pred_check_branch
        %726 = sbr.rel (%p723) target = $region92
      $region91: #{tpu_custom_call.1} parent=5 // pred_region
        %s727 = ssub.s32 %s41, 1
        %s728 = sand.u32 %s68, 1
        %s729 = scalar_lea.sflag [#allocation5], %s728
        %s730 = sand.u32 %s68, 1
        %s731 = smul.addr %s730, 8
        %s732 = scalar_lea.vmem [#allocation4], %s731
        // Predicated region
        $region93: #{tpu_custom_call.1} parent=91 // pred_check
          %p733 = pneg %p81
        $region94: #{tpu_custom_call.1} parent=91 // pred_check_branch
          %735 = sbr.rel (%p733) target = $region96
        $region95: #{tpu_custom_call.1} parent=91 // pred_region
          %736 = dma.done %s729, 128
        $region96: #{tpu_custom_call.1} parent=91 // pred_fallthru
          _
        %s737 = sand.u32 %s46, 1
        %s738 = scalar_lea.sflag [#allocation8], %s737
        %s739 = sand.u32 %s94, 1
        %s740 = smul.addr %s739, 8
        %s741 = scalar_lea.vmem [#allocation7], %s740
        // Predicated region
        $region97: #{tpu_custom_call.1} parent=91 // pred_check
          %p742 = pneg %p107
        $region98: #{tpu_custom_call.1} parent=91 // pred_check_branch
          %744 = sbr.rel (%p742) target = $region100
        $region99: #{tpu_custom_call.1} parent=91 // pred_region
          %745 = dma.done %s738, 128
        $region100: #{tpu_custom_call.1} parent=91 // pred_fallthru
          _
        // Predicated region
        $region101: #{tpu_custom_call.1} parent=91 // pred_check
          %p746 = pneg %p128
        $region102: #{tpu_custom_call.1} parent=91 // pred_check_branch
          %748 = sbr.rel (%p746) target = $region104
        $region103: #{tpu_custom_call.1} parent=91 // pred_region
          %749 = dma.done [#allocation8], 2048
        $region104: #{tpu_custom_call.1} parent=91 // pred_fallthru
          _
        // Predicated region
        $region105: #{tpu_custom_call.1} parent=91 // pred_check
          %p750 = pneg %p149
        $region106: #{tpu_custom_call.1} parent=91 // pred_check_branch
          %752 = sbr.rel (%p750) target = $region108
        $region107: #{tpu_custom_call.1} parent=91 // pred_region
          %753 = dma.done [#allocation11], 64
        $region108: #{tpu_custom_call.1} parent=91 // pred_fallthru
          _
        // Predicated region
        $region109: #{tpu_custom_call.1} parent=91 // pred_check
          %p754 = pneg %p170
        $region110: #{tpu_custom_call.1} parent=91 // pred_check_branch
          %756 = sbr.rel (%p754) target = $region112
        $region111: #{tpu_custom_call.1} parent=91 // pred_region
          %757 = dma.done [#allocation11], 2048
        $region112: #{tpu_custom_call.1} parent=91 // pred_fallthru
          _
        // Predicated region
        $region113: #{tpu_custom_call.1} parent=91 // pred_check
          %p758 = pneg %p191
        $region114: #{tpu_custom_call.1} parent=91 // pred_check_branch
          %760 = sbr.rel (%p758) target = $region116
        $region115: #{tpu_custom_call.1} parent=91 // pred_region
          %761 = dma.done [#allocation14], 64
        $region116: #{tpu_custom_call.1} parent=91 // pred_fallthru
          _
        // Predicated region
        $region117: #{tpu_custom_call.1} parent=91 // pred_check
          %p762 = pneg %p212
        $region118: #{tpu_custom_call.1} parent=91 // pred_check_branch
          %764 = sbr.rel (%p762) target = $region120
        $region119: #{tpu_custom_call.1} parent=91 // pred_region
          %765 = dma.done [#allocation14], 2048
        $region120: #{tpu_custom_call.1} parent=91 // pred_fallthru
          _
        // Predicated region
        $region121: #{tpu_custom_call.1} parent=91 // pred_check
          %p766 = pneg %p233
        $region122: #{tpu_custom_call.1} parent=91 // pred_check_branch
          %768 = sbr.rel (%p766) target = $region124
        $region123: #{tpu_custom_call.1} parent=91 // pred_region
          %769 = dma.done [#allocation17], 64
        $region124: #{tpu_custom_call.1} parent=91 // pred_fallthru
          _
        // Predicated region
        $region125: #{tpu_custom_call.1} parent=91 // pred_check
          %p770 = pneg %p254
        $region126: #{tpu_custom_call.1} parent=91 // pred_check_branch
          %772 = sbr.rel (%p770) target = $region128
        $region127: #{tpu_custom_call.1} parent=91 // pred_region
          %773 = dma.done [#allocation17], 512
        $region128: #{tpu_custom_call.1} parent=91 // pred_fallthru
          _
        // Predicated region
        $region129: #{tpu_custom_call.1} parent=91 // pred_check
          %p774 = pneg %p275
        $region130: #{tpu_custom_call.1} parent=91 // pred_check_branch
          %776 = sbr.rel (%p774) target = $region132
        $region131: #{tpu_custom_call.1} parent=91 // pred_region
          %777 = dma.done [#allocation20], 16
        $region132: #{tpu_custom_call.1} parent=91 // pred_fallthru
          _
        // Predicated region
        $region133: #{tpu_custom_call.1} parent=91 // pred_check
          %p778 = pneg %p296
        $region134: #{tpu_custom_call.1} parent=91 // pred_check_branch
          %780 = sbr.rel (%p778) target = $region136
        $region135: #{tpu_custom_call.1} parent=91 // pred_region
          %781 = dma.done [#allocation20], 16
        $region136: #{tpu_custom_call.1} parent=91 // pred_fallthru
          _
        // Predicated region
        $region137: #{tpu_custom_call.1} parent=91 // pred_check
          %p782 = pneg %p317
        $region138: #{tpu_custom_call.1} parent=91 // pred_check_branch
          %784 = sbr.rel (%p782) target = $region140
        $region139: #{tpu_custom_call.1} parent=91 // pred_region
          %785 = dma.done [#allocation23], 16
        $region140: #{tpu_custom_call.1} parent=91 // pred_fallthru
          _
        // Predicated region
        $region141: #{tpu_custom_call.1} parent=91 // pred_check
          %p786 = pneg %p338
        $region142: #{tpu_custom_call.1} parent=91 // pred_check_branch
          %788 = sbr.rel (%p786) target = $region144
        $region143: #{tpu_custom_call.1} parent=91 // pred_region
          %789 = dma.done [#allocation23], 512
        $region144: #{tpu_custom_call.1} parent=91 // pred_fallthru
          _
        // Predicated region
        $region145: #{tpu_custom_call.1} parent=91 // pred_check
          %p790 = pneg %p359
        $region146: #{tpu_custom_call.1} parent=91 // pred_check_branch
          %792 = sbr.rel (%p790) target = $region148
        $region147: #{tpu_custom_call.1} parent=91 // pred_region
          %793 = dma.done [#allocation26], 16
        $region148: #{tpu_custom_call.1} parent=91 // pred_fallthru
          _
        // Predicated region
        $region149: #{tpu_custom_call.1} parent=91 // pred_check
          %p794 = pneg %p380
        $region150: #{tpu_custom_call.1} parent=91 // pred_check_branch
          %796 = sbr.rel (%p794) target = $region152
        $region151: #{tpu_custom_call.1} parent=91 // pred_region
          %797 = dma.done [#allocation26], 1024
        $region152: #{tpu_custom_call.1} parent=91 // pred_fallthru
          _
        // Predicated region
        $region153: #{tpu_custom_call.1} parent=91 // pred_check
          %p798 = pneg %p401
        $region154: #{tpu_custom_call.1} parent=91 // pred_check_branch
          %800 = sbr.rel (%p798) target = $region156
        $region155: #{tpu_custom_call.1} parent=91 // pred_region
          %801 = dma.done [#allocation29], 16
        $region156: #{tpu_custom_call.1} parent=91 // pred_fallthru
          _
        // Predicated region
        $region157: #{tpu_custom_call.1} parent=91 // pred_check
          %p802 = pneg %p422
        $region158: #{tpu_custom_call.1} parent=91 // pred_check_branch
          %804 = sbr.rel (%p802) target = $region160
        $region159: #{tpu_custom_call.1} parent=91 // pred_region
          %805 = dma.done [#allocation29], 16
        $region160: #{tpu_custom_call.1} parent=91 // pred_fallthru
          _
        // Predicated region
        $region161: #{tpu_custom_call.1} parent=91 // pred_check
          %p806 = pneg %p443
        $region162: #{tpu_custom_call.1} parent=91 // pred_check_branch
          %808 = sbr.rel (%p806) target = $region164
        $region163: #{tpu_custom_call.1} parent=91 // pred_region
          %809 = dma.done [#allocation32], 16
        $region164: #{tpu_custom_call.1} parent=91 // pred_fallthru
          _
        %s810 = sand.u32 %s68, 1
        %s811 = scalar_lea.sflag [#allocation5], %s810
        %s812 = sand.u32 %s68, 1
        %s813 = smul.addr %s812, 8
        %s814 = scalar_lea.vmem [#allocation4], %s813
        %p815 = pneg %p81
        %p816 = pneg %p78
        %s817 = sand.u32 %s46, 1
        %s818 = scalar_lea.sflag [#allocation8], %s817
        %s819 = sand.u32 %s94, 1
        %s820 = smul.addr %s819, 8
        %s821 = scalar_lea.vmem [#allocation7], %s820
        %p822 = pneg %p107
        %p823 = pneg %p104
        %p824 = pneg %p128
        %p825 = pneg %p125
        %p826 = pneg %p149
        %p827 = pneg %p146
        %p828 = pneg %p170
        %p829 = pneg %p167
        %p830 = pneg %p191
        %p831 = pneg %p188
        %p832 = pneg %p212
        %p833 = pneg %p209
        %p834 = pneg %p233
        %p835 = pneg %p230
        %p836 = pneg %p254
        %p837 = pneg %p251
        %p838 = pneg %p275
        %p839 = pneg %p272
        %p840 = pneg %p296
        %p841 = pneg %p293
        %p842 = pneg %p317
        %p843 = pneg %p314
        %p844 = pneg %p338
        %p845 = pneg %p335
        %p846 = pneg %p359
        %p847 = pneg %p356
        %p848 = pneg %p380
        %p849 = pneg %p377
        %p850 = pneg %p401
        %p851 = pneg %p398
        %p852 = pneg %p422
        %p853 = pneg %p419
        %p854 = pneg %p443
        %p855 = pneg %p440
        %p856 = pneg %p471
        %p857 = pneg %p468
        %s858 = sand.u32 %s458, 1
        %s859 = scalar_lea.sflag [#allocation6], %s858
        %s860 = sand.u32 %s458, 1
        %s861 = smul.addr %s860, 8
        %s862 = scalar_lea.vmem [#allocation33], %s861
        %v863 = vld [vmem:[%s732] sm:$0xff]
        %p864 = scmp.eq.s32.totalorder %s51, 0
        // Predicated region
        $region165: #{tpu_custom_call.1} parent=91 // pred_check
          %p865 = pneg %p864
        $region166: #{tpu_custom_call.1} parent=91 // pred_check_branch
          %867 = sbr.rel (%p865) target = $region168
        $region167: #{tpu_custom_call.1} parent=91 // pred_region
          %v868 = vld [vmem:[%s741] sm:$0xff]
          %v869 = vld [vmem:[#allocation12] sm:$0xff]
          %v870 = vld [vmem:[#allocation12 + $0x8] sm:$0xff]
          %v871 = vld [vmem:[#allocation12 + $0x10] sm:$0xff]
          %v872 = vld [vmem:[#allocation12 + $0x18] sm:$0xff]
          %v873 = vld [vmem:[#allocation13] sm:$0x1]
          %v875 = vlaneseq
          %v876 = vshrl.u32 %v875, 7
          %v877 = vsub.s32 0, %v876
          %v878 = vrot.slane %v873, %v877
          %vm880 = vcmask 261120
          %v882 = vsel %vm880, %v868, 0
          %884 = vmatprep.subr.mxu0 0.0
          %885 = vmatpush1.msra.mxu0 %v869
          %886 = vmatprep.subr.mxu0 0.0
          %887 = vmatpush1.msra.mxu0 %v870
          %888 = vmatprep.subr.mxu0 0.0
          %889 = vmatpush1.msra.mxu0 %v871
          %890 = vmatprep.subr.mxu0 0.0
          %891 = vmatpush1.msra.mxu0 %v872
          %892 = vmatprep.subr.mxu0 0.0
          %893 = vmatpush1.msra.mxu0 0.0
          %894 = vmatprep.subr.mxu0 0.0
          %895 = vmatpush1.msra.mxu0 0.0
          %896 = vmatprep.subr.mxu0 0.0
          %897 = vmatpush1.msra.mxu0 0.0
          %898 = vmatprep.subr.mxu0 0.0
          %899 = vmatpush1.msra.mxu0 0.0
          %900 = vmatprep.subr.mxu0 0.0
          %901 = vmatpush1.msra.mxu0 0.0
          %902 = vmatprep.subr.mxu0 0.0
          %903 = vmatpush1.msra.mxu0 0.0
          %904 = vmatprep.subr.mxu0 0.0
          %905 = vmatpush1.msra.mxu0 0.0
          %906 = vmatprep.subr.mxu0 0.0
          %907 = vmatpush1.msra.mxu0 0.0
          %908 = vmatprep.subr.mxu0 0.0
          %909 = vmatpush1.msra.mxu0 0.0
          %910 = vmatprep.subr.mxu0 0.0
          %911 = vmatpush1.msra.mxu0 0.0
          %912 = vmatprep.subr.mxu0 0.0
          %913 = vmatpush1.msra.mxu0 0.0
          %914 = vmatprep.subr.mxu0 0.0
          %915 = vmatpush1.msra.mxu0 0.0
          %916 = vmatprep.subr.mxu0 0.0
          %917 = vmatpush1.msra.mxu0 0.0
          %918 = vmatprep.subr.mxu0 0.0
          %919 = vmatpush1.msra.mxu0 0.0
          %920 = vmatprep.subr.mxu0 0.0
          %921 = vmatpush1.msra.mxu0 0.0
          %922 = vmatprep.subr.mxu0 0.0
          %923 = vmatpush1.msra.mxu0 0.0
          %924 = vmatprep.subr.mxu0 0.0
          %925 = vmatpush1.msra.mxu0 0.0
          %926 = vmatprep.subr.mxu0 0.0
          %927 = vmatpush1.msra.mxu0 0.0
          %928 = vmatprep.subr.mxu0 0.0
          %929 = vmatpush1.msra.mxu0 0.0
          %930 = vmatprep.subr.mxu0 0.0
          %931 = vmatpush1.msra.mxu0 0.0
          %932 = vmatprep.subr.mxu0 0.0
          %933 = vmatpush1.msra.mxu0 0.0
          %934 = vmatprep.subr.mxu0 0.0
          %935 = vmatpush1.msra.mxu0 0.0
          %936 = vmatprep.subr.mxu0 0.0
          %937 = vmatpush1.msra.mxu0 0.0
          %938 = vmatprep.subr.mxu0 0.0
          %939 = vmatpush1.msra.mxu0 0.0
          %940 = vmatprep.subr.mxu0 0.0
          %941 = vmatpush1.msra.mxu0 0.0
          %942 = vmatprep.subr.mxu0 0.0
          %943 = vmatpush1.msra.mxu0 0.0
          %944 = vmatprep.subr.mxu0 0.0
          %945 = vmatpush1.msra.mxu0 0.0
          %946 = vmatprep.subr.mxu0 0.0
          %947 = vmatpush1.msra.mxu0 0.0
          %948 = vmatprep.mubr.f32.mxu0 0.0
          %949 = vmatmul.mubr.f32.gmra.mrb[0].mxu0 %v882
          %v950 = vpop.f32.mrb[0].mxu0
          %v951 = vadd.f32 %v878, %v950
          %v952 = vpop.f32.mrb[0].mxu0
          %953 = vdwg.mxu0
          %vm954 = vcmask 64512
          %955 = vst.msk [vmem:[#allocation2] sm:$0xff] %vm954, %v951
          %v956 = vld [vmem:[#allocation15] sm:$0xff]
          %v957 = vld [vmem:[#allocation15 + $0x8] sm:$0xff]
          %v958 = vld [vmem:[#allocation15 + $0x10] sm:$0xff]
          %v959 = vld [vmem:[#allocation15 + $0x18] sm:$0xff]
          %v960 = vld [vmem:[#allocation16] sm:$0x1]
          %v962 = vlaneseq
          %v963 = vshrl.u32 %v962, 7
          %v964 = vsub.s32 0, %v963
          %v965 = vrot.slane %v960, %v964
          %967 = vmatprep.subr.mxu0 0.0
          %968 = vmatpush1.msra.mxu0 %v956
          %969 = vmatprep.subr.mxu0 0.0
          %970 = vmatpush1.msra.mxu0 %v957
          %971 = vmatprep.subr.mxu0 0.0
          %972 = vmatpush1.msra.mxu0 %v958
          %973 = vmatprep.subr.mxu0 0.0
          %974 = vmatpush1.msra.mxu0 %v959
          %975 = vmatprep.subr.mxu0 0.0
          %976 = vmatpush1.msra.mxu0 0.0
          %977 = vmatprep.subr.mxu0 0.0
          %978 = vmatpush1.msra.mxu0 0.0
          %979 = vmatprep.subr.mxu0 0.0
          %980 = vmatpush1.msra.mxu0 0.0
          %981 = vmatprep.subr.mxu0 0.0
          %982 = vmatpush1.msra.mxu0 0.0
          %983 = vmatprep.subr.mxu0 0.0
          %984 = vmatpush1.msra.mxu0 0.0
          %985 = vmatprep.subr.mxu0 0.0
          %986 = vmatpush1.msra.mxu0 0.0
          %987 = vmatprep.subr.mxu0 0.0
          %988 = vmatpush1.msra.mxu0 0.0
          %989 = vmatprep.subr.mxu0 0.0
          %990 = vmatpush1.msra.mxu0 0.0
          %991 = vmatprep.subr.mxu0 0.0
          %992 = vmatpush1.msra.mxu0 0.0
          %993 = vmatprep.subr.mxu0 0.0
          %994 = vmatpush1.msra.mxu0 0.0
          %995 = vmatprep.subr.mxu0 0.0
          %996 = vmatpush1.msra.mxu0 0.0
          %997 = vmatprep.subr.mxu0 0.0
          %998 = vmatpush1.msra.mxu0 0.0
          %999 = vmatprep.subr.mxu0 0.0
          %1000 = vmatpush1.msra.mxu0 0.0
          %1001 = vmatprep.subr.mxu0 0.0
          %1002 = vmatpush1.msra.mxu0 0.0
          %1003 = vmatprep.subr.mxu0 0.0
          %1004 = vmatpush1.msra.mxu0 0.0
          %1005 = vmatprep.subr.mxu0 0.0
          %1006 = vmatpush1.msra.mxu0 0.0
          %1007 = vmatprep.subr.mxu0 0.0
          %1008 = vmatpush1.msra.mxu0 0.0
          %1009 = vmatprep.subr.mxu0 0.0
          %1010 = vmatpush1.msra.mxu0 0.0
          %1011 = vmatprep.subr.mxu0 0.0
          %1012 = vmatpush1.msra.mxu0 0.0
          %1013 = vmatprep.subr.mxu0 0.0
          %1014 = vmatpush1.msra.mxu0 0.0
          %1015 = vmatprep.subr.mxu0 0.0
          %1016 = vmatpush1.msra.mxu0 0.0
          %1017 = vmatprep.subr.mxu0 0.0
          %1018 = vmatpush1.msra.mxu0 0.0
          %1019 = vmatprep.subr.mxu0 0.0
          %1020 = vmatpush1.msra.mxu0 0.0
          %1021 = vmatprep.subr.mxu0 0.0
          %1022 = vmatpush1.msra.mxu0 0.0
          %1023 = vmatprep.subr.mxu0 0.0
          %1024 = vmatpush1.msra.mxu0 0.0
          %1025 = vmatprep.subr.mxu0 0.0
          %1026 = vmatpush1.msra.mxu0 0.0
          %1027 = vmatprep.subr.mxu0 0.0
          %1028 = vmatpush1.msra.mxu0 0.0
          %1029 = vmatprep.subr.mxu0 0.0
          %1030 = vmatpush1.msra.mxu0 0.0
          %1031 = vmatprep.mubr.f32.mxu0 0.0
          %1032 = vmatmul.mubr.f32.gmra.mrb[0].mxu0 %v882
          %v1033 = vpop.f32.mrb[0].mxu0
          %v1034 = vadd.f32 %v965, %v1033
          %v1035 = vpop.f32.mrb[0].mxu0
          %1036 = vdwg.mxu0
          %1037 = vst.msk [vmem:[#allocation3] sm:$0xff] %vm954, %v1034
          %s1038 = scalar_lea.vmem [#allocation12], 32
          %v1039 = vld [vmem:[%s1038] sm:$0xff]
          %v1040 = vld [vmem:[%s1038 + $0x8] sm:$0xff]
          %v1041 = vld [vmem:[%s1038 + $0x10] sm:$0xff]
          %v1042 = vld [vmem:[%s1038 + $0x18] sm:$0xff]
          %s1043 = scalar_lea.vmem [#allocation13], 1
          %v1044 = vld [vmem:[%s1043] sm:$0x1]
          %v1046 = vlaneseq
          %v1047 = vshrl.u32 %v1046, 7
          %v1048 = vsub.s32 0, %v1047
          %v1049 = vrot.slane %v1044, %v1048
          %1051 = vmatprep.subr.mxu0 0.0
          %1052 = vmatpush1.msra.mxu0 %v1039
          %1053 = vmatprep.subr.mxu0 0.0
          %1054 = vmatpush1.msra.mxu0 %v1040
          %1055 = vmatprep.subr.mxu0 0.0
          %1056 = vmatpush1.msra.mxu0 %v1041
          %1057 = vmatprep.subr.mxu0 0.0
          %1058 = vmatpush1.msra.mxu0 %v1042
          %1059 = vmatprep.subr.mxu0 0.0
          %1060 = vmatpush1.msra.mxu0 0.0
          %1061 = vmatprep.subr.mxu0 0.0
          %1062 = vmatpush1.msra.mxu0 0.0
          %1063 = vmatprep.subr.mxu0 0.0
          %1064 = vmatpush1.msra.mxu0 0.0
          %1065 = vmatprep.subr.mxu0 0.0
          %1066 = vmatpush1.msra.mxu0 0.0
          %1067 = vmatprep.subr.mxu0 0.0
          %1068 = vmatpush1.msra.mxu0 0.0
          %1069 = vmatprep.subr.mxu0 0.0
          %1070 = vmatpush1.msra.mxu0 0.0
          %1071 = vmatprep.subr.mxu0 0.0
          %1072 = vmatpush1.msra.mxu0 0.0
          %1073 = vmatprep.subr.mxu0 0.0
          %1074 = vmatpush1.msra.mxu0 0.0
          %1075 = vmatprep.subr.mxu0 0.0
          %1076 = vmatpush1.msra.mxu0 0.0
          %1077 = vmatprep.subr.mxu0 0.0
          %1078 = vmatpush1.msra.mxu0 0.0
          %1079 = vmatprep.subr.mxu0 0.0
          %1080 = vmatpush1.msra.mxu0 0.0
          %1081 = vmatprep.subr.mxu0 0.0
          %1082 = vmatpush1.msra.mxu0 0.0
          %1083 = vmatprep.subr.mxu0 0.0
          %1084 = vmatpush1.msra.mxu0 0.0
          %1085 = vmatprep.subr.mxu0 0.0
          %1086 = vmatpush1.msra.mxu0 0.0
          %1087 = vmatprep.subr.mxu0 0.0
          %1088 = vmatpush1.msra.mxu0 0.0
          %1089 = vmatprep.subr.mxu0 0.0
          %1090 = vmatpush1.msra.mxu0 0.0
          %1091 = vmatprep.subr.mxu0 0.0
          %1092 = vmatpush1.msra.mxu0 0.0
          %1093 = vmatprep.subr.mxu0 0.0
          %1094 = vmatpush1.msra.mxu0 0.0
          %1095 = vmatprep.subr.mxu0 0.0
          %1096 = vmatpush1.msra.mxu0 0.0
          %1097 = vmatprep.subr.mxu0 0.0
          %1098 = vmatpush1.msra.mxu0 0.0
          %1099 = vmatprep.subr.mxu0 0.0
          %1100 = vmatpush1.msra.mxu0 0.0
          %1101 = vmatprep.subr.mxu0 0.0
          %1102 = vmatpush1.msra.mxu0 0.0
          %1103 = vmatprep.subr.mxu0 0.0
          %1104 = vmatpush1.msra.mxu0 0.0
          %1105 = vmatprep.subr.mxu0 0.0
          %1106 = vmatpush1.msra.mxu0 0.0
          %1107 = vmatprep.subr.mxu0 0.0
          %1108 = vmatpush1.msra.mxu0 0.0
          %1109 = vmatprep.subr.mxu0 0.0
          %1110 = vmatpush1.msra.mxu0 0.0
          %1111 = vmatprep.subr.mxu0 0.0
          %1112 = vmatpush1.msra.mxu0 0.0
          %1113 = vmatprep.subr.mxu0 0.0
          %1114 = vmatpush1.msra.mxu0 0.0
          %1115 = vmatprep.mubr.f32.mxu0 0.0
          %1116 = vmatmul.mubr.f32.gmra.mrb[0].mxu0 %v882
          %v1117 = vpop.f32.mrb[0].mxu0
          %v1118 = vadd.f32 %v1049, %v1117
          %v1119 = vpop.f32.mrb[0].mxu0
          %1120 = vdwg.mxu0
          %s1121 = scalar_lea.vmem [#allocation2], 8
          %1122 = vst.msk [vmem:[%s1121] sm:$0xff] %vm954, %v1118
          %s1123 = scalar_lea.vmem [#allocation15], 32
          %v1124 = vld [vmem:[%s1123] sm:$0xff]
          %v1125 = vld [vmem:[%s1123 + $0x8] sm:$0xff]
          %v1126 = vld [vmem:[%s1123 + $0x10] sm:$0xff]
          %v1127 = vld [vmem:[%s1123 + $0x18] sm:$0xff]
          %s1128 = scalar_lea.vmem [#allocation16], 1
          %v1129 = vld [vmem:[%s1128] sm:$0x1]
          %v1131 = vlaneseq
          %v1132 = vshrl.u32 %v1131, 7
          %v1133 = vsub.s32 0, %v1132
          %v1134 = vrot.slane %v1129, %v1133
          %1136 = vmatprep.subr.mxu0 0.0
          %1137 = vmatpush1.msra.mxu0 %v1124
          %1138 = vmatprep.subr.mxu0 0.0
          %1139 = vmatpush1.msra.mxu0 %v1125
          %1140 = vmatprep.subr.mxu0 0.0
          %1141 = vmatpush1.msra.mxu0 %v1126
          %1142 = vmatprep.subr.mxu0 0.0
          %1143 = vmatpush1.msra.mxu0 %v1127
          %1144 = vmatprep.subr.mxu0 0.0
          %1145 = vmatpush1.msra.mxu0 0.0
          %1146 = vmatprep.subr.mxu0 0.0
          %1147 = vmatpush1.msra.mxu0 0.0
          %1148 = vmatprep.subr.mxu0 0.0
          %1149 = vmatpush1.msra.mxu0 0.0
          %1150 = vmatprep.subr.mxu0 0.0
          %1151 = vmatpush1.msra.mxu0 0.0
          %1152 = vmatprep.subr.mxu0 0.0
          %1153 = vmatpush1.msra.mxu0 0.0
          %1154 = vmatprep.subr.mxu0 0.0
          %1155 = vmatpush1.msra.mxu0 0.0
          %1156 = vmatprep.subr.mxu0 0.0
          %1157 = vmatpush1.msra.mxu0 0.0
          %1158 = vmatprep.subr.mxu0 0.0
          %1159 = vmatpush1.msra.mxu0 0.0
          %1160 = vmatprep.subr.mxu0 0.0
          %1161 = vmatpush1.msra.mxu0 0.0
          %1162 = vmatprep.subr.mxu0 0.0
          %1163 = vmatpush1.msra.mxu0 0.0
          %1164 = vmatprep.subr.mxu0 0.0
          %1165 = vmatpush1.msra.mxu0 0.0
          %1166 = vmatprep.subr.mxu0 0.0
          %1167 = vmatpush1.msra.mxu0 0.0
          %1168 = vmatprep.subr.mxu0 0.0
          %1169 = vmatpush1.msra.mxu0 0.0
          %1170 = vmatprep.subr.mxu0 0.0
          %1171 = vmatpush1.msra.mxu0 0.0
          %1172 = vmatprep.subr.mxu0 0.0
          %1173 = vmatpush1.msra.mxu0 0.0
          %1174 = vmatprep.subr.mxu0 0.0
          %1175 = vmatpush1.msra.mxu0 0.0
          %1176 = vmatprep.subr.mxu0 0.0
          %1177 = vmatpush1.msra.mxu0 0.0
          %1178 = vmatprep.subr.mxu0 0.0
          %1179 = vmatpush1.msra.mxu0 0.0
          %1180 = vmatprep.subr.mxu0 0.0
          %1181 = vmatpush1.msra.mxu0 0.0
          %1182 = vmatprep.subr.mxu0 0.0
          %1183 = vmatpush1.msra.mxu0 0.0
          %1184 = vmatprep.subr.mxu0 0.0
          %1185 = vmatpush1.msra.mxu0 0.0
          %1186 = vmatprep.subr.mxu0 0.0
          %1187 = vmatpush1.msra.mxu0 0.0
          %1188 = vmatprep.subr.mxu0 0.0
          %1189 = vmatpush1.msra.mxu0 0.0
          %1190 = vmatprep.subr.mxu0 0.0
          %1191 = vmatpush1.msra.mxu0 0.0
          %1192 = vmatprep.subr.mxu0 0.0
          %1193 = vmatpush1.msra.mxu0 0.0
          %1194 = vmatprep.subr.mxu0 0.0
          %1195 = vmatpush1.msra.mxu0 0.0
          %1196 = vmatprep.subr.mxu0 0.0
          %1197 = vmatpush1.msra.mxu0 0.0
          %1198 = vmatprep.subr.mxu0 0.0
          %1199 = vmatpush1.msra.mxu0 0.0
          %1200 = vmatprep.mubr.f32.mxu0 0.0
          %1201 = vmatmul.mubr.f32.gmra.mrb[0].mxu0 %v882
          %v1202 = vpop.f32.mrb[0].mxu0
          %v1203 = vadd.f32 %v1134, %v1202
          %v1204 = vpop.f32.mrb[0].mxu0
          %1205 = vdwg.mxu0
          %s1206 = scalar_lea.vmem [#allocation3], 8
          %1207 = vst.msk [vmem:[%s1206] sm:$0xff] %vm954, %v1203
          %s1208 = scalar_lea.vmem [#allocation12], 64
          %v1209 = vld [vmem:[%s1208] sm:$0xff]
          %v1210 = vld [vmem:[%s1208 + $0x8] sm:$0xff]
          %v1211 = vld [vmem:[%s1208 + $0x10] sm:$0xff]
          %v1212 = vld [vmem:[%s1208 + $0x18] sm:$0xff]
          %s1213 = scalar_lea.vmem [#allocation13], 2
          %v1214 = vld [vmem:[%s1213] sm:$0x1]
          %v1216 = vlaneseq
          %v1217 = vshrl.u32 %v1216, 7
          %v1218 = vsub.s32 0, %v1217
          %v1219 = vrot.slane %v1214, %v1218
          %1221 = vmatprep.subr.mxu0 0.0
          %1222 = vmatpush1.msra.mxu0 %v1209
          %1223 = vmatprep.subr.mxu0 0.0
          %1224 = vmatpush1.msra.mxu0 %v1210
          %1225 = vmatprep.subr.mxu0 0.0
          %1226 = vmatpush1.msra.mxu0 %v1211
          %1227 = vmatprep.subr.mxu0 0.0
          %1228 = vmatpush1.msra.mxu0 %v1212
          %1229 = vmatprep.subr.mxu0 0.0
          %1230 = vmatpush1.msra.mxu0 0.0
          %1231 = vmatprep.subr.mxu0 0.0
          %1232 = vmatpush1.msra.mxu0 0.0
          %1233 = vmatprep.subr.mxu0 0.0
          %1234 = vmatpush1.msra.mxu0 0.0
          %1235 = vmatprep.subr.mxu0 0.0
          %1236 = vmatpush1.msra.mxu0 0.0
          %1237 = vmatprep.subr.mxu0 0.0
          %1238 = vmatpush1.msra.mxu0 0.0
          %1239 = vmatprep.subr.mxu0 0.0
          %1240 = vmatpush1.msra.mxu0 0.0
          %1241 = vmatprep.subr.mxu0 0.0
          %1242 = vmatpush1.msra.mxu0 0.0
          %1243 = vmatprep.subr.mxu0 0.0
          %1244 = vmatpush1.msra.mxu0 0.0
          %1245 = vmatprep.subr.mxu0 0.0
          %1246 = vmatpush1.msra.mxu0 0.0
          %1247 = vmatprep.subr.mxu0 0.0
          %1248 = vmatpush1.msra.mxu0 0.0
          %1249 = vmatprep.subr.mxu0 0.0
          %1250 = vmatpush1.msra.mxu0 0.0
          %1251 = vmatprep.subr.mxu0 0.0
          %1252 = vmatpush1.msra.mxu0 0.0
          %1253 = vmatprep.subr.mxu0 0.0
          %1254 = vmatpush1.msra.mxu0 0.0
          %1255 = vmatprep.subr.mxu0 0.0
          %1256 = vmatpush1.msra.mxu0 0.0
          %1257 = vmatprep.subr.mxu0 0.0
          %1258 = vmatpush1.msra.mxu0 0.0
          %1259 = vmatprep.subr.mxu0 0.0
          %1260 = vmatpush1.msra.mxu0 0.0
          %1261 = vmatprep.subr.mxu0 0.0
          %1262 = vmatpush1.msra.mxu0 0.0
          %1263 = vmatprep.subr.mxu0 0.0
          %1264 = vmatpush1.msra.mxu0 0.0
          %1265 = vmatprep.subr.mxu0 0.0
          %1266 = vmatpush1.msra.mxu0 0.0
          %1267 = vmatprep.subr.mxu0 0.0
          %1268 = vmatpush1.msra.mxu0 0.0
          %1269 = vmatprep.subr.mxu0 0.0
          %1270 = vmatpush1.msra.mxu0 0.0
          %1271 = vmatprep.subr.mxu0 0.0
          %1272 = vmatpush1.msra.mxu0 0.0
          %1273 = vmatprep.subr.mxu0 0.0
          %1274 = vmatpush1.msra.mxu0 0.0
          %1275 = vmatprep.subr.mxu0 0.0
          %1276 = vmatpush1.msra.mxu0 0.0
          %1277 = vmatprep.subr.mxu0 0.0
          %1278 = vmatpush1.msra.mxu0 0.0
          %1279 = vmatprep.subr.mxu0 0.0
          %1280 = vmatpush1.msra.mxu0 0.0
          %1281 = vmatprep.subr.mxu0 0.0
          %1282 = vmatpush1.msra.mxu0 0.0
          %1283 = vmatprep.subr.mxu0 0.0
          %1284 = vmatpush1.msra.mxu0 0.0
          %1285 = vmatprep.mubr.f32.mxu0 0.0
          %1286 = vmatmul.mubr.f32.gmra.mrb[0].mxu0 %v882
          %v1287 = vpop.f32.mrb[0].mxu0
          %v1288 = vadd.f32 %v1219, %v1287
          %v1289 = vpop.f32.mrb[0].mxu0
          %1290 = vdwg.mxu0
          %s1291 = scalar_lea.vmem [#allocation2], 16
          %1292 = vst.msk [vmem:[%s1291] sm:$0xff] %vm954, %v1288
          %s1293 = scalar_lea.vmem [#allocation15], 64
          %v1294 = vld [vmem:[%s1293] sm:$0xff]
          %v1295 = vld [vmem:[%s1293 + $0x8] sm:$0xff]
          %v1296 = vld [vmem:[%s1293 + $0x10] sm:$0xff]
          %v1297 = vld [vmem:[%s1293 + $0x18] sm:$0xff]
          %s1298 = scalar_lea.vmem [#allocation16], 2
          %v1299 = vld [vmem:[%s1298] sm:$0x1]
          %v1301 = vlaneseq
          %v1302 = vshrl.u32 %v1301, 7
          %v1303 = vsub.s32 0, %v1302
          %v1304 = vrot.slane %v1299, %v1303
          %1306 = vmatprep.subr.mxu0 0.0
          %1307 = vmatpush1.msra.mxu0 %v1294
          %1308 = vmatprep.subr.mxu0 0.0
          %1309 = vmatpush1.msra.mxu0 %v1295
          %1310 = vmatprep.subr.mxu0 0.0
          %1311 = vmatpush1.msra.mxu0 %v1296
          %1312 = vmatprep.subr.mxu0 0.0
          %1313 = vmatpush1.msra.mxu0 %v1297
          %1314 = vmatprep.subr.mxu0 0.0
          %1315 = vmatpush1.msra.mxu0 0.0
          %1316 = vmatprep.subr.mxu0 0.0
          %1317 = vmatpush1.msra.mxu0 0.0
          %1318 = vmatprep.subr.mxu0 0.0
          %1319 = vmatpush1.msra.mxu0 0.0
          %1320 = vmatprep.subr.mxu0 0.0
          %1321 = vmatpush1.msra.mxu0 0.0
          %1322 = vmatprep.subr.mxu0 0.0
          %1323 = vmatpush1.msra.mxu0 0.0
          %1324 = vmatprep.subr.mxu0 0.0
          %1325 = vmatpush1.msra.mxu0 0.0
          %1326 = vmatprep.subr.mxu0 0.0
          %1327 = vmatpush1.msra.mxu0 0.0
          %1328 = vmatprep.subr.mxu0 0.0
          %1329 = vmatpush1.msra.mxu0 0.0
          %1330 = vmatprep.subr.mxu0 0.0
          %1331 = vmatpush1.msra.mxu0 0.0
          %1332 = vmatprep.subr.mxu0 0.0
          %1333 = vmatpush1.msra.mxu0 0.0
          %1334 = vmatprep.subr.mxu0 0.0
          %1335 = vmatpush1.msra.mxu0 0.0
          %1336 = vmatprep.subr.mxu0 0.0
          %1337 = vmatpush1.msra.mxu0 0.0
          %1338 = vmatprep.subr.mxu0 0.0
          %1339 = vmatpush1.msra.mxu0 0.0
          %1340 = vmatprep.subr.mxu0 0.0
          %1341 = vmatpush1.msra.mxu0 0.0
          %1342 = vmatprep.subr.mxu0 0.0
          %1343 = vmatpush1.msra.mxu0 0.0
          %1344 = vmatprep.subr.mxu0 0.0
          %1345 = vmatpush1.msra.mxu0 0.0
          %1346 = vmatprep.subr.mxu0 0.0
          %1347 = vmatpush1.msra.mxu0 0.0
          %1348 = vmatprep.subr.mxu0 0.0
          %1349 = vmatpush1.msra.mxu0 0.0
          %1350 = vmatprep.subr.mxu0 0.0
          %1351 = vmatpush1.msra.mxu0 0.0
          %1352 = vmatprep.subr.mxu0 0.0
          %1353 = vmatpush1.msra.mxu0 0.0
          %1354 = vmatprep.subr.mxu0 0.0
          %1355 = vmatpush1.msra.mxu0 0.0
          %1356 = vmatprep.subr.mxu0 0.0
          %1357 = vmatpush1.msra.mxu0 0.0
          %1358 = vmatprep.subr.mxu0 0.0
          %1359 = vmatpush1.msra.mxu0 0.0
          %1360 = vmatprep.subr.mxu0 0.0
          %1361 = vmatpush1.msra.mxu0 0.0
          %1362 = vmatprep.subr.mxu0 0.0
          %1363 = vmatpush1.msra.mxu0 0.0
          %1364 = vmatprep.subr.mxu0 0.0
          %1365 = vmatpush1.msra.mxu0 0.0
          %1366 = vmatprep.subr.mxu0 0.0
          %1367 = vmatpush1.msra.mxu0 0.0
          %1368 = vmatprep.subr.mxu0 0.0
          %1369 = vmatpush1.msra.mxu0 0.0
          %1370 = vmatprep.mubr.f32.mxu0 0.0
          %1371 = vmatmul.mubr.f32.gmra.mrb[0].mxu0 %v882
          %v1372 = vpop.f32.mrb[0].mxu0
          %v1373 = vadd.f32 %v1304, %v1372
          %v1374 = vpop.f32.mrb[0].mxu0
          %1375 = vdwg.mxu0
          %s1376 = scalar_lea.vmem [#allocation3], 16
          %1377 = vst.msk [vmem:[%s1376] sm:$0xff] %vm954, %v1373
          %s1378 = scalar_lea.vmem [#allocation12], 96
          %v1379 = vld [vmem:[%s1378] sm:$0xff]
          %v1380 = vld [vmem:[%s1378 + $0x8] sm:$0xff]
          %v1381 = vld [vmem:[%s1378 + $0x10] sm:$0xff]
          %v1382 = vld [vmem:[%s1378 + $0x18] sm:$0xff]
          %s1383 = scalar_lea.vmem [#allocation13], 3
          %v1384 = vld [vmem:[%s1383] sm:$0x1]
          %v1386 = vlaneseq
          %v1387 = vshrl.u32 %v1386, 7
          %v1388 = vsub.s32 0, %v1387
          %v1389 = vrot.slane %v1384, %v1388
          %1391 = vmatprep.subr.mxu0 0.0
          %1392 = vmatpush1.msra.mxu0 %v1379
          %1393 = vmatprep.subr.mxu0 0.0
          %1394 = vmatpush1.msra.mxu0 %v1380
          %1395 = vmatprep.subr.mxu0 0.0
          %1396 = vmatpush1.msra.mxu0 %v1381
          %1397 = vmatprep.subr.mxu0 0.0
          %1398 = vmatpush1.msra.mxu0 %v1382
          %1399 = vmatprep.subr.mxu0 0.0
          %1400 = vmatpush1.msra.mxu0 0.0
          %1401 = vmatprep.subr.mxu0 0.0
          %1402 = vmatpush1.msra.mxu0 0.0
          %1403 = vmatprep.subr.mxu0 0.0
          %1404 = vmatpush1.msra.mxu0 0.0
          %1405 = vmatprep.subr.mxu0 0.0
          %1406 = vmatpush1.msra.mxu0 0.0
          %1407 = vmatprep.subr.mxu0 0.0
          %1408 = vmatpush1.msra.mxu0 0.0
          %1409 = vmatprep.subr.mxu0 0.0
          %1410 = vmatpush1.msra.mxu0 0.0
          %1411 = vmatprep.subr.mxu0 0.0
          %1412 = vmatpush1.msra.mxu0 0.0
          %1413 = vmatprep.subr.mxu0 0.0
          %1414 = vmatpush1.msra.mxu0 0.0
          %1415 = vmatprep.subr.mxu0 0.0
          %1416 = vmatpush1.msra.mxu0 0.0
          %1417 = vmatprep.subr.mxu0 0.0
          %1418 = vmatpush1.msra.mxu0 0.0
          %1419 = vmatprep.subr.mxu0 0.0
          %1420 = vmatpush1.msra.mxu0 0.0
          %1421 = vmatprep.subr.mxu0 0.0
          %1422 = vmatpush1.msra.mxu0 0.0
          %1423 = vmatprep.subr.mxu0 0.0
          %1424 = vmatpush1.msra.mxu0 0.0
          %1425 = vmatprep.subr.mxu0 0.0
          %1426 = vmatpush1.msra.mxu0 0.0
          %1427 = vmatprep.subr.mxu0 0.0
          %1428 = vmatpush1.msra.mxu0 0.0
          %1429 = vmatprep.subr.mxu0 0.0
          %1430 = vmatpush1.msra.mxu0 0.0
          %1431 = vmatprep.subr.mxu0 0.0
          %1432 = vmatpush1.msra.mxu0 0.0
          %1433 = vmatprep.subr.mxu0 0.0
          %1434 = vmatpush1.msra.mxu0 0.0
          %1435 = vmatprep.subr.mxu0 0.0
          %1436 = vmatpush1.msra.mxu0 0.0
          %1437 = vmatprep.subr.mxu0 0.0
          %1438 = vmatpush1.msra.mxu0 0.0
          %1439 = vmatprep.subr.mxu0 0.0
          %1440 = vmatpush1.msra.mxu0 0.0
          %1441 = vmatprep.subr.mxu0 0.0
          %1442 = vmatpush1.msra.mxu0 0.0
          %1443 = vmatprep.subr.mxu0 0.0
          %1444 = vmatpush1.msra.mxu0 0.0
          %1445 = vmatprep.subr.mxu0 0.0
          %1446 = vmatpush1.msra.mxu0 0.0
          %1447 = vmatprep.subr.mxu0 0.0
          %1448 = vmatpush1.msra.mxu0 0.0
          %1449 = vmatprep.subr.mxu0 0.0
          %1450 = vmatpush1.msra.mxu0 0.0
          %1451 = vmatprep.subr.mxu0 0.0
          %1452 = vmatpush1.msra.mxu0 0.0
          %1453 = vmatprep.subr.mxu0 0.0
          %1454 = vmatpush1.msra.mxu0 0.0
          %1455 = vmatprep.mubr.f32.mxu0 0.0
          %1456 = vmatmul.mubr.f32.gmra.mrb[0].mxu0 %v882
          %v1457 = vpop.f32.mrb[0].mxu0
          %v1458 = vadd.f32 %v1389, %v1457
          %v1459 = vpop.f32.mrb[0].mxu0
          %1460 = vdwg.mxu0
          %s1461 = scalar_lea.vmem [#allocation2], 24
          %1462 = vst.msk [vmem:[%s1461] sm:$0xff] %vm954, %v1458
          %s1463 = scalar_lea.vmem [#allocation15], 96
          %v1464 = vld [vmem:[%s1463] sm:$0xff]
          %v1465 = vld [vmem:[%s1463 + $0x8] sm:$0xff]
          %v1466 = vld [vmem:[%s1463 + $0x10] sm:$0xff]
          %v1467 = vld [vmem:[%s1463 + $0x18] sm:$0xff]
          %s1468 = scalar_lea.vmem [#allocation16], 3
          %v1469 = vld [vmem:[%s1468] sm:$0x1]
          %v1471 = vlaneseq
          %v1472 = vshrl.u32 %v1471, 7
          %v1473 = vsub.s32 0, %v1472
          %v1474 = vrot.slane %v1469, %v1473
          %1476 = vmatprep.subr.mxu0 0.0
          %1477 = vmatpush1.msra.mxu0 %v1464
          %1478 = vmatprep.subr.mxu0 0.0
          %1479 = vmatpush1.msra.mxu0 %v1465
          %1480 = vmatprep.subr.mxu0 0.0
          %1481 = vmatpush1.msra.mxu0 %v1466
          %1482 = vmatprep.subr.mxu0 0.0
          %1483 = vmatpush1.msra.mxu0 %v1467
          %1484 = vmatprep.subr.mxu0 0.0
          %1485 = vmatpush1.msra.mxu0 0.0
          %1486 = vmatprep.subr.mxu0 0.0
          %1487 = vmatpush1.msra.mxu0 0.0
          %1488 = vmatprep.subr.mxu0 0.0
          %1489 = vmatpush1.msra.mxu0 0.0
          %1490 = vmatprep.subr.mxu0 0.0
          %1491 = vmatpush1.msra.mxu0 0.0
          %1492 = vmatprep.subr.mxu0 0.0
          %1493 = vmatpush1.msra.mxu0 0.0
          %1494 = vmatprep.subr.mxu0 0.0
          %1495 = vmatpush1.msra.mxu0 0.0
          %1496 = vmatprep.subr.mxu0 0.0
          %1497 = vmatpush1.msra.mxu0 0.0
          %1498 = vmatprep.subr.mxu0 0.0
          %1499 = vmatpush1.msra.mxu0 0.0
          %1500 = vmatprep.subr.mxu0 0.0
          %1501 = vmatpush1.msra.mxu0 0.0
          %1502 = vmatprep.subr.mxu0 0.0
          %1503 = vmatpush1.msra.mxu0 0.0
          %1504 = vmatprep.subr.mxu0 0.0
          %1505 = vmatpush1.msra.mxu0 0.0
          %1506 = vmatprep.subr.mxu0 0.0
          %1507 = vmatpush1.msra.mxu0 0.0
          %1508 = vmatprep.subr.mxu0 0.0
          %1509 = vmatpush1.msra.mxu0 0.0
          %1510 = vmatprep.subr.mxu0 0.0
          %1511 = vmatpush1.msra.mxu0 0.0
          %1512 = vmatprep.subr.mxu0 0.0
          %1513 = vmatpush1.msra.mxu0 0.0
          %1514 = vmatprep.subr.mxu0 0.0
          %1515 = vmatpush1.msra.mxu0 0.0
          %1516 = vmatprep.subr.mxu0 0.0
          %1517 = vmatpush1.msra.mxu0 0.0
          %1518 = vmatprep.subr.mxu0 0.0
          %1519 = vmatpush1.msra.mxu0 0.0
          %1520 = vmatprep.subr.mxu0 0.0
          %1521 = vmatpush1.msra.mxu0 0.0
          %1522 = vmatprep.subr.mxu0 0.0
          %1523 = vmatpush1.msra.mxu0 0.0
          %1524 = vmatprep.subr.mxu0 0.0
          %1525 = vmatpush1.msra.mxu0 0.0
          %1526 = vmatprep.subr.mxu0 0.0
          %1527 = vmatpush1.msra.mxu0 0.0
          %1528 = vmatprep.subr.mxu0 0.0
          %1529 = vmatpush1.msra.mxu0 0.0
          %1530 = vmatprep.subr.mxu0 0.0
          %1531 = vmatpush1.msra.mxu0 0.0
          %1532 = vmatprep.subr.mxu0 0.0
          %1533 = vmatpush1.msra.mxu0 0.0
          %1534 = vmatprep.subr.mxu0 0.0
          %1535 = vmatpush1.msra.mxu0 0.0
          %1536 = vmatprep.subr.mxu0 0.0
          %1537 = vmatpush1.msra.mxu0 0.0
          %1538 = vmatprep.subr.mxu0 0.0
          %1539 = vmatpush1.msra.mxu0 0.0
          %1540 = vmatprep.mubr.f32.mxu0 0.0
          %1541 = vmatmul.mubr.f32.gmra.mrb[0].mxu0 %v882
          %v1542 = vpop.f32.mrb[0].mxu0
          %v1543 = vadd.f32 %v1474, %v1542
          %v1544 = vpop.f32.mrb[0].mxu0
          %1545 = vdwg.mxu0
          %s1546 = scalar_lea.vmem [#allocation3], 24
          %1547 = vst.msk [vmem:[%s1546] sm:$0xff] %vm954, %v1543
        $region168: #{tpu_custom_call.1} parent=91 // pred_fallthru
          _
        %v1548 = vld [vmem:[#allocation9] sm:$0xff]
        %v1549 = vld [vmem:[#allocation9 + $0x8] sm:$0xff]
        %v1550 = vld [vmem:[#allocation9 + $0x10] sm:$0xff]
        %v1551 = vld [vmem:[#allocation9 + $0x18] sm:$0xff]
        %v1552 = vld [vmem:[#allocation10] sm:$0x1]
        %v1554 = vlaneseq
        %v1555 = vshrl.u32 %v1554, 7
        %v1556 = vsub.s32 0, %v1555
        %v1557 = vrot.slane %v1552, %v1556
        %vm1559 = vcmask 261120
        %v1561 = vsel %vm1559, %v863, 0
        %1563 = vmatprep.subr.mxu0 0.0
        %1564 = vmatpush1.msra.mxu0 %v1548
        %1565 = vmatprep.subr.mxu0 0.0
        %1566 = vmatpush1.msra.mxu0 %v1549
        %1567 = vmatprep.subr.mxu0 0.0
        %1568 = vmatpush1.msra.mxu0 %v1550
        %1569 = vmatprep.subr.mxu0 0.0
        %1570 = vmatpush1.msra.mxu0 %v1551
        %1571 = vmatprep.subr.mxu0 0.0
        %1572 = vmatpush1.msra.mxu0 0.0
        %1573 = vmatprep.subr.mxu0 0.0
        %1574 = vmatpush1.msra.mxu0 0.0
        %1575 = vmatprep.subr.mxu0 0.0
        %1576 = vmatpush1.msra.mxu0 0.0
        %1577 = vmatprep.subr.mxu0 0.0
        %1578 = vmatpush1.msra.mxu0 0.0
        %1579 = vmatprep.subr.mxu0 0.0
        %1580 = vmatpush1.msra.mxu0 0.0
        %1581 = vmatprep.subr.mxu0 0.0
        %1582 = vmatpush1.msra.mxu0 0.0
        %1583 = vmatprep.subr.mxu0 0.0
        %1584 = vmatpush1.msra.mxu0 0.0
        %1585 = vmatprep.subr.mxu0 0.0
        %1586 = vmatpush1.msra.mxu0 0.0
        %1587 = vmatprep.subr.mxu0 0.0
        %1588 = vmatpush1.msra.mxu0 0.0
        %1589 = vmatprep.subr.mxu0 0.0
        %1590 = vmatpush1.msra.mxu0 0.0
        %1591 = vmatprep.subr.mxu0 0.0
        %1592 = vmatpush1.msra.mxu0 0.0
        %1593 = vmatprep.subr.mxu0 0.0
        %1594 = vmatpush1.msra.mxu0 0.0
        %1595 = vmatprep.subr.mxu0 0.0
        %1596 = vmatpush1.msra.mxu0 0.0
        %1597 = vmatprep.subr.mxu0 0.0
        %1598 = vmatpush1.msra.mxu0 0.0
        %1599 = vmatprep.subr.mxu0 0.0
        %1600 = vmatpush1.msra.mxu0 0.0
        %1601 = vmatprep.subr.mxu0 0.0
        %1602 = vmatpush1.msra.mxu0 0.0
        %1603 = vmatprep.subr.mxu0 0.0
        %1604 = vmatpush1.msra.mxu0 0.0
        %1605 = vmatprep.subr.mxu0 0.0
        %1606 = vmatpush1.msra.mxu0 0.0
        %1607 = vmatprep.subr.mxu0 0.0
        %1608 = vmatpush1.msra.mxu0 0.0
        %1609 = vmatprep.subr.mxu0 0.0
        %1610 = vmatpush1.msra.mxu0 0.0
        %1611 = vmatprep.subr.mxu0 0.0
        %1612 = vmatpush1.msra.mxu0 0.0
        %1613 = vmatprep.subr.mxu0 0.0
        %1614 = vmatpush1.msra.mxu0 0.0
        %1615 = vmatprep.subr.mxu0 0.0
        %1616 = vmatpush1.msra.mxu0 0.0
        %1617 = vmatprep.subr.mxu0 0.0
        %1618 = vmatpush1.msra.mxu0 0.0
        %1619 = vmatprep.subr.mxu0 0.0
        %1620 = vmatpush1.msra.mxu0 0.0
        %1621 = vmatprep.subr.mxu0 0.0
        %1622 = vmatpush1.msra.mxu0 0.0
        %1623 = vmatprep.subr.mxu0 0.0
        %1624 = vmatpush1.msra.mxu0 0.0
        %1625 = vmatprep.subr.mxu0 0.0
        %1626 = vmatpush1.msra.mxu0 0.0
        %1627 = vmatprep.mubr.f32.mxu0 0.0
        %1628 = vmatmul.mubr.f32.gmra.mrb[0].mxu0 %v1561
        %v1629 = vpop.f32.mrb[0].mxu0
        %v1630 = vadd.f32 %v1557, %v1629
        %v1631 = vpop.f32.mrb[0].mxu0
        %1632 = vdwg.mxu0
        %v1633 = vld [vmem:[#allocation2] sm:$0xff]
        %v1634 = vld [vmem:[#allocation3] sm:$0xff]
        %vm1635 = vcmask 64512
        %v1637 = vsel %vm1635, %v1630, 0
        %v1640 = vsel %vm1635, %v1633, 0
        %1642 = vmatprep.subr.mxu0 0.0
        %1643 = vmatpush1.xpose.msra.mxu0 %v1640
        %1644 = vmatprep.subr.mxu0 0.0
        %1645 = vmatpush1.xpose.msra.mxu0 0.0
        %1646 = vmatprep.subr.mxu0 0.0
        %1647 = vmatpush1.xpose.msra.mxu0 0.0
        %1648 = vmatprep.subr.mxu0 0.0
        %1649 = vmatpush1.xpose.msra.mxu0 0.0
        %1650 = vmatprep.subr.mxu0 0.0
        %1651 = vmatpush1.xpose.msra.mxu0 0.0
        %1652 = vmatprep.subr.mxu0 0.0
        %1653 = vmatpush1.xpose.msra.mxu0 0.0
        %1654 = vmatprep.subr.mxu0 0.0
        %1655 = vmatpush1.xpose.msra.mxu0 0.0
        %1656 = vmatprep.subr.mxu0 0.0
        %1657 = vmatpush1.xpose.msra.mxu0 0.0
        %1658 = vmatprep.subr.mxu0 0.0
        %1659 = vmatpush1.xpose.msra.mxu0 0.0
        %1660 = vmatprep.subr.mxu0 0.0
        %1661 = vmatpush1.xpose.msra.mxu0 0.0
        %1662 = vmatprep.subr.mxu0 0.0
        %1663 = vmatpush1.xpose.msra.mxu0 0.0
        %1664 = vmatprep.subr.mxu0 0.0
        %1665 = vmatpush1.xpose.msra.mxu0 0.0
        %1666 = vmatprep.subr.mxu0 0.0
        %1667 = vmatpush1.xpose.msra.mxu0 0.0
        %1668 = vmatprep.subr.mxu0 0.0
        %1669 = vmatpush1.xpose.msra.mxu0 0.0
        %1670 = vmatprep.subr.mxu0 0.0
        %1671 = vmatpush1.xpose.msra.mxu0 0.0
        %1672 = vmatprep.subr.mxu0 0.0
        %1673 = vmatpush1.xpose.msra.mxu0 0.0
        %1674 = vmatprep.subr.mxu0 0.0
        %1675 = vmatpush1.xpose.msra.mxu0 0.0
        %1676 = vmatprep.subr.mxu0 0.0
        %1677 = vmatpush1.xpose.msra.mxu0 0.0
        %1678 = vmatprep.subr.mxu0 0.0
        %1679 = vmatpush1.xpose.msra.mxu0 0.0
        %1680 = vmatprep.subr.mxu0 0.0
        %1681 = vmatpush1.xpose.msra.mxu0 0.0
        %1682 = vmatprep.subr.mxu0 0.0
        %1683 = vmatpush1.xpose.msra.mxu0 0.0
        %1684 = vmatprep.subr.mxu0 0.0
        %1685 = vmatpush1.xpose.msra.mxu0 0.0
        %1686 = vmatprep.subr.mxu0 0.0
        %1687 = vmatpush1.xpose.msra.mxu0 0.0
        %1688 = vmatprep.subr.mxu0 0.0
        %1689 = vmatpush1.xpose.msra.mxu0 0.0
        %1690 = vmatprep.subr.mxu0 0.0
        %1691 = vmatpush1.xpose.msra.mxu0 0.0
        %1692 = vmatprep.subr.mxu0 0.0
        %1693 = vmatpush1.xpose.msra.mxu0 0.0
        %1694 = vmatprep.subr.mxu0 0.0
        %1695 = vmatpush1.xpose.msra.mxu0 0.0
        %1696 = vmatprep.subr.mxu0 0.0
        %1697 = vmatpush1.xpose.msra.mxu0 0.0
        %1698 = vmatprep.subr.mxu0 0.0
        %1699 = vmatpush1.xpose.msra.mxu0 0.0
        %1700 = vmatprep.subr.mxu0 0.0
        %1701 = vmatpush1.xpose.msra.mxu0 0.0
        %1702 = vmatprep.subr.mxu0 0.0
        %1703 = vmatpush1.xpose.msra.mxu0 0.0
        %1704 = vmatprep.subr.mxu0 0.0
        %1705 = vmatpush1.xpose.msra.mxu0 0.0
        %1706 = vmatprep.mubr.f32.mxu0 0.0
        %1707 = vmatmul.mubr.f32.gmra.mrb[0].mxu0 %v1637
        %v1708 = vpop.f32.mrb[0].mxu0
        %v1709 = vadd.f32 0.0, %v1708
        %v1710 = vpop.f32.mrb[0].mxu0
        %1711 = vdwg.mxu0
        %v1712 = vsel %vm1635, %v1709, -inf
        %1713 = vmax.xlane.f32.xlu0 %v1712
        %v1714 = vpop.xlane.xlu0 %1713
        %v1715 = vsub.f32 %v1709, %v1714
        %v1716 = vmul.f32 %v1715, 1.442695
        %v1717 = vpow.pop %v1716
        %v1718 = vsel %vm1635, %v1717, 0.0
        %1719 = vadd.xlane.f32.xlu0 %v1718
        %v1720 = vpop.xlane.xlu0 %1719
        %v1721 = vrcp.pop %v1720
        %v1722 = vmul.f32 %v1717, %v1721
        %v1724 = vsel %vm1635, %v1722, 0
        %1726 = vmatprep.subr.mxu0 0.0
        %1727 = vmatpush1.msra.mxu0 %v1634
        %1728 = vmatprep.subr.mxu0 0.0
        %1729 = vmatpush1.msra.mxu0 0.0
        %1730 = vmatprep.subr.mxu0 0.0
        %1731 = vmatpush1.msra.mxu0 0.0
        %1732 = vmatprep.subr.mxu0 0.0
        %1733 = vmatpush1.msra.mxu0 0.0
        %1734 = vmatprep.subr.mxu0 0.0
        %1735 = vmatpush1.msra.mxu0 0.0
        %1736 = vmatprep.subr.mxu0 0.0
        %1737 = vmatpush1.msra.mxu0 0.0
        %1738 = vmatprep.subr.mxu0 0.0
        %1739 = vmatpush1.msra.mxu0 0.0
        %1740 = vmatprep.subr.mxu0 0.0
        %1741 = vmatpush1.msra.mxu0 0.0
        %1742 = vmatprep.subr.mxu0 0.0
        %1743 = vmatpush1.msra.mxu0 0.0
        %1744 = vmatprep.subr.mxu0 0.0
        %1745 = vmatpush1.msra.mxu0 0.0
        %1746 = vmatprep.subr.mxu0 0.0
        %1747 = vmatpush1.msra.mxu0 0.0
        %1748 = vmatprep.subr.mxu0 0.0
        %1749 = vmatpush1.msra.mxu0 0.0
        %1750 = vmatprep.subr.mxu0 0.0
        %1751 = vmatpush1.msra.mxu0 0.0
        %1752 = vmatprep.subr.mxu0 0.0
        %1753 = vmatpush1.msra.mxu0 0.0
        %1754 = vmatprep.subr.mxu0 0.0
        %1755 = vmatpush1.msra.mxu0 0.0
        %1756 = vmatprep.subr.mxu0 0.0
        %1757 = vmatpush1.msra.mxu0 0.0
        %1758 = vmatprep.subr.mxu0 0.0
        %1759 = vmatpush1.msra.mxu0 0.0
        %1760 = vmatprep.subr.mxu0 0.0
        %1761 = vmatpush1.msra.mxu0 0.0
        %1762 = vmatprep.subr.mxu0 0.0
        %1763 = vmatpush1.msra.mxu0 0.0
        %1764 = vmatprep.subr.mxu0 0.0
        %1765 = vmatpush1.msra.mxu0 0.0
        %1766 = vmatprep.subr.mxu0 0.0
        %1767 = vmatpush1.msra.mxu0 0.0
        %1768 = vmatprep.subr.mxu0 0.0
        %1769 = vmatpush1.msra.mxu0 0.0
        %1770 = vmatprep.subr.mxu0 0.0
        %1771 = vmatpush1.msra.mxu0 0.0
        %1772 = vmatprep.subr.mxu0 0.0
        %1773 = vmatpush1.msra.mxu0 0.0
        %1774 = vmatprep.subr.mxu0 0.0
        %1775 = vmatpush1.msra.mxu0 0.0
        %1776 = vmatprep.subr.mxu0 0.0
        %1777 = vmatpush1.msra.mxu0 0.0
        %1778 = vmatprep.subr.mxu0 0.0
        %1779 = vmatpush1.msra.mxu0 0.0
        %1780 = vmatprep.subr.mxu0 0.0
        %1781 = vmatpush1.msra.mxu0 0.0
        %1782 = vmatprep.subr.mxu0 0.0
        %1783 = vmatpush1.msra.mxu0 0.0
        %1784 = vmatprep.subr.mxu0 0.0
        %1785 = vmatpush1.msra.mxu0 0.0
        %1786 = vmatprep.subr.mxu0 0.0
        %1787 = vmatpush1.msra.mxu0 0.0
        %1788 = vmatprep.subr.mxu0 0.0
        %1789 = vmatpush1.msra.mxu0 0.0
        %1790 = vmatprep.mubr.f32.mxu0 0.0
        %1791 = vmatmul.mubr.f32.gmra.mrb[0].mxu0 %v1724
        %v1792 = vpop.f32.mrb[0].mxu0
        %v1793 = vadd.f32 0.0, %v1792
        %v1794 = vpop.f32.mrb[0].mxu0
        %1795 = vdwg.mxu0
        %v1796 = vld [vmem:[#allocation18] sm:$0xff]
        %s1797 = scalar_lea.vmem [#allocation9], 32
        %v1798 = vld [vmem:[%s1797] sm:$0xff]
        %v1799 = vld [vmem:[%s1797 + $0x8] sm:$0xff]
        %v1800 = vld [vmem:[%s1797 + $0x10] sm:$0xff]
        %v1801 = vld [vmem:[%s1797 + $0x18] sm:$0xff]
        %s1802 = scalar_lea.vmem [#allocation10], 1
        %v1803 = vld [vmem:[%s1802] sm:$0x1]
        %v1805 = vlaneseq
        %v1806 = vshrl.u32 %v1805, 7
        %v1807 = vsub.s32 0, %v1806
        %v1808 = vrot.slane %v1803, %v1807
        %1810 = vmatprep.subr.mxu0 0.0
        %1811 = vmatpush1.msra.mxu0 %v1798
        %1812 = vmatprep.subr.mxu0 0.0
        %1813 = vmatpush1.msra.mxu0 %v1799
        %1814 = vmatprep.subr.mxu0 0.0
        %1815 = vmatpush1.msra.mxu0 %v1800
        %1816 = vmatprep.subr.mxu0 0.0
        %1817 = vmatpush1.msra.mxu0 %v1801
        %1818 = vmatprep.subr.mxu0 0.0
        %1819 = vmatpush1.msra.mxu0 0.0
        %1820 = vmatprep.subr.mxu0 0.0
        %1821 = vmatpush1.msra.mxu0 0.0
        %1822 = vmatprep.subr.mxu0 0.0
        %1823 = vmatpush1.msra.mxu0 0.0
        %1824 = vmatprep.subr.mxu0 0.0
        %1825 = vmatpush1.msra.mxu0 0.0
        %1826 = vmatprep.subr.mxu0 0.0
        %1827 = vmatpush1.msra.mxu0 0.0
        %1828 = vmatprep.subr.mxu0 0.0
        %1829 = vmatpush1.msra.mxu0 0.0
        %1830 = vmatprep.subr.mxu0 0.0
        %1831 = vmatpush1.msra.mxu0 0.0
        %1832 = vmatprep.subr.mxu0 0.0
        %1833 = vmatpush1.msra.mxu0 0.0
        %1834 = vmatprep.subr.mxu0 0.0
        %1835 = vmatpush1.msra.mxu0 0.0
        %1836 = vmatprep.subr.mxu0 0.0
        %1837 = vmatpush1.msra.mxu0 0.0
        %1838 = vmatprep.subr.mxu0 0.0
        %1839 = vmatpush1.msra.mxu0 0.0
        %1840 = vmatprep.subr.mxu0 0.0
        %1841 = vmatpush1.msra.mxu0 0.0
        %1842 = vmatprep.subr.mxu0 0.0
        %1843 = vmatpush1.msra.mxu0 0.0
        %1844 = vmatprep.subr.mxu0 0.0
        %1845 = vmatpush1.msra.mxu0 0.0
        %1846 = vmatprep.subr.mxu0 0.0
        %1847 = vmatpush1.msra.mxu0 0.0
        %1848 = vmatprep.subr.mxu0 0.0
        %1849 = vmatpush1.msra.mxu0 0.0
        %1850 = vmatprep.subr.mxu0 0.0
        %1851 = vmatpush1.msra.mxu0 0.0
        %1852 = vmatprep.subr.mxu0 0.0
        %1853 = vmatpush1.msra.mxu0 0.0
        %1854 = vmatprep.subr.mxu0 0.0
        %1855 = vmatpush1.msra.mxu0 0.0
        %1856 = vmatprep.subr.mxu0 0.0
        %1857 = vmatpush1.msra.mxu0 0.0
        %1858 = vmatprep.subr.mxu0 0.0
        %1859 = vmatpush1.msra.mxu0 0.0
        %1860 = vmatprep.subr.mxu0 0.0
        %1861 = vmatpush1.msra.mxu0 0.0
        %1862 = vmatprep.subr.mxu0 0.0
        %1863 = vmatpush1.msra.mxu0 0.0
        %1864 = vmatprep.subr.mxu0 0.0
        %1865 = vmatpush1.msra.mxu0 0.0
        %1866 = vmatprep.subr.mxu0 0.0
        %1867 = vmatpush1.msra.mxu0 0.0
        %1868 = vmatprep.subr.mxu0 0.0
        %1869 = vmatpush1.msra.mxu0 0.0
        %1870 = vmatprep.subr.mxu0 0.0
        %1871 = vmatpush1.msra.mxu0 0.0
        %1872 = vmatprep.subr.mxu0 0.0
        %1873 = vmatpush1.msra.mxu0 0.0
        %1874 = vmatprep.mubr.f32.mxu0 0.0
        %1875 = vmatmul.mubr.f32.gmra.mrb[0].mxu0 %v1561
        %v1876 = vpop.f32.mrb[0].mxu0
        %v1877 = vadd.f32 %v1808, %v1876
        %v1878 = vpop.f32.mrb[0].mxu0
        %1879 = vdwg.mxu0
        %s1880 = scalar_lea.vmem [#allocation2], 8
        %v1881 = vld [vmem:[%s1880] sm:$0xff]
        %s1882 = scalar_lea.vmem [#allocation3], 8
        %v1883 = vld [vmem:[%s1882] sm:$0xff]
        %v1885 = vsel %vm1635, %v1877, 0
        %v1888 = vsel %vm1635, %v1881, 0
        %1890 = vmatprep.subr.mxu0 0.0
        %1891 = vmatpush1.xpose.msra.mxu0 %v1888
        %1892 = vmatprep.subr.mxu0 0.0
        %1893 = vmatpush1.xpose.msra.mxu0 0.0
        %1894 = vmatprep.subr.mxu0 0.0
        %1895 = vmatpush1.xpose.msra.mxu0 0.0
        %1896 = vmatprep.subr.mxu0 0.0
        %1897 = vmatpush1.xpose.msra.mxu0 0.0
        %1898 = vmatprep.subr.mxu0 0.0
        %1899 = vmatpush1.xpose.msra.mxu0 0.0
        %1900 = vmatprep.subr.mxu0 0.0
        %1901 = vmatpush1.xpose.msra.mxu0 0.0
        %1902 = vmatprep.subr.mxu0 0.0
        %1903 = vmatpush1.xpose.msra.mxu0 0.0
        %1904 = vmatprep.subr.mxu0 0.0
        %1905 = vmatpush1.xpose.msra.mxu0 0.0
        %1906 = vmatprep.subr.mxu0 0.0
        %1907 = vmatpush1.xpose.msra.mxu0 0.0
        %1908 = vmatprep.subr.mxu0 0.0
        %1909 = vmatpush1.xpose.msra.mxu0 0.0
        %1910 = vmatprep.subr.mxu0 0.0
        %1911 = vmatpush1.xpose.msra.mxu0 0.0
        %1912 = vmatprep.subr.mxu0 0.0
        %1913 = vmatpush1.xpose.msra.mxu0 0.0
        %1914 = vmatprep.subr.mxu0 0.0
        %1915 = vmatpush1.xpose.msra.mxu0 0.0
        %1916 = vmatprep.subr.mxu0 0.0
        %1917 = vmatpush1.xpose.msra.mxu0 0.0
        %1918 = vmatprep.subr.mxu0 0.0
        %1919 = vmatpush1.xpose.msra.mxu0 0.0
        %1920 = vmatprep.subr.mxu0 0.0
        %1921 = vmatpush1.xpose.msra.mxu0 0.0
        %1922 = vmatprep.subr.mxu0 0.0
        %1923 = vmatpush1.xpose.msra.mxu0 0.0
        %1924 = vmatprep.subr.mxu0 0.0
        %1925 = vmatpush1.xpose.msra.mxu0 0.0
        %1926 = vmatprep.subr.mxu0 0.0
        %1927 = vmatpush1.xpose.msra.mxu0 0.0
        %1928 = vmatprep.subr.mxu0 0.0
        %1929 = vmatpush1.xpose.msra.mxu0 0.0
        %1930 = vmatprep.subr.mxu0 0.0
        %1931 = vmatpush1.xpose.msra.mxu0 0.0
        %1932 = vmatprep.subr.mxu0 0.0
        %1933 = vmatpush1.xpose.msra.mxu0 0.0
        %1934 = vmatprep.subr.mxu0 0.0
        %1935 = vmatpush1.xpose.msra.mxu0 0.0
        %1936 = vmatprep.subr.mxu0 0.0
        %1937 = vmatpush1.xpose.msra.mxu0 0.0
        %1938 = vmatprep.subr.mxu0 0.0
        %1939 = vmatpush1.xpose.msra.mxu0 0.0
        %1940 = vmatprep.subr.mxu0 0.0
        %1941 = vmatpush1.xpose.msra.mxu0 0.0
        %1942 = vmatprep.subr.mxu0 0.0
        %1943 = vmatpush1.xpose.msra.mxu0 0.0
        %1944 = vmatprep.subr.mxu0 0.0
        %1945 = vmatpush1.xpose.msra.mxu0 0.0
        %1946 = vmatprep.subr.mxu0 0.0
        %1947 = vmatpush1.xpose.msra.mxu0 0.0
        %1948 = vmatprep.subr.mxu0 0.0
        %1949 = vmatpush1.xpose.msra.mxu0 0.0
        %1950 = vmatprep.subr.mxu0 0.0
        %1951 = vmatpush1.xpose.msra.mxu0 0.0
        %1952 = vmatprep.subr.mxu0 0.0
        %1953 = vmatpush1.xpose.msra.mxu0 0.0
        %1954 = vmatprep.mubr.f32.mxu0 0.0
        %1955 = vmatmul.mubr.f32.gmra.mrb[0].mxu0 %v1885
        %v1956 = vpop.f32.mrb[0].mxu0
        %v1957 = vadd.f32 0.0, %v1956
        %v1958 = vpop.f32.mrb[0].mxu0
        %1959 = vdwg.mxu0
        %v1960 = vsel %vm1635, %v1957, -inf
        %1961 = vmax.xlane.f32.xlu0 %v1960
        %v1962 = vpop.xlane.xlu0 %1961
        %v1963 = vsub.f32 %v1957, %v1962
        %v1964 = vmul.f32 %v1963, 1.442695
        %v1965 = vpow.pop %v1964
        %v1966 = vsel %vm1635, %v1965, 0.0
        %1967 = vadd.xlane.f32.xlu0 %v1966
        %v1968 = vpop.xlane.xlu0 %1967
        %v1969 = vrcp.pop %v1968
        %v1970 = vmul.f32 %v1965, %v1969
        %v1972 = vsel %vm1635, %v1970, 0
        %1974 = vmatprep.subr.mxu0 0.0
        %1975 = vmatpush1.msra.mxu0 %v1883
        %1976 = vmatprep.subr.mxu0 0.0
        %1977 = vmatpush1.msra.mxu0 0.0
        %1978 = vmatprep.subr.mxu0 0.0
        %1979 = vmatpush1.msra.mxu0 0.0
        %1980 = vmatprep.subr.mxu0 0.0
        %1981 = vmatpush1.msra.mxu0 0.0
        %1982 = vmatprep.subr.mxu0 0.0
        %1983 = vmatpush1.msra.mxu0 0.0
        %1984 = vmatprep.subr.mxu0 0.0
        %1985 = vmatpush1.msra.mxu0 0.0
        %1986 = vmatprep.subr.mxu0 0.0
        %1987 = vmatpush1.msra.mxu0 0.0
        %1988 = vmatprep.subr.mxu0 0.0
        %1989 = vmatpush1.msra.mxu0 0.0
        %1990 = vmatprep.subr.mxu0 0.0
        %1991 = vmatpush1.msra.mxu0 0.0
        %1992 = vmatprep.subr.mxu0 0.0
        %1993 = vmatpush1.msra.mxu0 0.0
        %1994 = vmatprep.subr.mxu0 0.0
        %1995 = vmatpush1.msra.mxu0 0.0
        %1996 = vmatprep.subr.mxu0 0.0
        %1997 = vmatpush1.msra.mxu0 0.0
        %1998 = vmatprep.subr.mxu0 0.0
        %1999 = vmatpush1.msra.mxu0 0.0
        %2000 = vmatprep.subr.mxu0 0.0
        %2001 = vmatpush1.msra.mxu0 0.0
        %2002 = vmatprep.subr.mxu0 0.0
        %2003 = vmatpush1.msra.mxu0 0.0
        %2004 = vmatprep.subr.mxu0 0.0
        %2005 = vmatpush1.msra.mxu0 0.0
        %2006 = vmatprep.subr.mxu0 0.0
        %2007 = vmatpush1.msra.mxu0 0.0
        %2008 = vmatprep.subr.mxu0 0.0
        %2009 = vmatpush1.msra.mxu0 0.0
        %2010 = vmatprep.subr.mxu0 0.0
        %2011 = vmatpush1.msra.mxu0 0.0
        %2012 = vmatprep.subr.mxu0 0.0
        %2013 = vmatpush1.msra.mxu0 0.0
        %2014 = vmatprep.subr.mxu0 0.0
        %2015 = vmatpush1.msra.mxu0 0.0
        %2016 = vmatprep.subr.mxu0 0.0
        %2017 = vmatpush1.msra.mxu0 0.0
        %2018 = vmatprep.subr.mxu0 0.0
        %2019 = vmatpush1.msra.mxu0 0.0
        %2020 = vmatprep.subr.mxu0 0.0
        %2021 = vmatpush1.msra.mxu0 0.0
        %2022 = vmatprep.subr.mxu0 0.0
        %2023 = vmatpush1.msra.mxu0 0.0
        %2024 = vmatprep.subr.mxu0 0.0
        %2025 = vmatpush1.msra.mxu0 0.0
        %2026 = vmatprep.subr.mxu0 0.0
        %2027 = vmatpush1.msra.mxu0 0.0
        %2028 = vmatprep.subr.mxu0 0.0
        %2029 = vmatpush1.msra.mxu0 0.0
        %2030 = vmatprep.subr.mxu0 0.0
        %2031 = vmatpush1.msra.mxu0 0.0
        %2032 = vmatprep.subr.mxu0 0.0
        %2033 = vmatpush1.msra.mxu0 0.0
        %2034 = vmatprep.subr.mxu0 0.0
        %2035 = vmatpush1.msra.mxu0 0.0
        %2036 = vmatprep.subr.mxu0 0.0
        %2037 = vmatpush1.msra.mxu0 0.0
        %2038 = vmatprep.mubr.f32.mxu0 0.0
        %2039 = vmatmul.mubr.f32.gmra.mrb[0].mxu0 %v1972
        %v2040 = vpop.f32.mrb[0].mxu0
        %v2041 = vadd.f32 0.0, %v2040
        %v2042 = vpop.f32.mrb[0].mxu0
        %2043 = vdwg.mxu0
        %s2044 = scalar_lea.vmem [#allocation18], 8
        %v2045 = vld [vmem:[%s2044] sm:$0xff]
        %v2047 = vsel %vm1635, %v2041, 0
        %2049 = vmatprep.subr.mxu0 0.0
        %2050 = vmatpush1.msra.mxu0 %v2045
        %2051 = vmatprep.subr.mxu0 0.0
        %2052 = vmatpush1.msra.mxu0 0.0
        %2053 = vmatprep.subr.mxu0 0.0
        %2054 = vmatpush1.msra.mxu0 0.0
        %2055 = vmatprep.subr.mxu0 0.0
        %2056 = vmatpush1.msra.mxu0 0.0
        %2057 = vmatprep.subr.mxu0 0.0
        %2058 = vmatpush1.msra.mxu0 0.0
        %2059 = vmatprep.subr.mxu0 0.0
        %2060 = vmatpush1.msra.mxu0 0.0
        %2061 = vmatprep.subr.mxu0 0.0
        %2062 = vmatpush1.msra.mxu0 0.0
        %2063 = vmatprep.subr.mxu0 0.0
        %2064 = vmatpush1.msra.mxu0 0.0
        %2065 = vmatprep.subr.mxu0 0.0
        %2066 = vmatpush1.msra.mxu0 0.0
        %2067 = vmatprep.subr.mxu0 0.0
        %2068 = vmatpush1.msra.mxu0 0.0
        %2069 = vmatprep.subr.mxu0 0.0
        %2070 = vmatpush1.msra.mxu0 0.0
        %2071 = vmatprep.subr.mxu0 0.0
        %2072 = vmatpush1.msra.mxu0 0.0
        %2073 = vmatprep.subr.mxu0 0.0
        %2074 = vmatpush1.msra.mxu0 0.0
        %2075 = vmatprep.subr.mxu0 0.0
        %2076 = vmatpush1.msra.mxu0 0.0
        %2077 = vmatprep.subr.mxu0 0.0
        %2078 = vmatpush1.msra.mxu0 0.0
        %2079 = vmatprep.subr.mxu0 0.0
        %2080 = vmatpush1.msra.mxu0 0.0
        %2081 = vmatprep.subr.mxu0 0.0
        %2082 = vmatpush1.msra.mxu0 0.0
        %2083 = vmatprep.subr.mxu0 0.0
        %2084 = vmatpush1.msra.mxu0 0.0
        %2085 = vmatprep.subr.mxu0 0.0
        %2086 = vmatpush1.msra.mxu0 0.0
        %2087 = vmatprep.subr.mxu0 0.0
        %2088 = vmatpush1.msra.mxu0 0.0
        %2089 = vmatprep.subr.mxu0 0.0
        %2090 = vmatpush1.msra.mxu0 0.0
        %2091 = vmatprep.subr.mxu0 0.0
        %2092 = vmatpush1.msra.mxu0 0.0
        %2093 = vmatprep.subr.mxu0 0.0
        %2094 = vmatpush1.msra.mxu0 0.0
        %2095 = vmatprep.subr.mxu0 0.0
        %2096 = vmatpush1.msra.mxu0 0.0
        %2097 = vmatprep.subr.mxu0 0.0
        %2098 = vmatpush1.msra.mxu0 0.0
        %2099 = vmatprep.subr.mxu0 0.0
        %2100 = vmatpush1.msra.mxu0 0.0
        %2101 = vmatprep.subr.mxu0 0.0
        %2102 = vmatpush1.msra.mxu0 0.0
        %2103 = vmatprep.subr.mxu0 0.0
        %2104 = vmatpush1.msra.mxu0 0.0
        %2105 = vmatprep.subr.mxu0 0.0
        %2106 = vmatpush1.msra.mxu0 0.0
        %2107 = vmatprep.subr.mxu0 0.0
        %2108 = vmatpush1.msra.mxu0 0.0
        %2109 = vmatprep.subr.mxu0 0.0
        %2110 = vmatpush1.msra.mxu0 0.0
        %2111 = vmatprep.subr.mxu0 0.0
        %2112 = vmatpush1.msra.mxu0 0.0
        %2113 = vmatprep.mubr.f32.mxu0 0.0
        %2114 = vmatmul.mubr.f32.gmra.mrb[0].mxu0 %v2047
        %v2115 = vpop.f32.mrb[0].mxu0
        %v2116 = vadd.f32 0.0, %v2115
        %v2117 = vpop.f32.mrb[0].mxu0
        %2118 = vdwg.mxu0
        %v2120 = vsel %vm1635, %v1793, 0
        %2122 = vmatprep.subr.mxu0 0.0
        %2123 = vmatpush1.msra.mxu0 %v1796
        %2124 = vmatprep.subr.mxu0 0.0
        %2125 = vmatpush1.msra.mxu0 0.0
        %2126 = vmatprep.subr.mxu0 0.0
        %2127 = vmatpush1.msra.mxu0 0.0
        %2128 = vmatprep.subr.mxu0 0.0
        %2129 = vmatpush1.msra.mxu0 0.0
        %2130 = vmatprep.subr.mxu0 0.0
        %2131 = vmatpush1.msra.mxu0 0.0
        %2132 = vmatprep.subr.mxu0 0.0
        %2133 = vmatpush1.msra.mxu0 0.0
        %2134 = vmatprep.subr.mxu0 0.0
        %2135 = vmatpush1.msra.mxu0 0.0
        %2136 = vmatprep.subr.mxu0 0.0
        %2137 = vmatpush1.msra.mxu0 0.0
        %2138 = vmatprep.subr.mxu0 0.0
        %2139 = vmatpush1.msra.mxu0 0.0
        %2140 = vmatprep.subr.mxu0 0.0
        %2141 = vmatpush1.msra.mxu0 0.0
        %2142 = vmatprep.subr.mxu0 0.0
        %2143 = vmatpush1.msra.mxu0 0.0
        %2144 = vmatprep.subr.mxu0 0.0
        %2145 = vmatpush1.msra.mxu0 0.0
        %2146 = vmatprep.subr.mxu0 0.0
        %2147 = vmatpush1.msra.mxu0 0.0
        %2148 = vmatprep.subr.mxu0 0.0
        %2149 = vmatpush1.msra.mxu0 0.0
        %2150 = vmatprep.subr.mxu0 0.0
        %2151 = vmatpush1.msra.mxu0 0.0
        %2152 = vmatprep.subr.mxu0 0.0
        %2153 = vmatpush1.msra.mxu0 0.0
        %2154 = vmatprep.subr.mxu0 0.0
        %2155 = vmatpush1.msra.mxu0 0.0
        %2156 = vmatprep.subr.mxu0 0.0
        %2157 = vmatpush1.msra.mxu0 0.0
        %2158 = vmatprep.subr.mxu0 0.0
        %2159 = vmatpush1.msra.mxu0 0.0
        %2160 = vmatprep.subr.mxu0 0.0
        %2161 = vmatpush1.msra.mxu0 0.0
        %2162 = vmatprep.subr.mxu0 0.0
        %2163 = vmatpush1.msra.mxu0 0.0
        %2164 = vmatprep.subr.mxu0 0.0
        %2165 = vmatpush1.msra.mxu0 0.0
        %2166 = vmatprep.subr.mxu0 0.0
        %2167 = vmatpush1.msra.mxu0 0.0
        %2168 = vmatprep.subr.mxu0 0.0
        %2169 = vmatpush1.msra.mxu0 0.0
        %2170 = vmatprep.subr.mxu0 0.0
        %2171 = vmatpush1.msra.mxu0 0.0
        %2172 = vmatprep.subr.mxu0 0.0
        %2173 = vmatpush1.msra.mxu0 0.0
        %2174 = vmatprep.subr.mxu0 0.0
        %2175 = vmatpush1.msra.mxu0 0.0
        %2176 = vmatprep.subr.mxu0 0.0
        %2177 = vmatpush1.msra.mxu0 0.0
        %2178 = vmatprep.subr.mxu0 0.0
        %2179 = vmatpush1.msra.mxu0 0.0
        %2180 = vmatprep.subr.mxu0 0.0
        %2181 = vmatpush1.msra.mxu0 0.0
        %2182 = vmatprep.subr.mxu0 0.0
        %2183 = vmatpush1.msra.mxu0 0.0
        %2184 = vmatprep.subr.mxu0 0.0
        %2185 = vmatpush1.msra.mxu0 0.0
        %2186 = vmatprep.mubr.f32.mxu0 0.0
        %2187 = vmatmul.mubr.f32.gmra.mrb[0].mxu0 %v2120
        %v2188 = vpop.f32.mrb[0].mxu0
        %v2189 = vadd.f32 %v2116, %v2188
        %v2190 = vpop.f32.mrb[0].mxu0
        %2191 = vdwg.mxu0
        %s2192 = scalar_lea.vmem [#allocation9], 64
        %v2193 = vld [vmem:[%s2192] sm:$0xff]
        %v2194 = vld [vmem:[%s2192 + $0x8] sm:$0xff]
        %v2195 = vld [vmem:[%s2192 + $0x10] sm:$0xff]
        %v2196 = vld [vmem:[%s2192 + $0x18] sm:$0xff]
        %s2197 = scalar_lea.vmem [#allocation10], 2
        %v2198 = vld [vmem:[%s2197] sm:$0x1]
        %v2200 = vlaneseq
        %v2201 = vshrl.u32 %v2200, 7
        %v2202 = vsub.s32 0, %v2201
        %v2203 = vrot.slane %v2198, %v2202
        %2205 = vmatprep.subr.mxu0 0.0
        %2206 = vmatpush1.msra.mxu0 %v2193
        %2207 = vmatprep.subr.mxu0 0.0
        %2208 = vmatpush1.msra.mxu0 %v2194
        %2209 = vmatprep.subr.mxu0 0.0
        %2210 = vmatpush1.msra.mxu0 %v2195
        %2211 = vmatprep.subr.mxu0 0.0
        %2212 = vmatpush1.msra.mxu0 %v2196
        %2213 = vmatprep.subr.mxu0 0.0
        %2214 = vmatpush1.msra.mxu0 0.0
        %2215 = vmatprep.subr.mxu0 0.0
        %2216 = vmatpush1.msra.mxu0 0.0
        %2217 = vmatprep.subr.mxu0 0.0
        %2218 = vmatpush1.msra.mxu0 0.0
        %2219 = vmatprep.subr.mxu0 0.0
        %2220 = vmatpush1.msra.mxu0 0.0
        %2221 = vmatprep.subr.mxu0 0.0
        %2222 = vmatpush1.msra.mxu0 0.0
        %2223 = vmatprep.subr.mxu0 0.0
        %2224 = vmatpush1.msra.mxu0 0.0
        %2225 = vmatprep.subr.mxu0 0.0
        %2226 = vmatpush1.msra.mxu0 0.0
        %2227 = vmatprep.subr.mxu0 0.0
        %2228 = vmatpush1.msra.mxu0 0.0
        %2229 = vmatprep.subr.mxu0 0.0
        %2230 = vmatpush1.msra.mxu0 0.0
        %2231 = vmatprep.subr.mxu0 0.0
        %2232 = vmatpush1.msra.mxu0 0.0
        %2233 = vmatprep.subr.mxu0 0.0
        %2234 = vmatpush1.msra.mxu0 0.0
        %2235 = vmatprep.subr.mxu0 0.0
        %2236 = vmatpush1.msra.mxu0 0.0
        %2237 = vmatprep.subr.mxu0 0.0
        %2238 = vmatpush1.msra.mxu0 0.0
        %2239 = vmatprep.subr.mxu0 0.0
        %2240 = vmatpush1.msra.mxu0 0.0
        %2241 = vmatprep.subr.mxu0 0.0
        %2242 = vmatpush1.msra.mxu0 0.0
        %2243 = vmatprep.subr.mxu0 0.0
        %2244 = vmatpush1.msra.mxu0 0.0
        %2245 = vmatprep.subr.mxu0 0.0
        %2246 = vmatpush1.msra.mxu0 0.0
        %2247 = vmatprep.subr.mxu0 0.0
        %2248 = vmatpush1.msra.mxu0 0.0
        %2249 = vmatprep.subr.mxu0 0.0
        %2250 = vmatpush1.msra.mxu0 0.0
        %2251 = vmatprep.subr.mxu0 0.0
        %2252 = vmatpush1.msra.mxu0 0.0
        %2253 = vmatprep.subr.mxu0 0.0
        %2254 = vmatpush1.msra.mxu0 0.0
        %2255 = vmatprep.subr.mxu0 0.0
        %2256 = vmatpush1.msra.mxu0 0.0
        %2257 = vmatprep.subr.mxu0 0.0
        %2258 = vmatpush1.msra.mxu0 0.0
        %2259 = vmatprep.subr.mxu0 0.0
        %2260 = vmatpush1.msra.mxu0 0.0
        %2261 = vmatprep.subr.mxu0 0.0
        %2262 = vmatpush1.msra.mxu0 0.0
        %2263 = vmatprep.subr.mxu0 0.0
        %2264 = vmatpush1.msra.mxu0 0.0
        %2265 = vmatprep.subr.mxu0 0.0
        %2266 = vmatpush1.msra.mxu0 0.0
        %2267 = vmatprep.subr.mxu0 0.0
        %2268 = vmatpush1.msra.mxu0 0.0
        %2269 = vmatprep.mubr.f32.mxu0 0.0
        %2270 = vmatmul.mubr.f32.gmra.mrb[0].mxu0 %v1561
        %v2271 = vpop.f32.mrb[0].mxu0
        %v2272 = vadd.f32 %v2203, %v2271
        %v2273 = vpop.f32.mrb[0].mxu0
        %2274 = vdwg.mxu0
        %s2275 = scalar_lea.vmem [#allocation2], 16
        %v2276 = vld [vmem:[%s2275] sm:$0xff]
        %s2277 = scalar_lea.vmem [#allocation3], 16
        %v2278 = vld [vmem:[%s2277] sm:$0xff]
        %v2280 = vsel %vm1635, %v2272, 0
        %v2283 = vsel %vm1635, %v2276, 0
        %2285 = vmatprep.subr.mxu0 0.0
        %2286 = vmatpush1.xpose.msra.mxu0 %v2283
        %2287 = vmatprep.subr.mxu0 0.0
        %2288 = vmatpush1.xpose.msra.mxu0 0.0
        %2289 = vmatprep.subr.mxu0 0.0
        %2290 = vmatpush1.xpose.msra.mxu0 0.0
        %2291 = vmatprep.subr.mxu0 0.0
        %2292 = vmatpush1.xpose.msra.mxu0 0.0
        %2293 = vmatprep.subr.mxu0 0.0
        %2294 = vmatpush1.xpose.msra.mxu0 0.0
        %2295 = vmatprep.subr.mxu0 0.0
        %2296 = vmatpush1.xpose.msra.mxu0 0.0
        %2297 = vmatprep.subr.mxu0 0.0
        %2298 = vmatpush1.xpose.msra.mxu0 0.0
        %2299 = vmatprep.subr.mxu0 0.0
        %2300 = vmatpush1.xpose.msra.mxu0 0.0
        %2301 = vmatprep.subr.mxu0 0.0
        %2302 = vmatpush1.xpose.msra.mxu0 0.0
        %2303 = vmatprep.subr.mxu0 0.0
        %2304 = vmatpush1.xpose.msra.mxu0 0.0
        %2305 = vmatprep.subr.mxu0 0.0
        %2306 = vmatpush1.xpose.msra.mxu0 0.0
        %2307 = vmatprep.subr.mxu0 0.0
        %2308 = vmatpush1.xpose.msra.mxu0 0.0
        %2309 = vmatprep.subr.mxu0 0.0
        %2310 = vmatpush1.xpose.msra.mxu0 0.0
        %2311 = vmatprep.subr.mxu0 0.0
        %2312 = vmatpush1.xpose.msra.mxu0 0.0
        %2313 = vmatprep.subr.mxu0 0.0
        %2314 = vmatpush1.xpose.msra.mxu0 0.0
        %2315 = vmatprep.subr.mxu0 0.0
        %2316 = vmatpush1.xpose.msra.mxu0 0.0
        %2317 = vmatprep.subr.mxu0 0.0
        %2318 = vmatpush1.xpose.msra.mxu0 0.0
        %2319 = vmatprep.subr.mxu0 0.0
        %2320 = vmatpush1.xpose.msra.mxu0 0.0
        %2321 = vmatprep.subr.mxu0 0.0
        %2322 = vmatpush1.xpose.msra.mxu0 0.0
        %2323 = vmatprep.subr.mxu0 0.0
        %2324 = vmatpush1.xpose.msra.mxu0 0.0
        %2325 = vmatprep.subr.mxu0 0.0
        %2326 = vmatpush1.xpose.msra.mxu0 0.0
        %2327 = vmatprep.subr.mxu0 0.0
        %2328 = vmatpush1.xpose.msra.mxu0 0.0
        %2329 = vmatprep.subr.mxu0 0.0
        %2330 = vmatpush1.xpose.msra.mxu0 0.0
        %2331 = vmatprep.subr.mxu0 0.0
        %2332 = vmatpush1.xpose.msra.mxu0 0.0
        %2333 = vmatprep.subr.mxu0 0.0
        %2334 = vmatpush1.xpose.msra.mxu0 0.0
        %2335 = vmatprep.subr.mxu0 0.0
        %2336 = vmatpush1.xpose.msra.mxu0 0.0
        %2337 = vmatprep.subr.mxu0 0.0
        %2338 = vmatpush1.xpose.msra.mxu0 0.0
        %2339 = vmatprep.subr.mxu0 0.0
        %2340 = vmatpush1.xpose.msra.mxu0 0.0
        %2341 = vmatprep.subr.mxu0 0.0
        %2342 = vmatpush1.xpose.msra.mxu0 0.0
        %2343 = vmatprep.subr.mxu0 0.0
        %2344 = vmatpush1.xpose.msra.mxu0 0.0
        %2345 = vmatprep.subr.mxu0 0.0
        %2346 = vmatpush1.xpose.msra.mxu0 0.0
        %2347 = vmatprep.subr.mxu0 0.0
        %2348 = vmatpush1.xpose.msra.mxu0 0.0
        %2349 = vmatprep.mubr.f32.mxu0 0.0
        %2350 = vmatmul.mubr.f32.gmra.mrb[0].mxu0 %v2280
        %v2351 = vpop.f32.mrb[0].mxu0
        %v2352 = vadd.f32 0.0, %v2351
        %v2353 = vpop.f32.mrb[0].mxu0
        %2354 = vdwg.mxu0
        %v2355 = vsel %vm1635, %v2352, -inf
        %2356 = vmax.xlane.f32.xlu0 %v2355
        %v2357 = vpop.xlane.xlu0 %2356
        %v2358 = vsub.f32 %v2352, %v2357
        %v2359 = vmul.f32 %v2358, 1.442695
        %v2360 = vpow.pop %v2359
        %v2361 = vsel %vm1635, %v2360, 0.0
        %2362 = vadd.xlane.f32.xlu0 %v2361
        %v2363 = vpop.xlane.xlu0 %2362
        %v2364 = vrcp.pop %v2363
        %v2365 = vmul.f32 %v2360, %v2364
        %v2367 = vsel %vm1635, %v2365, 0
        %2369 = vmatprep.subr.mxu0 0.0
        %2370 = vmatpush1.msra.mxu0 %v2278
        %2371 = vmatprep.subr.mxu0 0.0
        %2372 = vmatpush1.msra.mxu0 0.0
        %2373 = vmatprep.subr.mxu0 0.0
        %2374 = vmatpush1.msra.mxu0 0.0
        %2375 = vmatprep.subr.mxu0 0.0
        %2376 = vmatpush1.msra.mxu0 0.0
        %2377 = vmatprep.subr.mxu0 0.0
        %2378 = vmatpush1.msra.mxu0 0.0
        %2379 = vmatprep.subr.mxu0 0.0
        %2380 = vmatpush1.msra.mxu0 0.0
        %2381 = vmatprep.subr.mxu0 0.0
        %2382 = vmatpush1.msra.mxu0 0.0
        %2383 = vmatprep.subr.mxu0 0.0
        %2384 = vmatpush1.msra.mxu0 0.0
        %2385 = vmatprep.subr.mxu0 0.0
        %2386 = vmatpush1.msra.mxu0 0.0
        %2387 = vmatprep.subr.mxu0 0.0
        %2388 = vmatpush1.msra.mxu0 0.0
        %2389 = vmatprep.subr.mxu0 0.0
        %2390 = vmatpush1.msra.mxu0 0.0
        %2391 = vmatprep.subr.mxu0 0.0
        %2392 = vmatpush1.msra.mxu0 0.0
        %2393 = vmatprep.subr.mxu0 0.0
        %2394 = vmatpush1.msra.mxu0 0.0
        %2395 = vmatprep.subr.mxu0 0.0
        %2396 = vmatpush1.msra.mxu0 0.0
        %2397 = vmatprep.subr.mxu0 0.0
        %2398 = vmatpush1.msra.mxu0 0.0
        %2399 = vmatprep.subr.mxu0 0.0
        %2400 = vmatpush1.msra.mxu0 0.0
        %2401 = vmatprep.subr.mxu0 0.0
        %2402 = vmatpush1.msra.mxu0 0.0
        %2403 = vmatprep.subr.mxu0 0.0
        %2404 = vmatpush1.msra.mxu0 0.0
        %2405 = vmatprep.subr.mxu0 0.0
        %2406 = vmatpush1.msra.mxu0 0.0
        %2407 = vmatprep.subr.mxu0 0.0
        %2408 = vmatpush1.msra.mxu0 0.0
        %2409 = vmatprep.subr.mxu0 0.0
        %2410 = vmatpush1.msra.mxu0 0.0
        %2411 = vmatprep.subr.mxu0 0.0
        %2412 = vmatpush1.msra.mxu0 0.0
        %2413 = vmatprep.subr.mxu0 0.0
        %2414 = vmatpush1.msra.mxu0 0.0
        %2415 = vmatprep.subr.mxu0 0.0
        %2416 = vmatpush1.msra.mxu0 0.0
        %2417 = vmatprep.subr.mxu0 0.0
        %2418 = vmatpush1.msra.mxu0 0.0
        %2419 = vmatprep.subr.mxu0 0.0
        %2420 = vmatpush1.msra.mxu0 0.0
        %2421 = vmatprep.subr.mxu0 0.0
        %2422 = vmatpush1.msra.mxu0 0.0
        %2423 = vmatprep.subr.mxu0 0.0
        %2424 = vmatpush1.msra.mxu0 0.0
        %2425 = vmatprep.subr.mxu0 0.0
        %2426 = vmatpush1.msra.mxu0 0.0
        %2427 = vmatprep.subr.mxu0 0.0
        %2428 = vmatpush1.msra.mxu0 0.0
        %2429 = vmatprep.subr.mxu0 0.0
        %2430 = vmatpush1.msra.mxu0 0.0
        %2431 = vmatprep.subr.mxu0 0.0
        %2432 = vmatpush1.msra.mxu0 0.0
        %2433 = vmatprep.mubr.f32.mxu0 0.0
        %2434 = vmatmul.mubr.f32.gmra.mrb[0].mxu0 %v2367
        %v2435 = vpop.f32.mrb[0].mxu0
        %v2436 = vadd.f32 0.0, %v2435
        %v2437 = vpop.f32.mrb[0].mxu0
        %2438 = vdwg.mxu0
        %s2439 = scalar_lea.vmem [#allocation18], 16
        %v2440 = vld [vmem:[%s2439] sm:$0xff]
        %v2442 = vsel %vm1635, %v2436, 0
        %2444 = vmatprep.subr.mxu0 0.0
        %2445 = vmatpush1.msra.mxu0 %v2440
        %2446 = vmatprep.subr.mxu0 0.0
        %2447 = vmatpush1.msra.mxu0 0.0
        %2448 = vmatprep.subr.mxu0 0.0
        %2449 = vmatpush1.msra.mxu0 0.0
        %2450 = vmatprep.subr.mxu0 0.0
        %2451 = vmatpush1.msra.mxu0 0.0
        %2452 = vmatprep.subr.mxu0 0.0
        %2453 = vmatpush1.msra.mxu0 0.0
        %2454 = vmatprep.subr.mxu0 0.0
        %2455 = vmatpush1.msra.mxu0 0.0
        %2456 = vmatprep.subr.mxu0 0.0
        %2457 = vmatpush1.msra.mxu0 0.0
        %2458 = vmatprep.subr.mxu0 0.0
        %2459 = vmatpush1.msra.mxu0 0.0
        %2460 = vmatprep.subr.mxu0 0.0
        %2461 = vmatpush1.msra.mxu0 0.0
        %2462 = vmatprep.subr.mxu0 0.0
        %2463 = vmatpush1.msra.mxu0 0.0
        %2464 = vmatprep.subr.mxu0 0.0
        %2465 = vmatpush1.msra.mxu0 0.0
        %2466 = vmatprep.subr.mxu0 0.0
        %2467 = vmatpush1.msra.mxu0 0.0
        %2468 = vmatprep.subr.mxu0 0.0
        %2469 = vmatpush1.msra.mxu0 0.0
        %2470 = vmatprep.subr.mxu0 0.0
        %2471 = vmatpush1.msra.mxu0 0.0
        %2472 = vmatprep.subr.mxu0 0.0
        %2473 = vmatpush1.msra.mxu0 0.0
        %2474 = vmatprep.subr.mxu0 0.0
        %2475 = vmatpush1.msra.mxu0 0.0
        %2476 = vmatprep.subr.mxu0 0.0
        %2477 = vmatpush1.msra.mxu0 0.0
        %2478 = vmatprep.subr.mxu0 0.0
        %2479 = vmatpush1.msra.mxu0 0.0
        %2480 = vmatprep.subr.mxu0 0.0
        %2481 = vmatpush1.msra.mxu0 0.0
        %2482 = vmatprep.subr.mxu0 0.0
        %2483 = vmatpush1.msra.mxu0 0.0
        %2484 = vmatprep.subr.mxu0 0.0
        %2485 = vmatpush1.msra.mxu0 0.0
        %2486 = vmatprep.subr.mxu0 0.0
        %2487 = vmatpush1.msra.mxu0 0.0
        %2488 = vmatprep.subr.mxu0 0.0
        %2489 = vmatpush1.msra.mxu0 0.0
        %2490 = vmatprep.subr.mxu0 0.0
        %2491 = vmatpush1.msra.mxu0 0.0
        %2492 = vmatprep.subr.mxu0 0.0
        %2493 = vmatpush1.msra.mxu0 0.0
        %2494 = vmatprep.subr.mxu0 0.0
        %2495 = vmatpush1.msra.mxu0 0.0
        %2496 = vmatprep.subr.mxu0 0.0
        %2497 = vmatpush1.msra.mxu0 0.0
        %2498 = vmatprep.subr.mxu0 0.0
        %2499 = vmatpush1.msra.mxu0 0.0
        %2500 = vmatprep.subr.mxu0 0.0
        %2501 = vmatpush1.msra.mxu0 0.0
        %2502 = vmatprep.subr.mxu0 0.0
        %2503 = vmatpush1.msra.mxu0 0.0
        %2504 = vmatprep.subr.mxu0 0.0
        %2505 = vmatpush1.msra.mxu0 0.0
        %2506 = vmatprep.subr.mxu0 0.0
        %2507 = vmatpush1.msra.mxu0 0.0
        %2508 = vmatprep.mubr.f32.mxu0 0.0
        %2509 = vmatmul.mubr.f32.gmra.mrb[0].mxu0 %v2442
        %v2510 = vpop.f32.mrb[0].mxu0
        %v2511 = vadd.f32 0.0, %v2510
        %v2512 = vpop.f32.mrb[0].mxu0
        %2513 = vdwg.mxu0
        %v2514 = vadd.f32 %v2189, %v2511
        %s2515 = scalar_lea.vmem [#allocation9], 96
        %v2516 = vld [vmem:[%s2515] sm:$0xff]
        %v2517 = vld [vmem:[%s2515 + $0x8] sm:$0xff]
        %v2518 = vld [vmem:[%s2515 + $0x10] sm:$0xff]
        %v2519 = vld [vmem:[%s2515 + $0x18] sm:$0xff]
        %s2520 = scalar_lea.vmem [#allocation10], 3
        %v2521 = vld [vmem:[%s2520] sm:$0x1]
        %v2523 = vlaneseq
        %v2524 = vshrl.u32 %v2523, 7
        %v2525 = vsub.s32 0, %v2524
        %v2526 = vrot.slane %v2521, %v2525
        %2528 = vmatprep.subr.mxu0 0.0
        %2529 = vmatpush1.msra.mxu0 %v2516
        %2530 = vmatprep.subr.mxu0 0.0
        %2531 = vmatpush1.msra.mxu0 %v2517
        %2532 = vmatprep.subr.mxu0 0.0
        %2533 = vmatpush1.msra.mxu0 %v2518
        %2534 = vmatprep.subr.mxu0 0.0
        %2535 = vmatpush1.msra.mxu0 %v2519
        %2536 = vmatprep.subr.mxu0 0.0
        %2537 = vmatpush1.msra.mxu0 0.0
        %2538 = vmatprep.subr.mxu0 0.0
        %2539 = vmatpush1.msra.mxu0 0.0
        %2540 = vmatprep.subr.mxu0 0.0
        %2541 = vmatpush1.msra.mxu0 0.0
        %2542 = vmatprep.subr.mxu0 0.0
        %2543 = vmatpush1.msra.mxu0 0.0
        %2544 = vmatprep.subr.mxu0 0.0
        %2545 = vmatpush1.msra.mxu0 0.0
        %2546 = vmatprep.subr.mxu0 0.0
        %2547 = vmatpush1.msra.mxu0 0.0
        %2548 = vmatprep.subr.mxu0 0.0
        %2549 = vmatpush1.msra.mxu0 0.0
        %2550 = vmatprep.subr.mxu0 0.0
        %2551 = vmatpush1.msra.mxu0 0.0
        %2552 = vmatprep.subr.mxu0 0.0
        %2553 = vmatpush1.msra.mxu0 0.0
        %2554 = vmatprep.subr.mxu0 0.0
        %2555 = vmatpush1.msra.mxu0 0.0
        %2556 = vmatprep.subr.mxu0 0.0
        %2557 = vmatpush1.msra.mxu0 0.0
        %2558 = vmatprep.subr.mxu0 0.0
        %2559 = vmatpush1.msra.mxu0 0.0
        %2560 = vmatprep.subr.mxu0 0.0
        %2561 = vmatpush1.msra.mxu0 0.0
        %2562 = vmatprep.subr.mxu0 0.0
        %2563 = vmatpush1.msra.mxu0 0.0
        %2564 = vmatprep.subr.mxu0 0.0
        %2565 = vmatpush1.msra.mxu0 0.0
        %2566 = vmatprep.subr.mxu0 0.0
        %2567 = vmatpush1.msra.mxu0 0.0
        %2568 = vmatprep.subr.mxu0 0.0
        %2569 = vmatpush1.msra.mxu0 0.0
        %2570 = vmatprep.subr.mxu0 0.0
        %2571 = vmatpush1.msra.mxu0 0.0
        %2572 = vmatprep.subr.mxu0 0.0
        %2573 = vmatpush1.msra.mxu0 0.0
        %2574 = vmatprep.subr.mxu0 0.0
        %2575 = vmatpush1.msra.mxu0 0.0
        %2576 = vmatprep.subr.mxu0 0.0
        %2577 = vmatpush1.msra.mxu0 0.0
        %2578 = vmatprep.subr.mxu0 0.0
        %2579 = vmatpush1.msra.mxu0 0.0
        %2580 = vmatprep.subr.mxu0 0.0
        %2581 = vmatpush1.msra.mxu0 0.0
        %2582 = vmatprep.subr.mxu0 0.0
        %2583 = vmatpush1.msra.mxu0 0.0
        %2584 = vmatprep.subr.mxu0 0.0
        %2585 = vmatpush1.msra.mxu0 0.0
        %2586 = vmatprep.subr.mxu0 0.0
        %2587 = vmatpush1.msra.mxu0 0.0
        %2588 = vmatprep.subr.mxu0 0.0
        %2589 = vmatpush1.msra.mxu0 0.0
        %2590 = vmatprep.subr.mxu0 0.0
        %2591 = vmatpush1.msra.mxu0 0.0
        %2592 = vmatprep.mubr.f32.mxu0 0.0
        %2593 = vmatmul.mubr.f32.gmra.mrb[0].mxu0 %v1561
        %v2594 = vpop.f32.mrb[0].mxu0
        %v2595 = vadd.f32 %v2526, %v2594
        %v2596 = vpop.f32.mrb[0].mxu0
        %2597 = vdwg.mxu0
        %s2598 = scalar_lea.vmem [#allocation2], 24
        %v2599 = vld [vmem:[%s2598] sm:$0xff]
        %s2600 = scalar_lea.vmem [#allocation3], 24
        %v2601 = vld [vmem:[%s2600] sm:$0xff]
        %v2603 = vsel %vm1635, %v2595, 0
        %v2606 = vsel %vm1635, %v2599, 0
        %2608 = vmatprep.subr.mxu0 0.0
        %2609 = vmatpush1.xpose.msra.mxu0 %v2606
        %2610 = vmatprep.subr.mxu0 0.0
        %2611 = vmatpush1.xpose.msra.mxu0 0.0
        %2612 = vmatprep.subr.mxu0 0.0
        %2613 = vmatpush1.xpose.msra.mxu0 0.0
        %2614 = vmatprep.subr.mxu0 0.0
        %2615 = vmatpush1.xpose.msra.mxu0 0.0
        %2616 = vmatprep.subr.mxu0 0.0
        %2617 = vmatpush1.xpose.msra.mxu0 0.0
        %2618 = vmatprep.subr.mxu0 0.0
        %2619 = vmatpush1.xpose.msra.mxu0 0.0
        %2620 = vmatprep.subr.mxu0 0.0
        %2621 = vmatpush1.xpose.msra.mxu0 0.0
        %2622 = vmatprep.subr.mxu0 0.0
        %2623 = vmatpush1.xpose.msra.mxu0 0.0
        %2624 = vmatprep.subr.mxu0 0.0
        %2625 = vmatpush1.xpose.msra.mxu0 0.0
        %2626 = vmatprep.subr.mxu0 0.0
        %2627 = vmatpush1.xpose.msra.mxu0 0.0
        %2628 = vmatprep.subr.mxu0 0.0
        %2629 = vmatpush1.xpose.msra.mxu0 0.0
        %2630 = vmatprep.subr.mxu0 0.0
        %2631 = vmatpush1.xpose.msra.mxu0 0.0
        %2632 = vmatprep.subr.mxu0 0.0
        %2633 = vmatpush1.xpose.msra.mxu0 0.0
        %2634 = vmatprep.subr.mxu0 0.0
        %2635 = vmatpush1.xpose.msra.mxu0 0.0
        %2636 = vmatprep.subr.mxu0 0.0
        %2637 = vmatpush1.xpose.msra.mxu0 0.0
        %2638 = vmatprep.subr.mxu0 0.0
        %2639 = vmatpush1.xpose.msra.mxu0 0.0
        %2640 = vmatprep.subr.mxu0 0.0
        %2641 = vmatpush1.xpose.msra.mxu0 0.0
        %2642 = vmatprep.subr.mxu0 0.0
        %2643 = vmatpush1.xpose.msra.mxu0 0.0
        %2644 = vmatprep.subr.mxu0 0.0
        %2645 = vmatpush1.xpose.msra.mxu0 0.0
        %2646 = vmatprep.subr.mxu0 0.0
        %2647 = vmatpush1.xpose.msra.mxu0 0.0
        %2648 = vmatprep.subr.mxu0 0.0
        %2649 = vmatpush1.xpose.msra.mxu0 0.0
        %2650 = vmatprep.subr.mxu0 0.0
        %2651 = vmatpush1.xpose.msra.mxu0 0.0
        %2652 = vmatprep.subr.mxu0 0.0
        %2653 = vmatpush1.xpose.msra.mxu0 0.0
        %2654 = vmatprep.subr.mxu0 0.0
        %2655 = vmatpush1.xpose.msra.mxu0 0.0
        %2656 = vmatprep.subr.mxu0 0.0
        %2657 = vmatpush1.xpose.msra.mxu0 0.0
        %2658 = vmatprep.subr.mxu0 0.0
        %2659 = vmatpush1.xpose.msra.mxu0 0.0
        %2660 = vmatprep.subr.mxu0 0.0
        %2661 = vmatpush1.xpose.msra.mxu0 0.0
        %2662 = vmatprep.subr.mxu0 0.0
        %2663 = vmatpush1.xpose.msra.mxu0 0.0
        %2664 = vmatprep.subr.mxu0 0.0
        %2665 = vmatpush1.xpose.msra.mxu0 0.0
        %2666 = vmatprep.subr.mxu0 0.0
        %2667 = vmatpush1.xpose.msra.mxu0 0.0
        %2668 = vmatprep.subr.mxu0 0.0
        %2669 = vmatpush1.xpose.msra.mxu0 0.0
        %2670 = vmatprep.subr.mxu0 0.0
        %2671 = vmatpush1.xpose.msra.mxu0 0.0
        %2672 = vmatprep.mubr.f32.mxu0 0.0
        %2673 = vmatmul.mubr.f32.gmra.mrb[0].mxu0 %v2603
        %v2674 = vpop.f32.mrb[0].mxu0
        %v2675 = vadd.f32 0.0, %v2674
        %v2676 = vpop.f32.mrb[0].mxu0
        %2677 = vdwg.mxu0
        %v2678 = vsel %vm1635, %v2675, -inf
        %2679 = vmax.xlane.f32.xlu0 %v2678
        %v2680 = vpop.xlane.xlu0 %2679
        %v2681 = vsub.f32 %v2675, %v2680
        %v2682 = vmul.f32 %v2681, 1.442695
        %v2683 = vpow.pop %v2682
        %v2684 = vsel %vm1635, %v2683, 0.0
        %2685 = vadd.xlane.f32.xlu0 %v2684
        %v2686 = vpop.xlane.xlu0 %2685
        %v2687 = vrcp.pop %v2686
        %v2688 = vmul.f32 %v2683, %v2687
        %v2690 = vsel %vm1635, %v2688, 0
        %2692 = vmatprep.subr.mxu0 0.0
        %2693 = vmatpush1.msra.mxu0 %v2601
        %2694 = vmatprep.subr.mxu0 0.0
        %2695 = vmatpush1.msra.mxu0 0.0
        %2696 = vmatprep.subr.mxu0 0.0
        %2697 = vmatpush1.msra.mxu0 0.0
        %2698 = vmatprep.subr.mxu0 0.0
        %2699 = vmatpush1.msra.mxu0 0.0
        %2700 = vmatprep.subr.mxu0 0.0
        %2701 = vmatpush1.msra.mxu0 0.0
        %2702 = vmatprep.subr.mxu0 0.0
        %2703 = vmatpush1.msra.mxu0 0.0
        %2704 = vmatprep.subr.mxu0 0.0
        %2705 = vmatpush1.msra.mxu0 0.0
        %2706 = vmatprep.subr.mxu0 0.0
        %2707 = vmatpush1.msra.mxu0 0.0
        %2708 = vmatprep.subr.mxu0 0.0
        %2709 = vmatpush1.msra.mxu0 0.0
        %2710 = vmatprep.subr.mxu0 0.0
        %2711 = vmatpush1.msra.mxu0 0.0
        %2712 = vmatprep.subr.mxu0 0.0
        %2713 = vmatpush1.msra.mxu0 0.0
        %2714 = vmatprep.subr.mxu0 0.0
        %2715 = vmatpush1.msra.mxu0 0.0
        %2716 = vmatprep.subr.mxu0 0.0
        %2717 = vmatpush1.msra.mxu0 0.0
        %2718 = vmatprep.subr.mxu0 0.0
        %2719 = vmatpush1.msra.mxu0 0.0
        %2720 = vmatprep.subr.mxu0 0.0
        %2721 = vmatpush1.msra.mxu0 0.0
        %2722 = vmatprep.subr.mxu0 0.0
        %2723 = vmatpush1.msra.mxu0 0.0
        %2724 = vmatprep.subr.mxu0 0.0
        %2725 = vmatpush1.msra.mxu0 0.0
        %2726 = vmatprep.subr.mxu0 0.0
        %2727 = vmatpush1.msra.mxu0 0.0
        %2728 = vmatprep.subr.mxu0 0.0
        %2729 = vmatpush1.msra.mxu0 0.0
        %2730 = vmatprep.subr.mxu0 0.0
        %2731 = vmatpush1.msra.mxu0 0.0
        %2732 = vmatprep.subr.mxu0 0.0
        %2733 = vmatpush1.msra.mxu0 0.0
        %2734 = vmatprep.subr.mxu0 0.0
        %2735 = vmatpush1.msra.mxu0 0.0
        %2736 = vmatprep.subr.mxu0 0.0
        %2737 = vmatpush1.msra.mxu0 0.0
        %2738 = vmatprep.subr.mxu0 0.0
        %2739 = vmatpush1.msra.mxu0 0.0
        %2740 = vmatprep.subr.mxu0 0.0
        %2741 = vmatpush1.msra.mxu0 0.0
        %2742 = vmatprep.subr.mxu0 0.0
        %2743 = vmatpush1.msra.mxu0 0.0
        %2744 = vmatprep.subr.mxu0 0.0
        %2745 = vmatpush1.msra.mxu0 0.0
        %2746 = vmatprep.subr.mxu0 0.0
        %2747 = vmatpush1.msra.mxu0 0.0
        %2748 = vmatprep.subr.mxu0 0.0
        %2749 = vmatpush1.msra.mxu0 0.0
        %2750 = vmatprep.subr.mxu0 0.0
        %2751 = vmatpush1.msra.mxu0 0.0
        %2752 = vmatprep.subr.mxu0 0.0
        %2753 = vmatpush1.msra.mxu0 0.0
        %2754 = vmatprep.subr.mxu0 0.0
        %2755 = vmatpush1.msra.mxu0 0.0
        %2756 = vmatprep.mubr.f32.mxu0 0.0
        %2757 = vmatmul.mubr.f32.gmra.mrb[0].mxu0 %v2690
        %v2758 = vpop.f32.mrb[0].mxu0
        %v2759 = vadd.f32 0.0, %v2758
        %v2760 = vpop.f32.mrb[0].mxu0
        %2761 = vdwg.mxu0
        %s2762 = scalar_lea.vmem [#allocation18], 24
        %v2763 = vld [vmem:[%s2762] sm:$0xff]
        %v2765 = vsel %vm1635, %v2759, 0
        %2767 = vmatprep.subr.mxu0 0.0
        %2768 = vmatpush1.msra.mxu0 %v2763
        %2769 = vmatprep.subr.mxu0 0.0
        %2770 = vmatpush1.msra.mxu0 0.0
        %2771 = vmatprep.subr.mxu0 0.0
        %2772 = vmatpush1.msra.mxu0 0.0
        %2773 = vmatprep.subr.mxu0 0.0
        %2774 = vmatpush1.msra.mxu0 0.0
        %2775 = vmatprep.subr.mxu0 0.0
        %2776 = vmatpush1.msra.mxu0 0.0
        %2777 = vmatprep.subr.mxu0 0.0
        %2778 = vmatpush1.msra.mxu0 0.0
        %2779 = vmatprep.subr.mxu0 0.0
        %2780 = vmatpush1.msra.mxu0 0.0
        %2781 = vmatprep.subr.mxu0 0.0
        %2782 = vmatpush1.msra.mxu0 0.0
        %2783 = vmatprep.subr.mxu0 0.0
        %2784 = vmatpush1.msra.mxu0 0.0
        %2785 = vmatprep.subr.mxu0 0.0
        %2786 = vmatpush1.msra.mxu0 0.0
        %2787 = vmatprep.subr.mxu0 0.0
        %2788 = vmatpush1.msra.mxu0 0.0
        %2789 = vmatprep.subr.mxu0 0.0
        %2790 = vmatpush1.msra.mxu0 0.0
        %2791 = vmatprep.subr.mxu0 0.0
        %2792 = vmatpush1.msra.mxu0 0.0
        %2793 = vmatprep.subr.mxu0 0.0
        %2794 = vmatpush1.msra.mxu0 0.0
        %2795 = vmatprep.subr.mxu0 0.0
        %2796 = vmatpush1.msra.mxu0 0.0
        %2797 = vmatprep.subr.mxu0 0.0
        %2798 = vmatpush1.msra.mxu0 0.0
        %2799 = vmatprep.subr.mxu0 0.0
        %2800 = vmatpush1.msra.mxu0 0.0
        %2801 = vmatprep.subr.mxu0 0.0
        %2802 = vmatpush1.msra.mxu0 0.0
        %2803 = vmatprep.subr.mxu0 0.0
        %2804 = vmatpush1.msra.mxu0 0.0
        %2805 = vmatprep.subr.mxu0 0.0
        %2806 = vmatpush1.msra.mxu0 0.0
        %2807 = vmatprep.subr.mxu0 0.0
        %2808 = vmatpush1.msra.mxu0 0.0
        %2809 = vmatprep.subr.mxu0 0.0
        %2810 = vmatpush1.msra.mxu0 0.0
        %2811 = vmatprep.subr.mxu0 0.0
        %2812 = vmatpush1.msra.mxu0 0.0
        %2813 = vmatprep.subr.mxu0 0.0
        %2814 = vmatpush1.msra.mxu0 0.0
        %2815 = vmatprep.subr.mxu0 0.0
        %2816 = vmatpush1.msra.mxu0 0.0
        %2817 = vmatprep.subr.mxu0 0.0
        %2818 = vmatpush1.msra.mxu0 0.0
        %2819 = vmatprep.subr.mxu0 0.0
        %2820 = vmatpush1.msra.mxu0 0.0
        %2821 = vmatprep.subr.mxu0 0.0
        %2822 = vmatpush1.msra.mxu0 0.0
        %2823 = vmatprep.subr.mxu0 0.0
        %2824 = vmatpush1.msra.mxu0 0.0
        %2825 = vmatprep.subr.mxu0 0.0
        %2826 = vmatpush1.msra.mxu0 0.0
        %2827 = vmatprep.subr.mxu0 0.0
        %2828 = vmatpush1.msra.mxu0 0.0
        %2829 = vmatprep.subr.mxu0 0.0
        %2830 = vmatpush1.msra.mxu0 0.0
        %2831 = vmatprep.mubr.f32.mxu0 0.0
        %2832 = vmatmul.mubr.f32.gmra.mrb[0].mxu0 %v2765
        %v2833 = vpop.f32.mrb[0].mxu0
        %v2834 = vadd.f32 0.0, %v2833
        %v2835 = vpop.f32.mrb[0].mxu0
        %2836 = vdwg.mxu0
        %v2837 = vadd.f32 %v2514, %v2834
        %v2838 = vld [vmem:[#allocation19] sm:$0x1]
        %v2840 = vlaneseq
        %v2841 = vshrl.u32 %v2840, 7
        %v2842 = vsub.s32 0, %v2841
        %v2843 = vrot.slane %v2838, %v2842
        %v2845 = vadd.f32 %v2837, %v2843
        %v2846 = vadd.f32 %v863, %v2845
        %v2847 = vsel %vm1559, %v2846, 0.0
        %2848 = vadd.xlane.f32.xlu0 %v2847
        %v2849 = vpop.xlane.xlu0 %2848
        %v2850 = vrcp.pop 32.0
        %v2851 = vmul.f32 %v2849, %v2850
        %v2852 = vsub.f32 %v2846, %v2851
        %v2853 = vmul.f32 %v2852, %v2852
        %v2854 = vsel %vm1559, %v2853, 0.0
        %2855 = vadd.xlane.f32.xlu0 %v2854
        %v2856 = vpop.xlane.xlu0 %2855
        %v2857 = vmul.f32 %v2856, %v2850
        %v2858 = vadd.f32 %v2857, 1e-05
        %v2859 = vrsqrt.pop %v2858
        %v2860 = vmul.f32 %v2852, %v2859
        %v2861 = vld [vmem:[#allocation21] sm:$0x1]
        %v2863 = vlaneseq
        %v2864 = vshrl.u32 %v2863, 7
        %v2865 = vsub.s32 0, %v2864
        %v2866 = vrot.slane %v2861, %v2865
        %v2868 = vmul.f32 %v2860, %v2866
        %v2869 = vld [vmem:[#allocation22] sm:$0x1]
        %v2871 = vlaneseq
        %v2872 = vshrl.u32 %v2871, 7
        %v2873 = vsub.s32 0, %v2872
        %v2874 = vrot.slane %v2869, %v2873
        %v2876 = vadd.f32 %v2868, %v2874
        %v2877 = vld [vmem:[#allocation24] sm:$0xff]
        %v2878 = vld [vmem:[#allocation24 + $0x8] sm:$0xff]
        %v2879 = vld [vmem:[#allocation24 + $0x10] sm:$0xff]
        %v2880 = vld [vmem:[#allocation24 + $0x18] sm:$0xff]
        %v2881 = vld [vmem:[#allocation25] sm:$0x1]
        %v2883 = vlaneseq
        %v2884 = vshrl.u32 %v2883, 7
        %v2885 = vsub.s32 0, %v2884
        %v2886 = vrot.slane %v2881, %v2885
        %v2889 = vsel %vm1559, %v2876, 0
        %2891 = vmatprep.subr.mxu0 0.0
        %2892 = vmatpush1.msra.mxu0 %v2877
        %2893 = vmatprep.subr.mxu0 0.0
        %2894 = vmatpush1.msra.mxu0 %v2878
        %2895 = vmatprep.subr.mxu0 0.0
        %2896 = vmatpush1.msra.mxu0 %v2879
        %2897 = vmatprep.subr.mxu0 0.0
        %2898 = vmatpush1.msra.mxu0 %v2880
        %2899 = vmatprep.subr.mxu0 0.0
        %2900 = vmatpush1.msra.mxu0 0.0
        %2901 = vmatprep.subr.mxu0 0.0
        %2902 = vmatpush1.msra.mxu0 0.0
        %2903 = vmatprep.subr.mxu0 0.0
        %2904 = vmatpush1.msra.mxu0 0.0
        %2905 = vmatprep.subr.mxu0 0.0
        %2906 = vmatpush1.msra.mxu0 0.0
        %2907 = vmatprep.subr.mxu0 0.0
        %2908 = vmatpush1.msra.mxu0 0.0
        %2909 = vmatprep.subr.mxu0 0.0
        %2910 = vmatpush1.msra.mxu0 0.0
        %2911 = vmatprep.subr.mxu0 0.0
        %2912 = vmatpush1.msra.mxu0 0.0
        %2913 = vmatprep.subr.mxu0 0.0
        %2914 = vmatpush1.msra.mxu0 0.0
        %2915 = vmatprep.subr.mxu0 0.0
        %2916 = vmatpush1.msra.mxu0 0.0
        %2917 = vmatprep.subr.mxu0 0.0
        %2918 = vmatpush1.msra.mxu0 0.0
        %2919 = vmatprep.subr.mxu0 0.0
        %2920 = vmatpush1.msra.mxu0 0.0
        %2921 = vmatprep.subr.mxu0 0.0
        %2922 = vmatpush1.msra.mxu0 0.0
        %2923 = vmatprep.subr.mxu0 0.0
        %2924 = vmatpush1.msra.mxu0 0.0
        %2925 = vmatprep.subr.mxu0 0.0
        %2926 = vmatpush1.msra.mxu0 0.0
        %2927 = vmatprep.subr.mxu0 0.0
        %2928 = vmatpush1.msra.mxu0 0.0
        %2929 = vmatprep.subr.mxu0 0.0
        %2930 = vmatpush1.msra.mxu0 0.0
        %2931 = vmatprep.subr.mxu0 0.0
        %2932 = vmatpush1.msra.mxu0 0.0
        %2933 = vmatprep.subr.mxu0 0.0
        %2934 = vmatpush1.msra.mxu0 0.0
        %2935 = vmatprep.subr.mxu0 0.0
        %2936 = vmatpush1.msra.mxu0 0.0
        %2937 = vmatprep.subr.mxu0 0.0
        %2938 = vmatpush1.msra.mxu0 0.0
        %2939 = vmatprep.subr.mxu0 0.0
        %2940 = vmatpush1.msra.mxu0 0.0
        %2941 = vmatprep.subr.mxu0 0.0
        %2942 = vmatpush1.msra.mxu0 0.0
        %2943 = vmatprep.subr.mxu0 0.0
        %2944 = vmatpush1.msra.mxu0 0.0
        %2945 = vmatprep.subr.mxu0 0.0
        %2946 = vmatpush1.msra.mxu0 0.0
        %2947 = vmatprep.subr.mxu0 0.0
        %2948 = vmatpush1.msra.mxu0 0.0
        %2949 = vmatprep.subr.mxu0 0.0
        %2950 = vmatpush1.msra.mxu0 0.0
        %2951 = vmatprep.subr.mxu0 0.0
        %2952 = vmatpush1.msra.mxu0 0.0
        %2953 = vmatprep.subr.mxu0 0.0
        %2954 = vmatpush1.msra.mxu0 0.0
        %2955 = vmatprep.mubr.f32.mxu0 0.0
        %2956 = vmatmul.mubr.f32.gmra.mrb[0].mxu0 %v2889
        %v2957 = vpop.f32.mrb[0].mxu0
        %v2958 = vadd.f32 %v2886, %v2957
        %v2959 = vpop.f32.mrb[0].mxu0
        %2960 = vdwg.mxu0
        %v2961 = vmax.f32 %v2958, 0.0
        %v2962 = vld [vmem:[#allocation27] sm:$0xff]
        %v2963 = vld [vmem:[#allocation27 + $0x8] sm:$0xff]
        %v2964 = vld [vmem:[#allocation27 + $0x10] sm:$0xff]
        %v2965 = vld [vmem:[#allocation27 + $0x18] sm:$0xff]
        %v2966 = vld [vmem:[#allocation27 + $0x20] sm:$0xff]
        %v2967 = vld [vmem:[#allocation27 + $0x28] sm:$0xff]
        %v2968 = vld [vmem:[#allocation27 + $0x30] sm:$0xff]
        %v2969 = vld [vmem:[#allocation27 + $0x38] sm:$0xff]
        %v2970 = vld [vmem:[#allocation28] sm:$0x1]
        %v2972 = vlaneseq
        %v2973 = vshrl.u32 %v2972, 7
        %v2974 = vsub.s32 0, %v2973
        %v2975 = vrot.slane %v2970, %v2974
        %vm2977 = vcmask 523264
        %v2979 = vsel %vm2977, %v2961, 0
        %2981 = vmatprep.subr.mxu0 0.0
        %2982 = vmatpush1.msra.mxu0 %v2962
        %2983 = vmatprep.subr.mxu0 0.0
        %2984 = vmatpush1.msra.mxu0 %v2963
        %2985 = vmatprep.subr.mxu0 0.0
        %2986 = vmatpush1.msra.mxu0 %v2964
        %2987 = vmatprep.subr.mxu0 0.0
        %2988 = vmatpush1.msra.mxu0 %v2965
        %2989 = vmatprep.subr.mxu0 0.0
        %2990 = vmatpush1.msra.mxu0 %v2966
        %2991 = vmatprep.subr.mxu0 0.0
        %2992 = vmatpush1.msra.mxu0 %v2967
        %2993 = vmatprep.subr.mxu0 0.0
        %2994 = vmatpush1.msra.mxu0 %v2968
        %2995 = vmatprep.subr.mxu0 0.0
        %2996 = vmatpush1.msra.mxu0 %v2969
        %2997 = vmatprep.subr.mxu0 0.0
        %2998 = vmatpush1.msra.mxu0 0.0
        %2999 = vmatprep.subr.mxu0 0.0
        %3000 = vmatpush1.msra.mxu0 0.0
        %3001 = vmatprep.subr.mxu0 0.0
        %3002 = vmatpush1.msra.mxu0 0.0
        %3003 = vmatprep.subr.mxu0 0.0
        %3004 = vmatpush1.msra.mxu0 0.0
        %3005 = vmatprep.subr.mxu0 0.0
        %3006 = vmatpush1.msra.mxu0 0.0
        %3007 = vmatprep.subr.mxu0 0.0
        %3008 = vmatpush1.msra.mxu0 0.0
        %3009 = vmatprep.subr.mxu0 0.0
        %3010 = vmatpush1.msra.mxu0 0.0
        %3011 = vmatprep.subr.mxu0 0.0
        %3012 = vmatpush1.msra.mxu0 0.0
        %3013 = vmatprep.subr.mxu0 0.0
        %3014 = vmatpush1.msra.mxu0 0.0
        %3015 = vmatprep.subr.mxu0 0.0
        %3016 = vmatpush1.msra.mxu0 0.0
        %3017 = vmatprep.subr.mxu0 0.0
        %3018 = vmatpush1.msra.mxu0 0.0
        %3019 = vmatprep.subr.mxu0 0.0
        %3020 = vmatpush1.msra.mxu0 0.0
        %3021 = vmatprep.subr.mxu0 0.0
        %3022 = vmatpush1.msra.mxu0 0.0
        %3023 = vmatprep.subr.mxu0 0.0
        %3024 = vmatpush1.msra.mxu0 0.0
        %3025 = vmatprep.subr.mxu0 0.0
        %3026 = vmatpush1.msra.mxu0 0.0
        %3027 = vmatprep.subr.mxu0 0.0
        %3028 = vmatpush1.msra.mxu0 0.0
        %3029 = vmatprep.subr.mxu0 0.0
        %3030 = vmatpush1.msra.mxu0 0.0
        %3031 = vmatprep.subr.mxu0 0.0
        %3032 = vmatpush1.msra.mxu0 0.0
        %3033 = vmatprep.subr.mxu0 0.0
        %3034 = vmatpush1.msra.mxu0 0.0
        %3035 = vmatprep.subr.mxu0 0.0
        %3036 = vmatpush1.msra.mxu0 0.0
        %3037 = vmatprep.subr.mxu0 0.0
        %3038 = vmatpush1.msra.mxu0 0.0
        %3039 = vmatprep.subr.mxu0 0.0
        %3040 = vmatpush1.msra.mxu0 0.0
        %3041 = vmatprep.subr.mxu0 0.0
        %3042 = vmatpush1.msra.mxu0 0.0
        %3043 = vmatprep.subr.mxu0 0.0
        %3044 = vmatpush1.msra.mxu0 0.0
        %3045 = vmatprep.mubr.f32.mxu0 0.0
        %3046 = vmatmul.mubr.f32.gmra.mrb[0].mxu0 %v2979
        %v3047 = vpop.f32.mrb[0].mxu0
        %v3048 = vadd.f32 %v2975, %v3047
        %v3049 = vpop.f32.mrb[0].mxu0
        %3050 = vdwg.mxu0
        %v3051 = vadd.f32 %v2876, %v3048
        %v3052 = vsel %vm1559, %v3051, 0.0
        %3053 = vadd.xlane.f32.xlu0 %v3052
        %v3054 = vpop.xlane.xlu0 %3053
        %v3055 = vmul.f32 %v3054, %v2850
        %v3056 = vsub.f32 %v3051, %v3055
        %v3057 = vmul.f32 %v3056, %v3056
        %v3058 = vsel %vm1559, %v3057, 0.0
        %3059 = vadd.xlane.f32.xlu0 %v3058
        %v3060 = vpop.xlane.xlu0 %3059
        %v3061 = vmul.f32 %v3060, %v2850
        %v3062 = vadd.f32 %v3061, 1e-05
        %v3063 = vrsqrt.pop %v3062
        %v3064 = vmul.f32 %v3056, %v3063
        %v3065 = vld [vmem:[#allocation30] sm:$0x1]
        %v3067 = vlaneseq
        %v3068 = vshrl.u32 %v3067, 7
        %v3069 = vsub.s32 0, %v3068
        %v3070 = vrot.slane %v3065, %v3069
        %v3072 = vmul.f32 %v3064, %v3070
        %v3073 = vld [vmem:[#allocation31] sm:$0x1]
        %v3075 = vlaneseq
        %v3076 = vshrl.u32 %v3075, 7
        %v3077 = vsub.s32 0, %v3076
        %v3078 = vrot.slane %v3073, %v3077
        %v3080 = vadd.f32 %v3072, %v3078
        %3081 = vst.msk [vmem:[%s862] sm:$0xff] %vm1559, %v3080
        %s3082 = sand.u32 %s458, 1
        %s3083 = scalar_lea.sflag [#allocation6], %s3082
        %s3084 = sand.u32 %s458, 1
        %s3085 = smul.addr %s3084, 8
        %s3086 = scalar_lea.vmem [#allocation33], %s3085
        // Predicated region
        $region169: #{tpu_custom_call.1} parent=91 // pred_check
          %p3087 = pneg %p468
        $region170: #{tpu_custom_call.1} parent=91 // pred_check_branch
          %3089 = sbr.rel (%p3087) target = $region172
        $region171: #{tpu_custom_call.1} parent=91 // pred_region
          %s3091 = ssub.s32 128, 128
          %3092 = vsyncadd %s3083, %s3091
          %s3093 = sadd.s32 %s51, %s50
          %s3094 = smul.addr %s3093, 128
          %s3095 = scalar_lea.hbm %s18, %s3094
          %s3097 = sshll.u32 %s3086, 4
          %s3098 = int_to_ptr.vmem [resolvable:$true] %s3097
          %3100 = dma.vmem_to_hbm [thread:$0]  %s3098, 128, %s3095, %s3083
        $region172: #{tpu_custom_call.1} parent=91 // pred_fallthru
          _
      $region92: #{tpu_custom_call.1} parent=5 // pred_fallthru
        _
      %p3101 = scmp.le.s32.totalorder 2, %s41
      // Predicated region
      $region173: #{tpu_custom_call.1} parent=5 // pred_check
        %p3102 = pneg %p3101
      $region174: #{tpu_custom_call.1} parent=5 // pred_check_branch
        %3104 = sbr.rel (%p3102) target = $region176
      $region175: #{tpu_custom_call.1} parent=5 // pred_region
        %s3105 = ssub.s32 %s41, 2
        // Predicated region
        $region177: #{tpu_custom_call.1} parent=175 // pred_check
          %p3106 = pneg %p474
        $region178: #{tpu_custom_call.1} parent=175 // pred_check_branch
          %3108 = sbr.rel (%p3106) target = $region180
        $region179: #{tpu_custom_call.1} parent=175 // pred_region
          %s3109 = sand.u32 %s459, 1
          %s3110 = scalar_lea.sflag [#allocation6], %s3109
          %s3111 = sand.u32 %s459, 1
          %s3112 = smul.addr %s3111, 8
          %s3113 = scalar_lea.vmem [#allocation33], %s3112
          %3114 = dma.done %s3110, 128
        $region180: #{tpu_custom_call.1} parent=175 // pred_fallthru
          _
      $region176: #{tpu_custom_call.1} parent=5 // pred_fallthru
        _
    $region6: #{tpu_custom_call.1} parent=1 // loop_footer
      %s45 = sadd.s32 1, %s41
    $region7: #{tpu_custom_call.1} parent=1 // loop_footer_branch
      %40 = sbr.rel target = $region3
    $region8: #{tpu_custom_call.1} parent=1 // loop_exit
      _
    %3115 = vsyncpa [#allocation5], 1
    %s3116 = scalar_lea.sflag [#allocation5], 1
    %3117 = vsyncpa %s3116, 1
    %3118 = vsyncpa [#allocation8], 1
    %s3119 = scalar_lea.sflag [#allocation8], 1
    %3120 = vsyncpa %s3119, 1
    %3121 = vsyncpa [#allocation11], 1
    %3122 = vsyncpa [#allocation14], 1
    %3123 = vsyncpa [#allocation17], 1
    %3124 = vsyncpa [#allocation20], 1
    %3125 = vsyncpa [#allocation23], 1
    %3126 = vsyncpa [#allocation26], 1
    %3127 = vsyncpa [#allocation29], 1
    %3128 = vsyncpa [#allocation32], 1
    %3129 = vsyncpa [#allocation6], 1
    %s3130 = scalar_lea.sflag [#allocation6], 1
    %3131 = vsyncpa %s3130, 1

</llo_original>
